<compile_context>
chip_gen: v7x
topology: tpu7x:2x2x1
jax: 0.10.0
libtpu: 0.0.40
codegen_flags: <defaults>
</compile_context>

<pallas_src>
import functools

import jax
import jax.numpy as jnp
from jax.experimental import pallas as pl
from jax.experimental.pallas import tpu as pltpu

LANE = 128     # vreg lane width
SUBLANE = 8    # f32 sublane height


def _round_up(x, m):
    return ((x + m - 1) // m) * m


# ----------------------------------------------------------------------------
# Fused kernel: all LSTM layers + fc in one grid step, VMEM resident.
# ----------------------------------------------------------------------------
def _fused_lstm_fc_kernel(*refs, num_layers, hidden_pad, batch_pad, seq_len):
    """refs = [x_tm,
               (W_ih^T, W_hh^T, fused_bias) * num_layers,
               W_fc^T, b_fc,
               out, gx_scratch, hseq_scratch]
    x_tm is time-major flattened: row index = t*B_pad + b. All feature dims are
    lane-padded (multiples of 128); B_pad is a multiple of 8.
    """
    n_in = 1 + 3 * num_layers + 2
    x_ref = refs[0]
    layer_refs = refs[1:1 + 3 * num_layers]
    wfc_ref = refs[1 + 3 * num_layers]
    bfc_ref = refs[1 + 3 * num_layers + 1]
    out_ref = refs[n_in]
    gx_scr = refs[n_in + 1]     # (S*B_pad, 4*H_pad) f32: hoisted input projection
    hseq_scr = refs[n_in + 2]   # (S*B_pad, H_pad)   f32: per-layer hidden sequence

    Hp, Bp, S = hidden_pad, batch_pad, seq_len

    for layer in range(num_layers):
        wih = layer_refs[3 * layer + 0][...]    # (Din_pad, 4*H_pad)
        whh = layer_refs[3 * layer + 1][...]    # (H_pad, 4*H_pad)
        bias = layer_refs[3 * layer + 2][...]   # (1, 4*H_pad) f32

        # ---- Hoisted input projection: ONE big matmul over all S*B_pad rows.
        # (xin is materialized as a value BEFORE this layer's hseq writes, so
        # reading hseq_scr here while overwriting it below is safe.)
        xin = x_ref[...] if layer == 0 else hseq_scr[...]
        gx_scr[...] = (
            jnp.dot(xin.astype(wih.dtype), wih,
                    preferred_element_type=jnp.float32)
            + bias)

        # ---- Serial recurrence over time. S is small/static => fully unrolled;
        # every gx/hseq access is a static, sublane-aligned VMEM slice and every
        # gate slice is a lane-aligned 128-multiple block. Gate math and c/h
        # state stay float32 (v5e-safe). Padded lanes of h/c stay exactly 0.
        # TODO(synk): for production S, switch to lax.fori_loop(..., unroll=4/8)
        # with pl.multiple_of(t*Bp, Bp) slice starts to bound vreg live ranges,
        # and hold W_hh^T in MXU weight regs across the loop via
        # pltpu.matmul_push_rhs / matmul_acc_lhs / matmul_pop.
        h = jnp.zeros((Bp, Hp), jnp.float32)
        c = jnp.zeros((Bp, Hp), jnp.float32)
        for t in range(S):
            row0 = t * Bp   # static multiple of the sublane tile
            gates = (gx_scr[row0:row0 + Bp, :]
                     + jnp.dot(h.astype(whh.dtype), whh,
                               preferred_element_type=jnp.float32))
            i_g = jax.nn.sigmoid(gates[:, 0 * Hp:1 * Hp])
            f_g = jax.nn.sigmoid(gates[:, 1 * Hp:2 * Hp])
            g_g = jnp.tanh(gates[:, 2 * Hp:3 * Hp])
            o_g = jax.nn.sigmoid(gates[:, 3 * Hp:4 * Hp])
            c = f_g * c + i_g * g_g
            h = o_g * jnp.tanh(c)
            hseq_scr[row0:row0 + Bp, :] = h   # stays in VMEM for next layer

    # ---- Final Linear over the whole sequence: one matmul with lane-dense N,
    # ONE full-block (lane-dense) store back to HBM.
    wfc = wfc_ref[...]
    out_ref[...] = (
        jnp.dot(hseq_scr[...].astype(wfc.dtype), wfc,
                preferred_element_type=jnp.float32)
        + bfc_ref[...]).astype(out_ref.dtype)


# ----------------------------------------------------------------------------
# One-time weight preparation: per-gate lane padding, pre-transpose, bias
# fusion, optional bf16 staging of the matmul operands only.
# ----------------------------------------------------------------------------
def prepare_params(params, input_size, hidden_size, output_size,
                   matmul_dtype=jnp.float32):
    H = hidden_size
    Hp = _round_up(H, LANE)
    Din0p = _round_up(input_size, LANE)
    Op = _round_up(output_size, LANE)

    def pad_gate_weight(w, din, din_p):
        # w: (4H, din), gates stacked [i; f; g; o] (PyTorch layout).
        w4 = w.reshape(4, H, din)
        w4 = jnp.pad(w4, ((0, 0), (0, Hp - H), (0, din_p - din)))
        # -> (din_p, 4*Hp) with per-gate columns [i|0..|f|0..|g|0..|o|0..]
        return jnp.transpose(w4, (2, 0, 1)).reshape(din_p, 4 * Hp)

    def pad_gate_bias(b):
        b4 = jnp.pad(b.reshape(4, H), ((0, 0), (0, Hp - H)))
        return b4.reshape(1, 4 * Hp)

    prepared = {"layers": [], "fc": {}}
    for li, layer in enumerate(params["lstm"]):
        din = input_size if li == 0 else H
        din_p = Din0p if li == 0 else Hp
        prepared["layers"].append(dict(
            wih_t=pad_gate_weight(layer["w_ih"], din, din_p).astype(matmul_dtype),
            whh_t=pad_gate_weight(layer["w_hh"], H, Hp).astype(matmul_dtype),
            bias=pad_gate_bias(layer["b_ih"] + layer["b_hh"]).astype(jnp.float32),
        ))
    wfc_t = jnp.pad(params["fc"]["w"].T, ((0, Hp - H), (0, Op - output_size)))
    bfc = jnp.pad(params["fc"]["b"], (0, Op - output_size)).reshape(1, Op)
    prepared["fc"] = dict(w_t=wfc_t.astype(matmul_dtype),
                          b=bfc.astype(jnp.float32))
    return prepared


# ----------------------------------------------------------------------------
# Forward: single fused pallas_call. x is (B, S, input_size) batch_first.
# ----------------------------------------------------------------------------
def lstm_model_forward(prepared, x, output_size):
    B, S, Din = x.shape
    num_layers = len(prepared["layers"])
    Din0p = prepared["layers"][0]["wih_t"].shape[0]
    Hp = prepared["layers"][0]["whh_t"].shape[0]
    Op = prepared["fc"]["w_t"].shape[1]
    Bp = _round_up(B, SUBLANE)
    O = output_size

    # Pad batch -> sublane tile, features -> lane tile, relayout to time-major
    # rows (row = t*Bp + b). One fused XLA copy; everything downstream lives in
    # the kernel's VMEM in lane/sublane-dense form.
    xp = jnp.pad(x, ((0, Bp - B), (0, 0), (0, Din0p - Din)))
    x_tm = jnp.transpose(xp, (1, 0, 2)).reshape(S * Bp, Din0p)

    inputs = [x_tm]
    in_specs = [pl.BlockSpec((S * Bp, Din0p), lambda i: (0, 0))]
    for layer in prepared["layers"]:
        for name in ("wih_t", "whh_t", "bias"):
            arr = layer[name]
            inputs.append(arr)
            in_specs.append(pl.BlockSpec(arr.shape, lambda i: (0, 0)))
    for name in ("w_t", "b"):
        arr = prepared["fc"][name]
        inputs.append(arr)
        in_specs.append(pl.BlockSpec(arr.shape, lambda i: (0, 0)))
    # TODO(synk): with grid=(1,) and constant index_maps, pipeline_mode=
    # pl.Buffered(1) on these specs would drop the useless double-buffering and
    # halve the weight VMEM footprint at production sizes.

    # Explicit scoped-VMEM limit sized from the actual resident footprint
    # (inputs double-buffered by default + output + scratch + headroom).
    in_bytes = sum(int(a.size) * a.dtype.itemsize for a in inputs)
    out_bytes = S * Bp * Op * 4
    scratch_bytes = (S * Bp * 4 * Hp + S * Bp * Hp) * 4
    vmem_limit = min(max(2 * (in_bytes + out_bytes) + scratch_bytes + (4 << 20),
                         32 << 20), 100 << 20)

    kernel = functools.partial(
        _fused_lstm_fc_kernel, num_layers=num_layers, hidden_pad=Hp,
        batch_pad=Bp, seq_len=S)

    out_tm = pl.pallas_call(
        kernel,
        out_shape=jax.ShapeDtypeStruct((S * Bp, Op), jnp.float32),
        grid_spec=pltpu.PrefetchScalarGridSpec(
            num_scalar_prefetch=0,
            grid=(1,),   # single grid step: no per-timestep launch overhead
            in_specs=in_specs,
            out_specs=pl.BlockSpec((S * Bp, Op), lambda i: (0, 0)),
            scratch_shapes=[
                pltpu.VMEM((S * Bp, 4 * Hp), jnp.float32),  # gates_x
                pltpu.VMEM((S * Bp, Hp), jnp.float32),      # hidden sequence
            ],
        ),
        compiler_params=pltpu.CompilerParams(
            dimension_semantics=("arbitrary",),
            vmem_limit_bytes=int(vmem_limit)),
    )(*inputs)

    # TODO(synk): on v7x (64 MiB VMEM, 2 TCs) add a leading 'parallel' batch-
    # shard grid axis so both TensorCores run independent recurrences, and
    # chunk / bf16-stage gx_scr when S*Bp*4*Hp*4B approaches the VMEM budget.
    out = out_tm.reshape(S, Bp, Op)[:, :B, :O]
    return jnp.transpose(out, (1, 0, 2))


# ----------------------------------------------------------------------------
# Parameter init (deterministic, PyTorch-style U(-1/sqrt(H), 1/sqrt(H))).
# ----------------------------------------------------------------------------
def init_lstm_model_params(key, input_size, hidden_size, num_layers, output_size):
    k = 1.0 / float(hidden_size) ** 0.5
    params = {"lstm": []}
    for layer_idx in range(num_layers):
        din = input_size if layer_idx == 0 else hidden_size
        key, k0, k1, k2, k3 = jax.random.split(key, 5)
        params["lstm"].append(dict(
            w_ih=jax.random.uniform(k0, (4 * hidden_size, din), jnp.float32, -k, k),
            w_hh=jax.random.uniform(k1, (4 * hidden_size, hidden_size), jnp.float32, -k, k),
            b_ih=jax.random.uniform(k2, (4 * hidden_size,), jnp.float32, -k, k),
            b_hh=jax.random.uniform(k3, (4 * hidden_size,), jnp.float32, -k, k),
        ))
    key, k0, k1 = jax.random.split(key, 3)
    params["fc"] = dict(
        w=jax.random.uniform(k0, (output_size, hidden_size), jnp.float32, -k, k),
        b=jax.random.uniform(k1, (output_size,), jnp.float32, -k, k),
    )
    return params


# ----------------------------------------------------------------------------
# Pure-JAX reference (same math as the PyTorch module) for correctness check.
# ----------------------------------------------------------------------------
def lstm_model_reference(params, x, hidden_size):
    B, S, _ = x.shape
    h_seq = x
    for layer in params["lstm"]:
        w_ih, w_hh = layer["w_ih"], layer["w_hh"]
        bias = layer["b_ih"] + layer["b_hh"]
        h = jnp.zeros((B, hidden_size), jnp.float32)
        c = jnp.zeros((B, hidden_size), jnp.float32)
        outs = []
        for t in range(S):
            gates = h_seq[:, t, :] @ w_ih.T + h @ w_hh.T + bias
            i_g = jax.nn.sigmoid(gates[:, 0 * hidden_size:1 * hidden_size])
            f_g = jax.nn.sigmoid(gates[:, 1 * hidden_size:2 * hidden_size])
            g_g = jnp.tanh(gates[:, 2 * hidden_size:3 * hidden_size])
            o_g = jax.nn.sigmoid(gates[:, 3 * hidden_size:4 * hidden_size])
            c = f_g * c + i_g * g_g
            h = o_g * jnp.tanh(c)
            outs.append(h)
        h_seq = jnp.stack(outs, axis=1)
    return h_seq @ params["fc"]["w"].T + params["fc"]["b"]


if __name__ == "__main__":
    # Small shapes consistent with the module: x is (batch, seq, input_size).
    batch, seq_len = 2, 8
    input_size, hidden_size, num_layers, output_size = 16, 32, 2, 8
    target_len = seq_len  # unused in forward (kept for parity with the module)

    key = jax.random.PRNGKey(0)
    key, pkey, xkey = jax.random.split(key, 3)
    params = init_lstm_model_params(pkey, input_size, hidden_size,
                                    num_layers, output_size)
    x = jax.random.normal(xkey, (batch, seq_len, input_size), jnp.float32)

    ref = lstm_model_reference(params, x, hidden_size)

    fwd = jax.jit(functools.partial(lstm_model_forward, output_size=output_size))

    # float32 matmul path (matches the PyTorch module's numerics).
    prep_f32 = prepare_params(params, input_size, hidden_size, output_size,
                              matmul_dtype=jnp.float32)
    out = jax.block_until_ready(fwd(prep_f32, x))
    assert out.shape == (batch, seq_len, output_size)
    assert jnp.allclose(out, ref, rtol=1e-3, atol=1e-3), "f32 mismatch vs reference"

    # bf16 MXU-operand path (f32 accumulation + f32 gate math), looser tol.
    prep_bf16 = prepare_params(params, input_size, hidden_size, output_size,
                               matmul_dtype=jnp.bfloat16)
    out_bf16 = jax.block_until_ready(fwd(prep_bf16, x))
    assert out_bf16.shape == (batch, seq_len, output_size)
    assert jnp.allclose(out_bf16, ref, rtol=5e-2, atol=5e-2), "bf16 mismatch vs reference"

    print("KERNEL_OK")
</pallas_src>

<mosaic_0001>
module attributes {stable_mosaic.version = 11 : i64} {
  func.func @_fused_lstm_fc_kernel(%arg0: i32, %arg1: memref<64x128xf32, #tpu.memory_space<vmem>>, %arg2: memref<128x512xf32, #tpu.memory_space<vmem>>, %arg3: memref<128x512xf32, #tpu.memory_space<vmem>>, %arg4: memref<1x512xf32, #tpu.memory_space<vmem>>, %arg5: memref<128x512xf32, #tpu.memory_space<vmem>>, %arg6: memref<128x512xf32, #tpu.memory_space<vmem>>, %arg7: memref<1x512xf32, #tpu.memory_space<vmem>>, %arg8: memref<128x128xf32, #tpu.memory_space<vmem>>, %arg9: memref<1x128xf32, #tpu.memory_space<vmem>>, %arg10: memref<64x128xf32, #tpu.memory_space<vmem>>, %arg11: memref<64x512xf32, #tpu.memory_space<vmem>>, %arg12: memref<64x128xf32, #tpu.memory_space<vmem>>) attributes {dimension_semantics = [#tpu.dimension_semantics<arbitrary>], iteration_bounds = array<i64: 1>, scalar_prefetch = 0 : i64, scratch_operands = 2 : i64, tpu.core_type = #tpu.core_type<tc>, window_params = [{pipeline_mode = #tpu.pipeline_mode<synchronous>, transform_indices = @transform_0, window_bounds = array<i64: 64, 128>}, {pipeline_mode = #tpu.pipeline_mode<synchronous>, transform_indices = @transform_1, window_bounds = array<i64: 128, 512>}, {pipeline_mode = #tpu.pipeline_mode<synchronous>, transform_indices = @transform_2, window_bounds = array<i64: 128, 512>}, {pipeline_mode = #tpu.pipeline_mode<synchronous>, transform_indices = @transform_3, window_bounds = array<i64: 1, 512>}, {pipeline_mode = #tpu.pipeline_mode<synchronous>, transform_indices = @transform_4, window_bounds = array<i64: 128, 512>}, {pipeline_mode = #tpu.pipeline_mode<synchronous>, transform_indices = @transform_5, window_bounds = array<i64: 128, 512>}, {pipeline_mode = #tpu.pipeline_mode<synchronous>, transform_indices = @transform_6, window_bounds = array<i64: 1, 512>}, {pipeline_mode = #tpu.pipeline_mode<synchronous>, transform_indices = @transform_7, window_bounds = array<i64: 128, 128>}, {pipeline_mode = #tpu.pipeline_mode<synchronous>, transform_indices = @transform_8, window_bounds = array<i64: 1, 128>}, {pipeline_mode = #tpu.pipeline_mode<synchronous>, transform_indices = @transform_9, window_bounds = array<i64: 64, 128>}]} {
    %c0 = arith.constant 0 : index
    %c0_0 = arith.constant 0 : index
    %0 = vector.load %arg2[%c0, %c0_0] : memref<128x512xf32, #tpu.memory_space<vmem>>, vector<128x512xf32>
    %c0_1 = arith.constant 0 : index
    %c0_2 = arith.constant 0 : index
    %1 = vector.load %arg3[%c0_1, %c0_2] : memref<128x512xf32, #tpu.memory_space<vmem>>, vector<128x512xf32>
    %c0_3 = arith.constant 0 : index
    %c0_4 = arith.constant 0 : index
    %2 = vector.load %arg4[%c0_3, %c0_4] : memref<1x512xf32, #tpu.memory_space<vmem>>, vector<1x512xf32>
    %c0_5 = arith.constant 0 : index
    %c0_6 = arith.constant 0 : index
    %3 = vector.load %arg1[%c0_5, %c0_6] : memref<64x128xf32, #tpu.memory_space<vmem>>, vector<64x128xf32>
    %cst = arith.constant dense<0.000000e+00> : vector<64x512xf32>
    %4 = tpu.matmul %3, %0, %cst {dimension_numbers = #tpu.dot_dimension_numbers<[1], [0], [0], [1], [0, 0, 1, 1], [], []>} : vector<64x128xf32>, vector<128x512xf32>, vector<64x512xf32> -> vector<64x512xf32>
    %5 = vector.broadcast %2 : vector<1x512xf32> to vector<64x512xf32>
    %6 = arith.addf %4, %5 : vector<64x512xf32>
    %c0_7 = arith.constant 0 : index
    %c0_8 = arith.constant 0 : index
    %7 = vector.load %arg11[%c0_7, %c0_8] : memref<64x512xf32, #tpu.memory_space<vmem>>, vector<64x512xf32>
    tpu.vector_store %arg11[%c0_7, %c0_8], %6 {strides = array<i32>} : memref<64x512xf32, #tpu.memory_space<vmem>>, vector<64x512xf32>,
    %cst_9 = arith.constant 0.000000e+00 : f32
    %8 = vector.broadcast %cst_9 : f32 to vector<8x128xf32>
    %cst_10 = arith.constant 0.000000e+00 : f32
    %9 = vector.broadcast %cst_10 : f32 to vector<8x128xf32>
    %c0_11 = arith.constant 0 : index
    %c0_12 = arith.constant 0 : index
    %10 = vector.load %arg11[%c0_11, %c0_12] : memref<64x512xf32, #tpu.memory_space<vmem>>, vector<8x512xf32>
    %cst_13 = arith.constant dense<0.000000e+00> : vector<8x512xf32>
    %11 = tpu.matmul %8, %1, %cst_13 {dimension_numbers = #tpu.dot_dimension_numbers<[1], [0], [0], [1], [0, 0, 1, 1], [], []>} : vector<8x128xf32>, vector<128x512xf32>, vector<8x512xf32> -> vector<8x512xf32>
    %12 = arith.addf %10, %11 : vector<8x512xf32>
    %13 = vector.extract_strided_slice %12 {offsets = [0, 0], sizes = [8, 128], strides = [1, 1]} : vector<8x512xf32> to vector<8x128xf32>
    %14 = arith.negf %13 : vector<8x128xf32>
    %15 = math.exp %14 : vector<8x128xf32>
    %cst_14 = arith.constant 1.000000e+00 : f32
    %16 = vector.broadcast %cst_14 : f32 to vector<8x128xf32>
    %17 = arith.addf %16, %15 : vector<8x128xf32>
    %18 = arith.divf %16, %17 : vector<8x128xf32>
    %19 = vector.extract_strided_slice %12 {offsets = [0, 128], sizes = [8, 128], strides = [1, 1]} : vector<8x512xf32> to vector<8x128xf32>
    %20 = arith.negf %19 : vector<8x128xf32>
    %21 = math.exp %20 : vector<8x128xf32>
    %cst_15 = arith.constant 1.000000e+00 : f32
    %22 = vector.broadcast %cst_15 : f32 to vector<8x128xf32>
    %23 = arith.addf %22, %21 : vector<8x128xf32>
    %24 = arith.divf %22, %23 : vector<8x128xf32>
    %25 = vector.extract_strided_slice %12 {offsets = [0, 256], sizes = [8, 128], strides = [1, 1]} : vector<8x512xf32> to vector<8x128xf32>
    %26 = math.tanh %25 : vector<8x128xf32>
    %27 = vector.extract_strided_slice %12 {offsets = [0, 384], sizes = [8, 128], strides = [1, 1]} : vector<8x512xf32> to vector<8x128xf32>
    %28 = arith.negf %27 : vector<8x128xf32>
    %29 = math.exp %28 : vector<8x128xf32>
    %cst_16 = arith.constant 1.000000e+00 : f32
    %30 = vector.broadcast %cst_16 : f32 to vector<8x128xf32>
    %31 = arith.addf %30, %29 : vector<8x128xf32>
    %32 = arith.divf %30, %31 : vector<8x128xf32>
    %33 = arith.mulf %24, %9 : vector<8x128xf32>
    %34 = arith.mulf %18, %26 : vector<8x128xf32>
    %35 = arith.addf %33, %34 : vector<8x128xf32>
    %36 = math.tanh %35 : vector<8x128xf32>
    %37 = arith.mulf %32, %36 : vector<8x128xf32>
    %c0_17 = arith.constant 0 : index
    %c0_18 = arith.constant 0 : index
    %38 = vector.load %arg12[%c0_17, %c0_18] : memref<64x128xf32, #tpu.memory_space<vmem>>, vector<8x128xf32>
    tpu.vector_store %arg12[%c0_17, %c0_18], %37 {strides = array<i32>} : memref<64x128xf32, #tpu.memory_space<vmem>>, vector<8x128xf32>,
    %c8 = arith.constant 8 : index
    %c0_19 = arith.constant 0 : index
    %39 = vector.load %arg11[%c8, %c0_19] : memref<64x512xf32, #tpu.memory_space<vmem>>, vector<8x512xf32>
    %cst_20 = arith.constant dense<0.000000e+00> : vector<8x512xf32>
    %40 = tpu.matmul %37, %1, %cst_20 {dimension_numbers = #tpu.dot_dimension_numbers<[1], [0], [0], [1], [0, 0, 1, 1], [], []>} : vector<8x128xf32>, vector<128x512xf32>, vector<8x512xf32> -> vector<8x512xf32>
    %41 = arith.addf %39, %40 : vector<8x512xf32>
    %42 = vector.extract_strided_slice %41 {offsets = [0, 0], sizes = [8, 128], strides = [1, 1]} : vector<8x512xf32> to vector<8x128xf32>
    %43 = arith.negf %42 : vector<8x128xf32>
    %44 = math.exp %43 : vector<8x128xf32>
    %cst_21 = arith.constant 1.000000e+00 : f32
    %45 = vector.broadcast %cst_21 : f32 to vector<8x128xf32>
    %46 = arith.addf %45, %44 : vector<8x128xf32>
    %47 = arith.divf %45, %46 : vector<8x128xf32>
    %48 = vector.extract_strided_slice %41 {offsets = [0, 128], sizes = [8, 128], strides = [1, 1]} : vector<8x512xf32> to vector<8x128xf32>
    %49 = arith.negf %48 : vector<8x128xf32>
    %50 = math.exp %49 : vector<8x128xf32>
    %cst_22 = arith.constant 1.000000e+00 : f32
    %51 = vector.broadcast %cst_22 : f32 to vector<8x128xf32>
    %52 = arith.addf %51, %50 : vector<8x128xf32>
    %53 = arith.divf %51, %52 : vector<8x128xf32>
    %54 = vector.extract_strided_slice %41 {offsets = [0, 256], sizes = [8, 128], strides = [1, 1]} : vector<8x512xf32> to vector<8x128xf32>
    %55 = math.tanh %54 : vector<8x128xf32>
    %56 = vector.extract_strided_slice %41 {offsets = [0, 384], sizes = [8, 128], strides = [1, 1]} : vector<8x512xf32> to vector<8x128xf32>
    %57 = arith.negf %56 : vector<8x128xf32>
    %58 = math.exp %57 : vector<8x128xf32>
    %cst_23 = arith.constant 1.000000e+00 : f32
    %59 = vector.broadcast %cst_23 : f32 to vector<8x128xf32>
    %60 = arith.addf %59, %58 : vector<8x128xf32>
    %61 = arith.divf %59, %60 : vector<8x128xf32>
    %62 = arith.mulf %53, %35 : vector<8x128xf32>
    %63 = arith.mulf %47, %55 : vector<8x128xf32>
    %64 = arith.addf %62, %63 : vector<8x128xf32>
    %65 = math.tanh %64 : vector<8x128xf32>
    %66 = arith.mulf %61, %65 : vector<8x128xf32>
    %c8_24 = arith.constant 8 : index
    %c0_25 = arith.constant 0 : index
    %67 = vector.load %arg12[%c8_24, %c0_25] : memref<64x128xf32, #tpu.memory_space<vmem>>, vector<8x128xf32>
    tpu.vector_store %arg12[%c8_24, %c0_25], %66 {strides = array<i32>} : memref<64x128xf32, #tpu.memory_space<vmem>>, vector<8x128xf32>,
    %c16 = arith.constant 16 : index
    %c0_26 = arith.constant 0 : index
    %68 = vector.load %arg11[%c16, %c0_26] : memref<64x512xf32, #tpu.memory_space<vmem>>, vector<8x512xf32>
    %cst_27 = arith.constant dense<0.000000e+00> : vector<8x512xf32>
    %69 = tpu.matmul %66, %1, %cst_27 {dimension_numbers = #tpu.dot_dimension_numbers<[1], [0], [0], [1], [0, 0, 1, 1], [], []>} : vector<8x128xf32>, vector<128x512xf32>, vector<8x512xf32> -> vector<8x512xf32>
    %70 = arith.addf %68, %69 : vector<8x512xf32>
    %71 = vector.extract_strided_slice %70 {offsets = [0, 0], sizes = [8, 128], strides = [1, 1]} : vector<8x512xf32> to vector<8x128xf32>
    %72 = arith.negf %71 : vector<8x128xf32>
    %73 = math.exp %72 : vector<8x128xf32>
    %cst_28 = arith.constant 1.000000e+00 : f32
    %74 = vector.broadcast %cst_28 : f32 to vector<8x128xf32>
    %75 = arith.addf %74, %73 : vector<8x128xf32>
    %76 = arith.divf %74, %75 : vector<8x128xf32>
    %77 = vector.extract_strided_slice %70 {offsets = [0, 128], sizes = [8, 128], strides = [1, 1]} : vector<8x512xf32> to vector<8x128xf32>
    %78 = arith.negf %77 : vector<8x128xf32>
    %79 = math.exp %78 : vector<8x128xf32>
    %cst_29 = arith.constant 1.000000e+00 : f32
    %80 = vector.broadcast %cst_29 : f32 to vector<8x128xf32>
    %81 = arith.addf %80, %79 : vector<8x128xf32>
    %82 = arith.divf %80, %81 : vector<8x128xf32>
    %83 = vector.extract_strided_slice %70 {offsets = [0, 256], sizes = [8, 128], strides = [1, 1]} : vector<8x512xf32> to vector<8x128xf32>
    %84 = math.tanh %83 : vector<8x128xf32>
    %85 = vector.extract_strided_slice %70 {offsets = [0, 384], sizes = [8, 128], strides = [1, 1]} : vector<8x512xf32> to vector<8x128xf32>
    %86 = arith.negf %85 : vector<8x128xf32>
    %87 = math.exp %86 : vector<8x128xf32>
    %cst_30 = arith.constant 1.000000e+00 : f32
    %88 = vector.broadcast %cst_30 : f32 to vector<8x128xf32>
    %89 = arith.addf %88, %87 : vector<8x128xf32>
    %90 = arith.divf %88, %89 : vector<8x128xf32>
    %91 = arith.mulf %82, %64 : vector<8x128xf32>
    %92 = arith.mulf %76, %84 : vector<8x128xf32>
    %93 = arith.addf %91, %92 : vector<8x128xf32>
    %94 = math.tanh %93 : vector<8x128xf32>
    %95 = arith.mulf %90, %94 : vector<8x128xf32>
    %c16_31 = arith.constant 16 : index
    %c0_32 = arith.constant 0 : index
    %96 = vector.load %arg12[%c16_31, %c0_32] : memref<64x128xf32, #tpu.memory_space<vmem>>, vector<8x128xf32>
    tpu.vector_store %arg12[%c16_31, %c0_32], %95 {strides = array<i32>} : memref<64x128xf32, #tpu.memory_space<vmem>>, vector<8x128xf32>,
    %c24 = arith.constant 24 : index
    %c0_33 = arith.constant 0 : index
    %97 = vector.load %arg11[%c24, %c0_33] : memref<64x512xf32, #tpu.memory_space<vmem>>, vector<8x512xf32>
    %cst_34 = arith.constant dense<0.000000e+00> : vector<8x512xf32>
    %98 = tpu.matmul %95, %1, %cst_34 {dimension_numbers = #tpu.dot_dimension_numbers<[1], [0], [0], [1], [0, 0, 1, 1], [], []>} : vector<8x128xf32>, vector<128x512xf32>, vector<8x512xf32> -> vector<8x512xf32>
    %99 = arith.addf %97, %98 : vector<8x512xf32>
    %100 = vector.extract_strided_slice %99 {offsets = [0, 0], sizes = [8, 128], strides = [1, 1]} : vector<8x512xf32> to vector<8x128xf32>
    %101 = arith.negf %100 : vector<8x128xf32>
    %102 = math.exp %101 : vector<8x128xf32>
    %cst_35 = arith.constant 1.000000e+00 : f32
    %103 = vector.broadcast %cst_35 : f32 to vector<8x128xf32>
    %104 = arith.addf %103, %102 : vector<8x128xf32>
    %105 = arith.divf %103, %104 : vector<8x128xf32>
    %106 = vector.extract_strided_slice %99 {offsets = [0, 128], sizes = [8, 128], strides = [1, 1]} : vector<8x512xf32> to vector<8x128xf32>
    %107 = arith.negf %106 : vector<8x128xf32>
    %108 = math.exp %107 : vector<8x128xf32>
    %cst_36 = arith.constant 1.000000e+00 : f32
    %109 = vector.broadcast %cst_36 : f32 to vector<8x128xf32>
    %110 = arith.addf %109, %108 : vector<8x128xf32>
    %111 = arith.divf %109, %110 : vector<8x128xf32>
    %112 = vector.extract_strided_slice %99 {offsets = [0, 256], sizes = [8, 128], strides = [1, 1]} : vector<8x512xf32> to vector<8x128xf32>
    %113 = math.tanh %112 : vector<8x128xf32>
    %114 = vector.extract_strided_slice %99 {offsets = [0, 384], sizes = [8, 128], strides = [1, 1]} : vector<8x512xf32> to vector<8x128xf32>
    %115 = arith.negf %114 : vector<8x128xf32>
    %116 = math.exp %115 : vector<8x128xf32>
    %cst_37 = arith.constant 1.000000e+00 : f32
    %117 = vector.broadcast %cst_37 : f32 to vector<8x128xf32>
    %118 = arith.addf %117, %116 : vector<8x128xf32>
    %119 = arith.divf %117, %118 : vector<8x128xf32>
    %120 = arith.mulf %111, %93 : vector<8x128xf32>
    %121 = arith.mulf %105, %113 : vector<8x128xf32>
    %122 = arith.addf %120, %121 : vector<8x128xf32>
    %123 = math.tanh %122 : vector<8x128xf32>
    %124 = arith.mulf %119, %123 : vector<8x128xf32>
    %c24_38 = arith.constant 24 : index
    %c0_39 = arith.constant 0 : index
    %125 = vector.load %arg12[%c24_38, %c0_39] : memref<64x128xf32, #tpu.memory_space<vmem>>, vector<8x128xf32>
    tpu.vector_store %arg12[%c24_38, %c0_39], %124 {strides = array<i32>} : memref<64x128xf32, #tpu.memory_space<vmem>>, vector<8x128xf32>,
    %c32 = arith.constant 32 : index
    %c0_40 = arith.constant 0 : index
    %126 = vector.load %arg11[%c32, %c0_40] : memref<64x512xf32, #tpu.memory_space<vmem>>, vector<8x512xf32>
    %cst_41 = arith.constant dense<0.000000e+00> : vector<8x512xf32>
    %127 = tpu.matmul %124, %1, %cst_41 {dimension_numbers = #tpu.dot_dimension_numbers<[1], [0], [0], [1], [0, 0, 1, 1], [], []>} : vector<8x128xf32>, vector<128x512xf32>, vector<8x512xf32> -> vector<8x512xf32>
    %128 = arith.addf %126, %127 : vector<8x512xf32>
    %129 = vector.extract_strided_slice %128 {offsets = [0, 0], sizes = [8, 128], strides = [1, 1]} : vector<8x512xf32> to vector<8x128xf32>
    %130 = arith.negf %129 : vector<8x128xf32>
    %131 = math.exp %130 : vector<8x128xf32>
    %cst_42 = arith.constant 1.000000e+00 : f32
    %132 = vector.broadcast %cst_42 : f32 to vector<8x128xf32>
    %133 = arith.addf %132, %131 : vector<8x128xf32>
    %134 = arith.divf %132, %133 : vector<8x128xf32>
    %135 = vector.extract_strided_slice %128 {offsets = [0, 128], sizes = [8, 128], strides = [1, 1]} : vector<8x512xf32> to vector<8x128xf32>
    %136 = arith.negf %135 : vector<8x128xf32>
    %137 = math.exp %136 : vector<8x128xf32>
    %cst_43 = arith.constant 1.000000e+00 : f32
    %138 = vector.broadcast %cst_43 : f32 to vector<8x128xf32>
    %139 = arith.addf %138, %137 : vector<8x128xf32>
    %140 = arith.divf %138, %139 : vector<8x128xf32>
    %141 = vector.extract_strided_slice %128 {offsets = [0, 256], sizes = [8, 128], strides = [1, 1]} : vector<8x512xf32> to vector<8x128xf32>
    %142 = math.tanh %141 : vector<8x128xf32>
    %143 = vector.extract_strided_slice %128 {offsets = [0, 384], sizes = [8, 128], strides = [1, 1]} : vector<8x512xf32> to vector<8x128xf32>
    %144 = arith.negf %143 : vector<8x128xf32>
    %145 = math.exp %144 : vector<8x128xf32>
    %cst_44 = arith.constant 1.000000e+00 : f32
    %146 = vector.broadcast %cst_44 : f32 to vector<8x128xf32>
    %147 = arith.addf %146, %145 : vector<8x128xf32>
    %148 = arith.divf %146, %147 : vector<8x128xf32>
    %149 = arith.mulf %140, %122 : vector<8x128xf32>
    %150 = arith.mulf %134, %142 : vector<8x128xf32>
    %151 = arith.addf %149, %150 : vector<8x128xf32>
    %152 = math.tanh %151 : vector<8x128xf32>
    %153 = arith.mulf %148, %152 : vector<8x128xf32>
    %c32_45 = arith.constant 32 : index
    %c0_46 = arith.constant 0 : index
    %154 = vector.load %arg12[%c32_45, %c0_46] : memref<64x128xf32, #tpu.memory_space<vmem>>, vector<8x128xf32>
    tpu.vector_store %arg12[%c32_45, %c0_46], %153 {strides = array<i32>} : memref<64x128xf32, #tpu.memory_space<vmem>>, vector<8x128xf32>,
    %c40 = arith.constant 40 : index
    %c0_47 = arith.constant 0 : index
    %155 = vector.load %arg11[%c40, %c0_47] : memref<64x512xf32, #tpu.memory_space<vmem>>, vector<8x512xf32>
    %cst_48 = arith.constant dense<0.000000e+00> : vector<8x512xf32>
    %156 = tpu.matmul %153, %1, %cst_48 {dimension_numbers = #tpu.dot_dimension_numbers<[1], [0], [0], [1], [0, 0, 1, 1], [], []>} : vector<8x128xf32>, vector<128x512xf32>, vector<8x512xf32> -> vector<8x512xf32>
    %157 = arith.addf %155, %156 : vector<8x512xf32>
    %158 = vector.extract_strided_slice %157 {offsets = [0, 0], sizes = [8, 128], strides = [1, 1]} : vector<8x512xf32> to vector<8x128xf32>
    %159 = arith.negf %158 : vector<8x128xf32>
    %160 = math.exp %159 : vector<8x128xf32>
    %cst_49 = arith.constant 1.000000e+00 : f32
    %161 = vector.broadcast %cst_49 : f32 to vector<8x128xf32>
    %162 = arith.addf %161, %160 : vector<8x128xf32>
    %163 = arith.divf %161, %162 : vector<8x128xf32>
    %164 = vector.extract_strided_slice %157 {offsets = [0, 128], sizes = [8, 128], strides = [1, 1]} : vector<8x512xf32> to vector<8x128xf32>
    %165 = arith.negf %164 : vector<8x128xf32>
    %166 = math.exp %165 : vector<8x128xf32>
    %cst_50 = arith.constant 1.000000e+00 : f32
    %167 = vector.broadcast %cst_50 : f32 to vector<8x128xf32>
    %168 = arith.addf %167, %166 : vector<8x128xf32>
    %169 = arith.divf %167, %168 : vector<8x128xf32>
    %170 = vector.extract_strided_slice %157 {offsets = [0, 256], sizes = [8, 128], strides = [1, 1]} : vector<8x512xf32> to vector<8x128xf32>
    %171 = math.tanh %170 : vector<8x128xf32>
    %172 = vector.extract_strided_slice %157 {offsets = [0, 384], sizes = [8, 128], strides = [1, 1]} : vector<8x512xf32> to vector<8x128xf32>
    %173 = arith.negf %172 : vector<8x128xf32>
    %174 = math.exp %173 : vector<8x128xf32>
    %cst_51 = arith.constant 1.000000e+00 : f32
    %175 = vector.broadcast %cst_51 : f32 to vector<8x128xf32>
    %176 = arith.addf %175, %174 : vector<8x128xf32>
    %177 = arith.divf %175, %176 : vector<8x128xf32>
    %178 = arith.mulf %169, %151 : vector<8x128xf32>
    %179 = arith.mulf %163, %171 : vector<8x128xf32>
    %180 = arith.addf %178, %179 : vector<8x128xf32>
    %181 = math.tanh %180 : vector<8x128xf32>
    %182 = arith.mulf %177, %181 : vector<8x128xf32>
    %c40_52 = arith.constant 40 : index
    %c0_53 = arith.constant 0 : index
    %183 = vector.load %arg12[%c40_52, %c0_53] : memref<64x128xf32, #tpu.memory_space<vmem>>, vector<8x128xf32>
    tpu.vector_store %arg12[%c40_52, %c0_53], %182 {strides = array<i32>} : memref<64x128xf32, #tpu.memory_space<vmem>>, vector<8x128xf32>,
    %c48 = arith.constant 48 : index
    %c0_54 = arith.constant 0 : index
    %184 = vector.load %arg11[%c48, %c0_54] : memref<64x512xf32, #tpu.memory_space<vmem>>, vector<8x512xf32>
    %cst_55 = arith.constant dense<0.000000e+00> : vector<8x512xf32>
    %185 = tpu.matmul %182, %1, %cst_55 {dimension_numbers = #tpu.dot_dimension_numbers<[1], [0], [0], [1], [0, 0, 1, 1], [], []>} : vector<8x128xf32>, vector<128x512xf32>, vector<8x512xf32> -> vector<8x512xf32>
    %186 = arith.addf %184, %185 : vector<8x512xf32>
    %187 = vector.extract_strided_slice %186 {offsets = [0, 0], sizes = [8, 128], strides = [1, 1]} : vector<8x512xf32> to vector<8x128xf32>
    %188 = arith.negf %187 : vector<8x128xf32>
    %189 = math.exp %188 : vector<8x128xf32>
    %cst_56 = arith.constant 1.000000e+00 : f32
    %190 = vector.broadcast %cst_56 : f32 to vector<8x128xf32>
    %191 = arith.addf %190, %189 : vector<8x128xf32>
    %192 = arith.divf %190, %191 : vector<8x128xf32>
    %193 = vector.extract_strided_slice %186 {offsets = [0, 128], sizes = [8, 128], strides = [1, 1]} : vector<8x512xf32> to vector<8x128xf32>
    %194 = arith.negf %193 : vector<8x128xf32>
    %195 = math.exp %194 : vector<8x128xf32>
    %cst_57 = arith.constant 1.000000e+00 : f32
    %196 = vector.broadcast %cst_57 : f32 to vector<8x128xf32>
    %197 = arith.addf %196, %195 : vector<8x128xf32>
    %198 = arith.divf %196, %197 : vector<8x128xf32>
    %199 = vector.extract_strided_slice %186 {offsets = [0, 256], sizes = [8, 128], strides = [1, 1]} : vector<8x512xf32> to vector<8x128xf32>
    %200 = math.tanh %199 : vector<8x128xf32>
    %201 = vector.extract_strided_slice %186 {offsets = [0, 384], sizes = [8, 128], strides = [1, 1]} : vector<8x512xf32> to vector<8x128xf32>
    %202 = arith.negf %201 : vector<8x128xf32>
    %203 = math.exp %202 : vector<8x128xf32>
    %cst_58 = arith.constant 1.000000e+00 : f32
    %204 = vector.broadcast %cst_58 : f32 to vector<8x128xf32>
    %205 = arith.addf %204, %203 : vector<8x128xf32>
    %206 = arith.divf %204, %205 : vector<8x128xf32>
    %207 = arith.mulf %198, %180 : vector<8x128xf32>
    %208 = arith.mulf %192, %200 : vector<8x128xf32>
    %209 = arith.addf %207, %208 : vector<8x128xf32>
    %210 = math.tanh %209 : vector<8x128xf32>
    %211 = arith.mulf %206, %210 : vector<8x128xf32>
    %c48_59 = arith.constant 48 : index
    %c0_60 = arith.constant 0 : index
    %212 = vector.load %arg12[%c48_59, %c0_60] : memref<64x128xf32, #tpu.memory_space<vmem>>, vector<8x128xf32>
    tpu.vector_store %arg12[%c48_59, %c0_60], %211 {strides = array<i32>} : memref<64x128xf32, #tpu.memory_space<vmem>>, vector<8x128xf32>,
    %c56 = arith.constant 56 : index
    %c0_61 = arith.constant 0 : index
    %213 = vector.load %arg11[%c56, %c0_61] : memref<64x512xf32, #tpu.memory_space<vmem>>, vector<8x512xf32>
    %cst_62 = arith.constant dense<0.000000e+00> : vector<8x512xf32>
    %214 = tpu.matmul %211, %1, %cst_62 {dimension_numbers = #tpu.dot_dimension_numbers<[1], [0], [0], [1], [0, 0, 1, 1], [], []>} : vector<8x128xf32>, vector<128x512xf32>, vector<8x512xf32> -> vector<8x512xf32>
    %215 = arith.addf %213, %214 : vector<8x512xf32>
    %216 = vector.extract_strided_slice %215 {offsets = [0, 0], sizes = [8, 128], strides = [1, 1]} : vector<8x512xf32> to vector<8x128xf32>
    %217 = arith.negf %216 : vector<8x128xf32>
    %218 = math.exp %217 : vector<8x128xf32>
    %cst_63 = arith.constant 1.000000e+00 : f32
    %219 = vector.broadcast %cst_63 : f32 to vector<8x128xf32>
    %220 = arith.addf %219, %218 : vector<8x128xf32>
    %221 = arith.divf %219, %220 : vector<8x128xf32>
    %222 = vector.extract_strided_slice %215 {offsets = [0, 128], sizes = [8, 128], strides = [1, 1]} : vector<8x512xf32> to vector<8x128xf32>
    %223 = arith.negf %222 : vector<8x128xf32>
    %224 = math.exp %223 : vector<8x128xf32>
    %cst_64 = arith.constant 1.000000e+00 : f32
    %225 = vector.broadcast %cst_64 : f32 to vector<8x128xf32>
    %226 = arith.addf %225, %224 : vector<8x128xf32>
    %227 = arith.divf %225, %226 : vector<8x128xf32>
    %228 = vector.extract_strided_slice %215 {offsets = [0, 256], sizes = [8, 128], strides = [1, 1]} : vector<8x512xf32> to vector<8x128xf32>
    %229 = math.tanh %228 : vector<8x128xf32>
    %230 = vector.extract_strided_slice %215 {offsets = [0, 384], sizes = [8, 128], strides = [1, 1]} : vector<8x512xf32> to vector<8x128xf32>
    %231 = arith.negf %230 : vector<8x128xf32>
    %232 = math.exp %231 : vector<8x128xf32>
    %cst_65 = arith.constant 1.000000e+00 : f32
    %233 = vector.broadcast %cst_65 : f32 to vector<8x128xf32>
    %234 = arith.addf %233, %232 : vector<8x128xf32>
    %235 = arith.divf %233, %234 : vector<8x128xf32>
    %236 = arith.mulf %227, %209 : vector<8x128xf32>
    %237 = arith.mulf %221, %229 : vector<8x128xf32>
    %238 = arith.addf %236, %237 : vector<8x128xf32>
    %239 = math.tanh %238 : vector<8x128xf32>
    %240 = arith.mulf %235, %239 : vector<8x128xf32>
    %c56_66 = arith.constant 56 : index
    %c0_67 = arith.constant 0 : index
    %241 = vector.load %arg12[%c56_66, %c0_67] : memref<64x128xf32, #tpu.memory_space<vmem>>, vector<8x128xf32>
    tpu.vector_store %arg12[%c56_66, %c0_67], %240 {strides = array<i32>} : memref<64x128xf32, #tpu.memory_space<vmem>>, vector<8x128xf32>,
    %c0_68 = arith.constant 0 : index
    %c0_69 = arith.constant 0 : index
    %242 = vector.load %arg5[%c0_68, %c0_69] : memref<128x512xf32, #tpu.memory_space<vmem>>, vector<128x512xf32>
    %c0_70 = arith.constant 0 : index
    %c0_71 = arith.constant 0 : index
    %243 = vector.load %arg6[%c0_70, %c0_71] : memref<128x512xf32, #tpu.memory_space<vmem>>, vector<128x512xf32>
    %c0_72 = arith.constant 0 : index
    %c0_73 = arith.constant 0 : index
    %244 = vector.load %arg7[%c0_72, %c0_73] : memref<1x512xf32, #tpu.memory_space<vmem>>, vector<1x512xf32>
    %c0_74 = arith.constant 0 : index
    %c0_75 = arith.constant 0 : index
    %245 = vector.load %arg12[%c0_74, %c0_75] : memref<64x128xf32, #tpu.memory_space<vmem>>, vector<64x128xf32>
    %cst_76 = arith.constant dense<0.000000e+00> : vector<64x512xf32>
    %246 = tpu.matmul %245, %242, %cst_76 {dimension_numbers = #tpu.dot_dimension_numbers<[1], [0], [0], [1], [0, 0, 1, 1], [], []>} : vector<64x128xf32>, vector<128x512xf32>, vector<64x512xf32> -> vector<64x512xf32>
    %247 = vector.broadcast %244 : vector<1x512xf32> to vector<64x512xf32>
    %248 = arith.addf %246, %247 : vector<64x512xf32>
    %c0_77 = arith.constant 0 : index
    %c0_78 = arith.constant 0 : index
    %249 = vector.load %arg11[%c0_77, %c0_78] : memref<64x512xf32, #tpu.memory_space<vmem>>, vector<64x512xf32>
    tpu.vector_store %arg11[%c0_77, %c0_78], %248 {strides = array<i32>} : memref<64x512xf32, #tpu.memory_space<vmem>>, vector<64x512xf32>,
    %cst_79 = arith.constant 0.000000e+00 : f32
    %250 = vector.broadcast %cst_79 : f32 to vector<8x128xf32>
    %cst_80 = arith.constant 0.000000e+00 : f32
    %251 = vector.broadcast %cst_80 : f32 to vector<8x128xf32>
    %c0_81 = arith.constant 0 : index
    %c0_82 = arith.constant 0 : index
    %252 = vector.load %arg11[%c0_81, %c0_82] : memref<64x512xf32, #tpu.memory_space<vmem>>, vector<8x512xf32>
    %cst_83 = arith.constant dense<0.000000e+00> : vector<8x512xf32>
    %253 = tpu.matmul %250, %243, %cst_83 {dimension_numbers = #tpu.dot_dimension_numbers<[1], [0], [0], [1], [0, 0, 1, 1], [], []>} : vector<8x128xf32>, vector<128x512xf32>, vector<8x512xf32> -> vector<8x512xf32>
    %254 = arith.addf %252, %253 : vector<8x512xf32>
    %255 = vector.extract_strided_slice %254 {offsets = [0, 0], sizes = [8, 128], strides = [1, 1]} : vector<8x512xf32> to vector<8x128xf32>
    %256 = arith.negf %255 : vector<8x128xf32>
    %257 = math.exp %256 : vector<8x128xf32>
    %cst_84 = arith.constant 1.000000e+00 : f32
    %258 = vector.broadcast %cst_84 : f32 to vector<8x128xf32>
    %259 = arith.addf %258, %257 : vector<8x128xf32>
    %260 = arith.divf %258, %259 : vector<8x128xf32>
    %261 = vector.extract_strided_slice %254 {offsets = [0, 128], sizes = [8, 128], strides = [1, 1]} : vector<8x512xf32> to vector<8x128xf32>
    %262 = arith.negf %261 : vector<8x128xf32>
    %263 = math.exp %262 : vector<8x128xf32>
    %cst_85 = arith.constant 1.000000e+00 : f32
    %264 = vector.broadcast %cst_85 : f32 to vector<8x128xf32>
    %265 = arith.addf %264, %263 : vector<8x128xf32>
    %266 = arith.divf %264, %265 : vector<8x128xf32>
    %267 = vector.extract_strided_slice %254 {offsets = [0, 256], sizes = [8, 128], strides = [1, 1]} : vector<8x512xf32> to vector<8x128xf32>
    %268 = math.tanh %267 : vector<8x128xf32>
    %269 = vector.extract_strided_slice %254 {offsets = [0, 384], sizes = [8, 128], strides = [1, 1]} : vector<8x512xf32> to vector<8x128xf32>
    %270 = arith.negf %269 : vector<8x128xf32>
    %271 = math.exp %270 : vector<8x128xf32>
    %cst_86 = arith.constant 1.000000e+00 : f32
    %272 = vector.broadcast %cst_86 : f32 to vector<8x128xf32>
    %273 = arith.addf %272, %271 : vector<8x128xf32>
    %274 = arith.divf %272, %273 : vector<8x128xf32>
    %275 = arith.mulf %266, %251 : vector<8x128xf32>
    %276 = arith.mulf %260, %268 : vector<8x128xf32>
    %277 = arith.addf %275, %276 : vector<8x128xf32>
    %278 = math.tanh %277 : vector<8x128xf32>
    %279 = arith.mulf %274, %278 : vector<8x128xf32>
    %c0_87 = arith.constant 0 : index
    %c0_88 = arith.constant 0 : index
    %280 = vector.load %arg12[%c0_87, %c0_88] : memref<64x128xf32, #tpu.memory_space<vmem>>, vector<8x128xf32>
    tpu.vector_store %arg12[%c0_87, %c0_88], %279 {strides = array<i32>} : memref<64x128xf32, #tpu.memory_space<vmem>>, vector<8x128xf32>,
    %c8_89 = arith.constant 8 : index
    %c0_90 = arith.constant 0 : index
    %281 = vector.load %arg11[%c8_89, %c0_90] : memref<64x512xf32, #tpu.memory_space<vmem>>, vector<8x512xf32>
    %cst_91 = arith.constant dense<0.000000e+00> : vector<8x512xf32>
    %282 = tpu.matmul %279, %243, %cst_91 {dimension_numbers = #tpu.dot_dimension_numbers<[1], [0], [0], [1], [0, 0, 1, 1], [], []>} : vector<8x128xf32>, vector<128x512xf32>, vector<8x512xf32> -> vector<8x512xf32>
    %283 = arith.addf %281, %282 : vector<8x512xf32>
    %284 = vector.extract_strided_slice %283 {offsets = [0, 0], sizes = [8, 128], strides = [1, 1]} : vector<8x512xf32> to vector<8x128xf32>
    %285 = arith.negf %284 : vector<8x128xf32>
    %286 = math.exp %285 : vector<8x128xf32>
    %cst_92 = arith.constant 1.000000e+00 : f32
    %287 = vector.broadcast %cst_92 : f32 to vector<8x128xf32>
    %288 = arith.addf %287, %286 : vector<8x128xf32>
    %289 = arith.divf %287, %288 : vector<8x128xf32>
    %290 = vector.extract_strided_slice %283 {offsets = [0, 128], sizes = [8, 128], strides = [1, 1]} : vector<8x512xf32> to vector<8x128xf32>
    %291 = arith.negf %290 : vector<8x128xf32>
    %292 = math.exp %291 : vector<8x128xf32>
    %cst_93 = arith.constant 1.000000e+00 : f32
    %293 = vector.broadcast %cst_93 : f32 to vector<8x128xf32>
    %294 = arith.addf %293, %292 : vector<8x128xf32>
    %295 = arith.divf %293, %294 : vector<8x128xf32>
    %296 = vector.extract_strided_slice %283 {offsets = [0, 256], sizes = [8, 128], strides = [1, 1]} : vector<8x512xf32> to vector<8x128xf32>
    %297 = math.tanh %296 : vector<8x128xf32>
    %298 = vector.extract_strided_slice %283 {offsets = [0, 384], sizes = [8, 128], strides = [1, 1]} : vector<8x512xf32> to vector<8x128xf32>
    %299 = arith.negf %298 : vector<8x128xf32>
    %300 = math.exp %299 : vector<8x128xf32>
    %cst_94 = arith.constant 1.000000e+00 : f32
    %301 = vector.broadcast %cst_94 : f32 to vector<8x128xf32>
    %302 = arith.addf %301, %300 : vector<8x128xf32>
    %303 = arith.divf %301, %302 : vector<8x128xf32>
    %304 = arith.mulf %295, %277 : vector<8x128xf32>
    %305 = arith.mulf %289, %297 : vector<8x128xf32>
    %306 = arith.addf %304, %305 : vector<8x128xf32>
    %307 = math.tanh %306 : vector<8x128xf32>
    %308 = arith.mulf %303, %307 : vector<8x128xf32>
    %c8_95 = arith.constant 8 : index
    %c0_96 = arith.constant 0 : index
    %309 = vector.load %arg12[%c8_95, %c0_96] : memref<64x128xf32, #tpu.memory_space<vmem>>, vector<8x128xf32>
    tpu.vector_store %arg12[%c8_95, %c0_96], %308 {strides = array<i32>} : memref<64x128xf32, #tpu.memory_space<vmem>>, vector<8x128xf32>,
    %c16_97 = arith.constant 16 : index
    %c0_98 = arith.constant 0 : index
    %310 = vector.load %arg11[%c16_97, %c0_98] : memref<64x512xf32, #tpu.memory_space<vmem>>, vector<8x512xf32>
    %cst_99 = arith.constant dense<0.000000e+00> : vector<8x512xf32>
    %311 = tpu.matmul %308, %243, %cst_99 {dimension_numbers = #tpu.dot_dimension_numbers<[1], [0], [0], [1], [0, 0, 1, 1], [], []>} : vector<8x128xf32>, vector<128x512xf32>, vector<8x512xf32> -> vector<8x512xf32>
    %312 = arith.addf %310, %311 : vector<8x512xf32>
    %313 = vector.extract_strided_slice %312 {offsets = [0, 0], sizes = [8, 128], strides = [1, 1]} : vector<8x512xf32> to vector<8x128xf32>
    %314 = arith.negf %313 : vector<8x128xf32>
    %315 = math.exp %314 : vector<8x128xf32>
    %cst_100 = arith.constant 1.000000e+00 : f32
    %316 = vector.broadcast %cst_100 : f32 to vector<8x128xf32>
    %317 = arith.addf %316, %315 : vector<8x128xf32>
    %318 = arith.divf %316, %317 : vector<8x128xf32>
    %319 = vector.extract_strided_slice %312 {offsets = [0, 128], sizes = [8, 128], strides = [1, 1]} : vector<8x512xf32> to vector<8x128xf32>
    %320 = arith.negf %319 : vector<8x128xf32>
    %321 = math.exp %320 : vector<8x128xf32>
    %cst_101 = arith.constant 1.000000e+00 : f32
    %322 = vector.broadcast %cst_101 : f32 to vector<8x128xf32>
    %323 = arith.addf %322, %321 : vector<8x128xf32>
    %324 = arith.divf %322, %323 : vector<8x128xf32>
    %325 = vector.extract_strided_slice %312 {offsets = [0, 256], sizes = [8, 128], strides = [1, 1]} : vector<8x512xf32> to vector<8x128xf32>
    %326 = math.tanh %325 : vector<8x128xf32>
    %327 = vector.extract_strided_slice %312 {offsets = [0, 384], sizes = [8, 128], strides = [1, 1]} : vector<8x512xf32> to vector<8x128xf32>
    %328 = arith.negf %327 : vector<8x128xf32>
    %329 = math.exp %328 : vector<8x128xf32>
    %cst_102 = arith.constant 1.000000e+00 : f32
    %330 = vector.broadcast %cst_102 : f32 to vector<8x128xf32>
    %331 = arith.addf %330, %329 : vector<8x128xf32>
    %332 = arith.divf %330, %331 : vector<8x128xf32>
    %333 = arith.mulf %324, %306 : vector<8x128xf32>
    %334 = arith.mulf %318, %326 : vector<8x128xf32>
    %335 = arith.addf %333, %334 : vector<8x128xf32>
    %336 = math.tanh %335 : vector<8x128xf32>
    %337 = arith.mulf %332, %336 : vector<8x128xf32>
    %c16_103 = arith.constant 16 : index
    %c0_104 = arith.constant 0 : index
    %338 = vector.load %arg12[%c16_103, %c0_104] : memref<64x128xf32, #tpu.memory_space<vmem>>, vector<8x128xf32>
    tpu.vector_store %arg12[%c16_103, %c0_104], %337 {strides = array<i32>} : memref<64x128xf32, #tpu.memory_space<vmem>>, vector<8x128xf32>,
    %c24_105 = arith.constant 24 : index
    %c0_106 = arith.constant 0 : index
    %339 = vector.load %arg11[%c24_105, %c0_106] : memref<64x512xf32, #tpu.memory_space<vmem>>, vector<8x512xf32>
    %cst_107 = arith.constant dense<0.000000e+00> : vector<8x512xf32>
    %340 = tpu.matmul %337, %243, %cst_107 {dimension_numbers = #tpu.dot_dimension_numbers<[1], [0], [0], [1], [0, 0, 1, 1], [], []>} : vector<8x128xf32>, vector<128x512xf32>, vector<8x512xf32> -> vector<8x512xf32>
    %341 = arith.addf %339, %340 : vector<8x512xf32>
    %342 = vector.extract_strided_slice %341 {offsets = [0, 0], sizes = [8, 128], strides = [1, 1]} : vector<8x512xf32> to vector<8x128xf32>
    %343 = arith.negf %342 : vector<8x128xf32>
    %344 = math.exp %343 : vector<8x128xf32>
    %cst_108 = arith.constant 1.000000e+00 : f32
    %345 = vector.broadcast %cst_108 : f32 to vector<8x128xf32>
    %346 = arith.addf %345, %344 : vector<8x128xf32>
    %347 = arith.divf %345, %346 : vector<8x128xf32>
    %348 = vector.extract_strided_slice %341 {offsets = [0, 128], sizes = [8, 128], strides = [1, 1]} : vector<8x512xf32> to vector<8x128xf32>
    %349 = arith.negf %348 : vector<8x128xf32>
    %350 = math.exp %349 : vector<8x128xf32>
    %cst_109 = arith.constant 1.000000e+00 : f32
    %351 = vector.broadcast %cst_109 : f32 to vector<8x128xf32>
    %352 = arith.addf %351, %350 : vector<8x128xf32>
    %353 = arith.divf %351, %352 : vector<8x128xf32>
    %354 = vector.extract_strided_slice %341 {offsets = [0, 256], sizes = [8, 128], strides = [1, 1]} : vector<8x512xf32> to vector<8x128xf32>
    %355 = math.tanh %354 : vector<8x128xf32>
    %356 = vector.extract_strided_slice %341 {offsets = [0, 384], sizes = [8, 128], strides = [1, 1]} : vector<8x512xf32> to vector<8x128xf32>
    %357 = arith.negf %356 : vector<8x128xf32>
    %358 = math.exp %357 : vector<8x128xf32>
    %cst_110 = arith.constant 1.000000e+00 : f32
    %359 = vector.broadcast %cst_110 : f32 to vector<8x128xf32>
    %360 = arith.addf %359, %358 : vector<8x128xf32>
    %361 = arith.divf %359, %360 : vector<8x128xf32>
    %362 = arith.mulf %353, %335 : vector<8x128xf32>
    %363 = arith.mulf %347, %355 : vector<8x128xf32>
    %364 = arith.addf %362, %363 : vector<8x128xf32>
    %365 = math.tanh %364 : vector<8x128xf32>
    %366 = arith.mulf %361, %365 : vector<8x128xf32>
    %c24_111 = arith.constant 24 : index
    %c0_112 = arith.constant 0 : index
    %367 = vector.load %arg12[%c24_111, %c0_112] : memref<64x128xf32, #tpu.memory_space<vmem>>, vector<8x128xf32>
    tpu.vector_store %arg12[%c24_111, %c0_112], %366 {strides = array<i32>} : memref<64x128xf32, #tpu.memory_space<vmem>>, vector<8x128xf32>,
    %c32_113 = arith.constant 32 : index
    %c0_114 = arith.constant 0 : index
    %368 = vector.load %arg11[%c32_113, %c0_114] : memref<64x512xf32, #tpu.memory_space<vmem>>, vector<8x512xf32>
    %cst_115 = arith.constant dense<0.000000e+00> : vector<8x512xf32>
    %369 = tpu.matmul %366, %243, %cst_115 {dimension_numbers = #tpu.dot_dimension_numbers<[1], [0], [0], [1], [0, 0, 1, 1], [], []>} : vector<8x128xf32>, vector<128x512xf32>, vector<8x512xf32> -> vector<8x512xf32>
    %370 = arith.addf %368, %369 : vector<8x512xf32>
    %371 = vector.extract_strided_slice %370 {offsets = [0, 0], sizes = [8, 128], strides = [1, 1]} : vector<8x512xf32> to vector<8x128xf32>
    %372 = arith.negf %371 : vector<8x128xf32>
    %373 = math.exp %372 : vector<8x128xf32>
    %cst_116 = arith.constant 1.000000e+00 : f32
    %374 = vector.broadcast %cst_116 : f32 to vector<8x128xf32>
    %375 = arith.addf %374, %373 : vector<8x128xf32>
    %376 = arith.divf %374, %375 : vector<8x128xf32>
    %377 = vector.extract_strided_slice %370 {offsets = [0, 128], sizes = [8, 128], strides = [1, 1]} : vector<8x512xf32> to vector<8x128xf32>
    %378 = arith.negf %377 : vector<8x128xf32>
    %379 = math.exp %378 : vector<8x128xf32>
    %cst_117 = arith.constant 1.000000e+00 : f32
    %380 = vector.broadcast %cst_117 : f32 to vector<8x128xf32>
    %381 = arith.addf %380, %379 : vector<8x128xf32>
    %382 = arith.divf %380, %381 : vector<8x128xf32>
    %383 = vector.extract_strided_slice %370 {offsets = [0, 256], sizes = [8, 128], strides = [1, 1]} : vector<8x512xf32> to vector<8x128xf32>
    %384 = math.tanh %383 : vector<8x128xf32>
    %385 = vector.extract_strided_slice %370 {offsets = [0, 384], sizes = [8, 128], strides = [1, 1]} : vector<8x512xf32> to vector<8x128xf32>
    %386 = arith.negf %385 : vector<8x128xf32>
    %387 = math.exp %386 : vector<8x128xf32>
    %cst_118 = arith.constant 1.000000e+00 : f32
    %388 = vector.broadcast %cst_118 : f32 to vector<8x128xf32>
    %389 = arith.addf %388, %387 : vector<8x128xf32>
    %390 = arith.divf %388, %389 : vector<8x128xf32>
    %391 = arith.mulf %382, %364 : vector<8x128xf32>
    %392 = arith.mulf %376, %384 : vector<8x128xf32>
    %393 = arith.addf %391, %392 : vector<8x128xf32>
    %394 = math.tanh %393 : vector<8x128xf32>
    %395 = arith.mulf %390, %394 : vector<8x128xf32>
    %c32_119 = arith.constant 32 : index
    %c0_120 = arith.constant 0 : index
    %396 = vector.load %arg12[%c32_119, %c0_120] : memref<64x128xf32, #tpu.memory_space<vmem>>, vector<8x128xf32>
    tpu.vector_store %arg12[%c32_119, %c0_120], %395 {strides = array<i32>} : memref<64x128xf32, #tpu.memory_space<vmem>>, vector<8x128xf32>,
    %c40_121 = arith.constant 40 : index
    %c0_122 = arith.constant 0 : index
    %397 = vector.load %arg11[%c40_121, %c0_122] : memref<64x512xf32, #tpu.memory_space<vmem>>, vector<8x512xf32>
    %cst_123 = arith.constant dense<0.000000e+00> : vector<8x512xf32>
    %398 = tpu.matmul %395, %243, %cst_123 {dimension_numbers = #tpu.dot_dimension_numbers<[1], [0], [0], [1], [0, 0, 1, 1], [], []>} : vector<8x128xf32>, vector<128x512xf32>, vector<8x512xf32> -> vector<8x512xf32>
    %399 = arith.addf %397, %398 : vector<8x512xf32>
    %400 = vector.extract_strided_slice %399 {offsets = [0, 0], sizes = [8, 128], strides = [1, 1]} : vector<8x512xf32> to vector<8x128xf32>
    %401 = arith.negf %400 : vector<8x128xf32>
    %402 = math.exp %401 : vector<8x128xf32>
    %cst_124 = arith.constant 1.000000e+00 : f32
    %403 = vector.broadcast %cst_124 : f32 to vector<8x128xf32>
    %404 = arith.addf %403, %402 : vector<8x128xf32>
    %405 = arith.divf %403, %404 : vector<8x128xf32>
    %406 = vector.extract_strided_slice %399 {offsets = [0, 128], sizes = [8, 128], strides = [1, 1]} : vector<8x512xf32> to vector<8x128xf32>
    %407 = arith.negf %406 : vector<8x128xf32>
    %408 = math.exp %407 : vector<8x128xf32>
    %cst_125 = arith.constant 1.000000e+00 : f32
    %409 = vector.broadcast %cst_125 : f32 to vector<8x128xf32>
    %410 = arith.addf %409, %408 : vector<8x128xf32>
    %411 = arith.divf %409, %410 : vector<8x128xf32>
    %412 = vector.extract_strided_slice %399 {offsets = [0, 256], sizes = [8, 128], strides = [1, 1]} : vector<8x512xf32> to vector<8x128xf32>
    %413 = math.tanh %412 : vector<8x128xf32>
    %414 = vector.extract_strided_slice %399 {offsets = [0, 384], sizes = [8, 128], strides = [1, 1]} : vector<8x512xf32> to vector<8x128xf32>
    %415 = arith.negf %414 : vector<8x128xf32>
    %416 = math.exp %415 : vector<8x128xf32>
    %cst_126 = arith.constant 1.000000e+00 : f32
    %417 = vector.broadcast %cst_126 : f32 to vector<8x128xf32>
    %418 = arith.addf %417, %416 : vector<8x128xf32>
    %419 = arith.divf %417, %418 : vector<8x128xf32>
    %420 = arith.mulf %411, %393 : vector<8x128xf32>
    %421 = arith.mulf %405, %413 : vector<8x128xf32>
    %422 = arith.addf %420, %421 : vector<8x128xf32>
    %423 = math.tanh %422 : vector<8x128xf32>
    %424 = arith.mulf %419, %423 : vector<8x128xf32>
    %c40_127 = arith.constant 40 : index
    %c0_128 = arith.constant 0 : index
    %425 = vector.load %arg12[%c40_127, %c0_128] : memref<64x128xf32, #tpu.memory_space<vmem>>, vector<8x128xf32>
    tpu.vector_store %arg12[%c40_127, %c0_128], %424 {strides = array<i32>} : memref<64x128xf32, #tpu.memory_space<vmem>>, vector<8x128xf32>,
    %c48_129 = arith.constant 48 : index
    %c0_130 = arith.constant 0 : index
    %426 = vector.load %arg11[%c48_129, %c0_130] : memref<64x512xf32, #tpu.memory_space<vmem>>, vector<8x512xf32>
    %cst_131 = arith.constant dense<0.000000e+00> : vector<8x512xf32>
    %427 = tpu.matmul %424, %243, %cst_131 {dimension_numbers = #tpu.dot_dimension_numbers<[1], [0], [0], [1], [0, 0, 1, 1], [], []>} : vector<8x128xf32>, vector<128x512xf32>, vector<8x512xf32> -> vector<8x512xf32>
    %428 = arith.addf %426, %427 : vector<8x512xf32>
    %429 = vector.extract_strided_slice %428 {offsets = [0, 0], sizes = [8, 128], strides = [1, 1]} : vector<8x512xf32> to vector<8x128xf32>
    %430 = arith.negf %429 : vector<8x128xf32>
    %431 = math.exp %430 : vector<8x128xf32>
    %cst_132 = arith.constant 1.000000e+00 : f32
    %432 = vector.broadcast %cst_132 : f32 to vector<8x128xf32>
    %433 = arith.addf %432, %431 : vector<8x128xf32>
    %434 = arith.divf %432, %433 : vector<8x128xf32>
    %435 = vector.extract_strided_slice %428 {offsets = [0, 128], sizes = [8, 128], strides = [1, 1]} : vector<8x512xf32> to vector<8x128xf32>
    %436 = arith.negf %435 : vector<8x128xf32>
    %437 = math.exp %436 : vector<8x128xf32>
    %cst_133 = arith.constant 1.000000e+00 : f32
    %438 = vector.broadcast %cst_133 : f32 to vector<8x128xf32>
    %439 = arith.addf %438, %437 : vector<8x128xf32>
    %440 = arith.divf %438, %439 : vector<8x128xf32>
    %441 = vector.extract_strided_slice %428 {offsets = [0, 256], sizes = [8, 128], strides = [1, 1]} : vector<8x512xf32> to vector<8x128xf32>
    %442 = math.tanh %441 : vector<8x128xf32>
    %443 = vector.extract_strided_slice %428 {offsets = [0, 384], sizes = [8, 128], strides = [1, 1]} : vector<8x512xf32> to vector<8x128xf32>
    %444 = arith.negf %443 : vector<8x128xf32>
    %445 = math.exp %444 : vector<8x128xf32>
    %cst_134 = arith.constant 1.000000e+00 : f32
    %446 = vector.broadcast %cst_134 : f32 to vector<8x128xf32>
    %447 = arith.addf %446, %445 : vector<8x128xf32>
    %448 = arith.divf %446, %447 : vector<8x128xf32>
    %449 = arith.mulf %440, %422 : vector<8x128xf32>
    %450 = arith.mulf %434, %442 : vector<8x128xf32>
    %451 = arith.addf %449, %450 : vector<8x128xf32>
    %452 = math.tanh %451 : vector<8x128xf32>
    %453 = arith.mulf %448, %452 : vector<8x128xf32>
    %c48_135 = arith.constant 48 : index
    %c0_136 = arith.constant 0 : index
    %454 = vector.load %arg12[%c48_135, %c0_136] : memref<64x128xf32, #tpu.memory_space<vmem>>, vector<8x128xf32>
    tpu.vector_store %arg12[%c48_135, %c0_136], %453 {strides = array<i32>} : memref<64x128xf32, #tpu.memory_space<vmem>>, vector<8x128xf32>,
    %c56_137 = arith.constant 56 : index
    %c0_138 = arith.constant 0 : index
    %455 = vector.load %arg11[%c56_137, %c0_138] : memref<64x512xf32, #tpu.memory_space<vmem>>, vector<8x512xf32>
    %cst_139 = arith.constant dense<0.000000e+00> : vector<8x512xf32>
    %456 = tpu.matmul %453, %243, %cst_139 {dimension_numbers = #tpu.dot_dimension_numbers<[1], [0], [0], [1], [0, 0, 1, 1], [], []>} : vector<8x128xf32>, vector<128x512xf32>, vector<8x512xf32> -> vector<8x512xf32>
    %457 = arith.addf %455, %456 : vector<8x512xf32>
    %458 = vector.extract_strided_slice %457 {offsets = [0, 0], sizes = [8, 128], strides = [1, 1]} : vector<8x512xf32> to vector<8x128xf32>
    %459 = arith.negf %458 : vector<8x128xf32>
    %460 = math.exp %459 : vector<8x128xf32>
    %cst_140 = arith.constant 1.000000e+00 : f32
    %461 = vector.broadcast %cst_140 : f32 to vector<8x128xf32>
    %462 = arith.addf %461, %460 : vector<8x128xf32>
    %463 = arith.divf %461, %462 : vector<8x128xf32>
    %464 = vector.extract_strided_slice %457 {offsets = [0, 128], sizes = [8, 128], strides = [1, 1]} : vector<8x512xf32> to vector<8x128xf32>
    %465 = arith.negf %464 : vector<8x128xf32>
    %466 = math.exp %465 : vector<8x128xf32>
    %cst_141 = arith.constant 1.000000e+00 : f32
    %467 = vector.broadcast %cst_141 : f32 to vector<8x128xf32>
    %468 = arith.addf %467, %466 : vector<8x128xf32>
    %469 = arith.divf %467, %468 : vector<8x128xf32>
    %470 = vector.extract_strided_slice %457 {offsets = [0, 256], sizes = [8, 128], strides = [1, 1]} : vector<8x512xf32> to vector<8x128xf32>
    %471 = math.tanh %470 : vector<8x128xf32>
    %472 = vector.extract_strided_slice %457 {offsets = [0, 384], sizes = [8, 128], strides = [1, 1]} : vector<8x512xf32> to vector<8x128xf32>
    %473 = arith.negf %472 : vector<8x128xf32>
    %474 = math.exp %473 : vector<8x128xf32>
    %cst_142 = arith.constant 1.000000e+00 : f32
    %475 = vector.broadcast %cst_142 : f32 to vector<8x128xf32>
    %476 = arith.addf %475, %474 : vector<8x128xf32>
    %477 = arith.divf %475, %476 : vector<8x128xf32>
    %478 = arith.mulf %469, %451 : vector<8x128xf32>
    %479 = arith.mulf %463, %471 : vector<8x128xf32>
    %480 = arith.addf %478, %479 : vector<8x128xf32>
    %481 = math.tanh %480 : vector<8x128xf32>
    %482 = arith.mulf %477, %481 : vector<8x128xf32>
    %c56_143 = arith.constant 56 : index
    %c0_144 = arith.constant 0 : index
    %483 = vector.load %arg12[%c56_143, %c0_144] : memref<64x128xf32, #tpu.memory_space<vmem>>, vector<8x128xf32>
    tpu.vector_store %arg12[%c56_143, %c0_144], %482 {strides = array<i32>} : memref<64x128xf32, #tpu.memory_space<vmem>>, vector<8x128xf32>,
    %c0_145 = arith.constant 0 : index
    %c0_146 = arith.constant 0 : index
    %484 = vector.load %arg8[%c0_145, %c0_146] : memref<128x128xf32, #tpu.memory_space<vmem>>, vector<128x128xf32>
    %c0_147 = arith.constant 0 : index
    %c0_148 = arith.constant 0 : index
    %485 = vector.load %arg12[%c0_147, %c0_148] : memref<64x128xf32, #tpu.memory_space<vmem>>, vector<64x128xf32>
    %cst_149 = arith.constant dense<0.000000e+00> : vector<64x128xf32>
    %486 = tpu.matmul %485, %484, %cst_149 {dimension_numbers = #tpu.dot_dimension_numbers<[1], [0], [0], [1], [0, 0, 1, 1], [], []>} : vector<64x128xf32>, vector<128x128xf32>, vector<64x128xf32> -> vector<64x128xf32>
    %c0_150 = arith.constant 0 : index
    %c0_151 = arith.constant 0 : index
    %487 = vector.load %arg9[%c0_150, %c0_151] : memref<1x128xf32, #tpu.memory_space<vmem>>, vector<1x128xf32>
    %488 = vector.broadcast %487 : vector<1x128xf32> to vector<64x128xf32>
    %489 = arith.addf %486, %488 : vector<64x128xf32>
    %c0_152 = arith.constant 0 : index
    %c0_153 = arith.constant 0 : index
    %490 = vector.load %arg10[%c0_152, %c0_153] : memref<64x128xf32, #tpu.memory_space<vmem>>, vector<64x128xf32>
    tpu.vector_store %arg10[%c0_152, %c0_153], %489 {strides = array<i32>} : memref<64x128xf32, #tpu.memory_space<vmem>>, vector<64x128xf32>,
    return
  }
  func.func @transform_0(%arg0: i32) -> (i32, i32) {
    %c0_i32 = arith.constant 0 : i32
    %c0_i32_0 = arith.constant 0 : i32
    %c0_i32_1 = arith.constant 0 : i32
    return %c0_i32, %c0_i32_0 : i32, i32
  }
  func.func @transform_1(%arg0: i32) -> (i32, i32) {
    %c0_i32 = arith.constant 0 : i32
    %c0_i32_0 = arith.constant 0 : i32
    %c0_i32_1 = arith.constant 0 : i32
    return %c0_i32, %c0_i32_0 : i32, i32
  }
  func.func @transform_2(%arg0: i32) -> (i32, i32) {
    %c0_i32 = arith.constant 0 : i32
    %c0_i32_0 = arith.constant 0 : i32
    %c0_i32_1 = arith.constant 0 : i32
    return %c0_i32, %c0_i32_0 : i32, i32
  }
  func.func @transform_3(%arg0: i32) -> (i32, i32) {
    %c0_i32 = arith.constant 0 : i32
    %c0_i32_0 = arith.constant 0 : i32
    %c0_i32_1 = arith.constant 0 : i32
    return %c0_i32, %c0_i32_0 : i32, i32
  }
  func.func @transform_4(%arg0: i32) -> (i32, i32) {
    %c0_i32 = arith.constant 0 : i32
    %c0_i32_0 = arith.constant 0 : i32
    %c0_i32_1 = arith.constant 0 : i32
    return %c0_i32, %c0_i32_0 : i32, i32
  }
  func.func @transform_5(%arg0: i32) -> (i32, i32) {
    %c0_i32 = arith.constant 0 : i32
    %c0_i32_0 = arith.constant 0 : i32
    %c0_i32_1 = arith.constant 0 : i32
    return %c0_i32, %c0_i32_0 : i32, i32
  }
  func.func @transform_6(%arg0: i32) -> (i32, i32) {
    %c0_i32 = arith.constant 0 : i32
    %c0_i32_0 = arith.constant 0 : i32
    %c0_i32_1 = arith.constant 0 : i32
    return %c0_i32, %c0_i32_0 : i32, i32
  }
  func.func @transform_7(%arg0: i32) -> (i32, i32) {
    %c0_i32 = arith.constant 0 : i32
    %c0_i32_0 = arith.constant 0 : i32
    %c0_i32_1 = arith.constant 0 : i32
    return %c0_i32, %c0_i32_0 : i32, i32
  }
  func.func @transform_8(%arg0: i32) -> (i32, i32) {
    %c0_i32 = arith.constant 0 : i32
    %c0_i32_0 = arith.constant 0 : i32
    %c0_i32_1 = arith.constant 0 : i32
    return %c0_i32, %c0_i32_0 : i32, i32
  }
  func.func @transform_9(%arg0: i32) -> (i32, i32) {
    %c0_i32 = arith.constant 0 : i32
    %c0_i32_0 = arith.constant 0 : i32
    %c0_i32_1 = arith.constant 0 : i32
    return %c0_i32, %c0_i32_0 : i32, i32
  }
}

</mosaic_0001>

<llo_original>
// kernel: lstm_model_forward.1
$region0: #{lstm_model_forward.1}
  #allocation0 [shape = 'u32[]', space=smem, size = 0x4, offset = 0x4, fixed_abs, tag = 'smem constant byte address 0x4 - core index']
  #allocation1 [shape = 'u32[144,128]{1,0:T(1,128)}', space=vmem, size = 0x12000, scoped, tag = 'internal scratch']
  #allocation2 [shape = 'f32[64,512]{1,0:T(8,128)}', space=vmem, size = 0x20000, scoped, tag = 'scratch operand']
  #allocation3 [shape = 'f32[64,128]{1,0:T(8,128)}', space=vmem, size = 0x8000, scoped, tag = 'scratch operand']
  %s0 = inlined_call_operand.vmem [shape: f32[64,128], index: 0, kind: input, shape index: {}]
  %s1 = inlined_call_operand.hbm [shape: f32[128,512], index: 1, kind: input, shape index: {}]
  %s2 = inlined_call_operand.hbm [shape: f32[128,512], index: 2, kind: input, shape index: {}]
  %s3 = inlined_call_operand.vmem [shape: f32[1,512], index: 3, kind: input, shape index: {}]
  %s4 = inlined_call_operand.hbm [shape: f32[128,512], index: 4, kind: input, shape index: {}]
  %s5 = inlined_call_operand.hbm [shape: f32[128,512], index: 5, kind: input, shape index: {}]
  %s6 = inlined_call_operand.vmem [shape: f32[1,512], index: 6, kind: input, shape index: {}]
  %s7 = inlined_call_operand.vmem [shape: f32[128,128], index: 7, kind: input, shape index: {}]
  %s8 = inlined_call_operand.vmem [shape: f32[1,128], index: 8, kind: input, shape index: {}]
  %s9 = inlined_call_operand.vmem [shape: f32[64,128], index: 9, kind: output, shape index: {}]
  %s10 = sld [smem:[#allocation0]]
  $region62: #{lstm_model_forward.1} parent=0
    _
  %s12 = ssub.s32 1, %s10
  %s13 = scalar_select 0, %s12, %s10
  $region1: #{lstm_model_forward.1} parent=0
    #allocation4 [shape = 'u8[262144]{0}', space=vmem, size = 0x40000, scoped, tag = 'input window, operand 1, single buffered']
    #allocation5 [shape = 's32[1]{0}', space=sflag, size = 0x4, scoped, tag = 'scoped memory for lstm_model_forward.1']
    #allocation6 [shape = 'u8[262144]{0}', space=vmem, size = 0x40000, scoped, tag = 'input window, operand 2, single buffered']
    #allocation7 [shape = 's32[1]{0}', space=sflag, size = 0x4, scoped, tag = 'scoped memory for lstm_model_forward.1']
    #allocation8 [shape = 'u8[262144]{0}', space=vmem, size = 0x40000, scoped, tag = 'input window, operand 4, single buffered']
    #allocation9 [shape = 'u8[262144]{0}', space=vmem, size = 0x40000, scoped, tag = 'input window, operand 5, single buffered']
    #allocation10 [shape = 's32[1]{0}', space=sflag, size = 0x4, scoped, tag = 'scoped memory for lstm_model_forward.1']
    %14 = vsyncpa [#allocation5], 0
    %15 = vsyncpa [#allocation7], 0
    %16 = vsyncpa [#allocation10], 0
    // Predicated region
    $region2: #{lstm_model_forward.1} parent=1 // pred_check
      _
    $region3: #{lstm_model_forward.1} parent=1 // pred_check_branch
      %18 = sbr.rel (0) target = $region5
    $region4: #{lstm_model_forward.1} parent=1 // pred_region
      _
    $region5: #{lstm_model_forward.1} parent=1 // pred_fallthru
      _
    // Predicated region
    $region6: #{lstm_model_forward.1} parent=1 // pred_check
      _
    $region7: #{lstm_model_forward.1} parent=1 // pred_check_branch
      %20 = sbr.rel (0) target = $region9
    $region8: #{lstm_model_forward.1} parent=1 // pred_region
      %s22 = ssub.s32 8192, 8192
      %23 = vsyncadd [#allocation5], %s22
      %s24 = sshll.u32 [#allocation4], 4
      %s25 = int_to_ptr.vmem [resolvable:$true] %s24
      %30 = dma.hbm_to_vmem [thread:$0]  %s1, 8192, %s25, [#allocation5], 512, 512, 32
    $region9: #{lstm_model_forward.1} parent=1 // pred_fallthru
      _
    // Predicated region
    $region10: #{lstm_model_forward.1} parent=1 // pred_check
      _
    $region11: #{lstm_model_forward.1} parent=1 // pred_check_branch
      %32 = sbr.rel (0) target = $region13
    $region12: #{lstm_model_forward.1} parent=1 // pred_region
      %s34 = ssub.s32 8192, 8192
      %35 = vsyncadd [#allocation7], %s34
      %s36 = sshll.u32 [#allocation6], 4
      %s37 = int_to_ptr.vmem [resolvable:$true] %s36
      %42 = dma.hbm_to_vmem [thread:$0]  %s2, 8192, %s37, [#allocation7], 512, 512, 32
    $region13: #{lstm_model_forward.1} parent=1 // pred_fallthru
      _
    // Predicated region
    $region14: #{lstm_model_forward.1} parent=1 // pred_check
      _
    $region15: #{lstm_model_forward.1} parent=1 // pred_check_branch
      %44 = sbr.rel (0) target = $region17
    $region16: #{lstm_model_forward.1} parent=1 // pred_region
      _
    $region17: #{lstm_model_forward.1} parent=1 // pred_fallthru
      _
    // Predicated region
    $region18: #{lstm_model_forward.1} parent=1 // pred_check
      _
    $region19: #{lstm_model_forward.1} parent=1 // pred_check_branch
      %46 = sbr.rel (0) target = $region21
    $region20: #{lstm_model_forward.1} parent=1 // pred_region
      %s48 = ssub.s32 8192, 8192
      %49 = vsyncadd [#allocation7], %s48
      %s50 = sshll.u32 [#allocation8], 4
      %s51 = int_to_ptr.vmem [resolvable:$true] %s50
      %56 = dma.hbm_to_vmem [thread:$0]  %s4, 8192, %s51, [#allocation7], 512, 512, 32
    $region21: #{lstm_model_forward.1} parent=1 // pred_fallthru
      _
    // Predicated region
    $region22: #{lstm_model_forward.1} parent=1 // pred_check
      _
    $region23: #{lstm_model_forward.1} parent=1 // pred_check_branch
      %58 = sbr.rel (0) target = $region25
    $region24: #{lstm_model_forward.1} parent=1 // pred_region
      %s60 = ssub.s32 8192, 8192
      %61 = vsyncadd [#allocation10], %s60
      %s62 = sshll.u32 [#allocation9], 4
      %s63 = int_to_ptr.vmem [resolvable:$true] %s62
      %68 = dma.hbm_to_vmem [thread:$0]  %s5, 8192, %s63, [#allocation10], 512, 512, 32
    $region25: #{lstm_model_forward.1} parent=1 // pred_fallthru
      _
    // Predicated region
    $region26: #{lstm_model_forward.1} parent=1 // pred_check
      _
    $region27: #{lstm_model_forward.1} parent=1 // pred_check_branch
      %70 = sbr.rel (0) target = $region29
    $region28: #{lstm_model_forward.1} parent=1 // pred_region
      _
    $region29: #{lstm_model_forward.1} parent=1 // pred_fallthru
      _
    // Predicated region
    $region30: #{lstm_model_forward.1} parent=1 // pred_check
      _
    $region31: #{lstm_model_forward.1} parent=1 // pred_check_branch
      %72 = sbr.rel (0) target = $region33
    $region32: #{lstm_model_forward.1} parent=1 // pred_region
      _
    $region33: #{lstm_model_forward.1} parent=1 // pred_fallthru
      _
    // Predicated region
    $region34: #{lstm_model_forward.1} parent=1 // pred_check
      _
    $region35: #{lstm_model_forward.1} parent=1 // pred_check_branch
      %74 = sbr.rel (0) target = $region37
    $region36: #{lstm_model_forward.1} parent=1 // pred_region
      _
    $region37: #{lstm_model_forward.1} parent=1 // pred_fallthru
      _
    // Predicated region
    $region38: #{lstm_model_forward.1} parent=1 // pred_check
      _
    $region39: #{lstm_model_forward.1} parent=1 // pred_check_branch
      %76 = sbr.rel (0) target = $region41
    $region40: #{lstm_model_forward.1} parent=1 // pred_region
      %77 = dma.done [#allocation5], 8192
    $region41: #{lstm_model_forward.1} parent=1 // pred_fallthru
      _
    // Predicated region
    $region42: #{lstm_model_forward.1} parent=1 // pred_check
      _
    $region43: #{lstm_model_forward.1} parent=1 // pred_check_branch
      %79 = sbr.rel (0) target = $region45
    $region44: #{lstm_model_forward.1} parent=1 // pred_region
      %80 = dma.done [#allocation7], 8192
    $region45: #{lstm_model_forward.1} parent=1 // pred_fallthru
      _
    // Predicated region
    $region46: #{lstm_model_forward.1} parent=1 // pred_check
      _
    $region47: #{lstm_model_forward.1} parent=1 // pred_check_branch
      %82 = sbr.rel (0) target = $region49
    $region48: #{lstm_model_forward.1} parent=1 // pred_region
      %83 = dma.done [#allocation7], 8192
    $region49: #{lstm_model_forward.1} parent=1 // pred_fallthru
      _
    // Predicated region
    $region50: #{lstm_model_forward.1} parent=1 // pred_check
      _
    $region51: #{lstm_model_forward.1} parent=1 // pred_check_branch
      %85 = sbr.rel (0) target = $region53
    $region52: #{lstm_model_forward.1} parent=1 // pred_region
      %86 = dma.done [#allocation10], 8192
    $region53: #{lstm_model_forward.1} parent=1 // pred_fallthru
      _
    %v87 = vld [vmem:[#allocation4] sm:$0xff]
    %v88 = vld [vmem:[#allocation4 + $0x8] sm:$0xff]
    %v89 = vld [vmem:[#allocation4 + $0x10] sm:$0xff]
    %v90 = vld [vmem:[#allocation4 + $0x18] sm:$0xff]
    %v91 = vld [vmem:[#allocation4 + $0x20] sm:$0xff]
    %v92 = vld [vmem:[#allocation4 + $0x28] sm:$0xff]
    %v93 = vld [vmem:[#allocation4 + $0x30] sm:$0xff]
    %v94 = vld [vmem:[#allocation4 + $0x38] sm:$0xff]
    %v95 = vld [vmem:[#allocation4 + $0x40] sm:$0xff]
    %v96 = vld [vmem:[#allocation4 + $0x48] sm:$0xff]
    %v97 = vld [vmem:[#allocation4 + $0x50] sm:$0xff]
    %v98 = vld [vmem:[#allocation4 + $0x58] sm:$0xff]
    %v99 = vld [vmem:[#allocation4 + $0x60] sm:$0xff]
    %v100 = vld [vmem:[#allocation4 + $0x68] sm:$0xff]
    %v101 = vld [vmem:[#allocation4 + $0x70] sm:$0xff]
    %v102 = vld [vmem:[#allocation4 + $0x78] sm:$0xff]
    %v103 = vld [vmem:[#allocation4 + $0x80] sm:$0xff]
    %v104 = vld [vmem:[#allocation4 + $0x88] sm:$0xff]
    %v105 = vld [vmem:[#allocation4 + $0x90] sm:$0xff]
    %v106 = vld [vmem:[#allocation4 + $0x98] sm:$0xff]
    %v107 = vld [vmem:[#allocation4 + $0xa0] sm:$0xff]
    %v108 = vld [vmem:[#allocation4 + $0xa8] sm:$0xff]
    %v109 = vld [vmem:[#allocation4 + $0xb0] sm:$0xff]
    %v110 = vld [vmem:[#allocation4 + $0xb8] sm:$0xff]
    %v111 = vld [vmem:[#allocation4 + $0xc0] sm:$0xff]
    %v112 = vld [vmem:[#allocation4 + $0xc8] sm:$0xff]
    %v113 = vld [vmem:[#allocation4 + $0xd0] sm:$0xff]
    %v114 = vld [vmem:[#allocation4 + $0xd8] sm:$0xff]
    %v115 = vld [vmem:[#allocation4 + $0xe0] sm:$0xff]
    %v116 = vld [vmem:[#allocation4 + $0xe8] sm:$0xff]
    %v117 = vld [vmem:[#allocation4 + $0xf0] sm:$0xff]
    %v118 = vld [vmem:[#allocation4 + $0xf8] sm:$0xff]
    %v119 = vld [vmem:[#allocation4 + $0x100] sm:$0xff]
    %v120 = vld [vmem:[#allocation4 + $0x108] sm:$0xff]
    %v121 = vld [vmem:[#allocation4 + $0x110] sm:$0xff]
    %v122 = vld [vmem:[#allocation4 + $0x118] sm:$0xff]
    %v123 = vld [vmem:[#allocation4 + $0x120] sm:$0xff]
    %v124 = vld [vmem:[#allocation4 + $0x128] sm:$0xff]
    %v125 = vld [vmem:[#allocation4 + $0x130] sm:$0xff]
    %v126 = vld [vmem:[#allocation4 + $0x138] sm:$0xff]
    %v127 = vld [vmem:[#allocation4 + $0x140] sm:$0xff]
    %v128 = vld [vmem:[#allocation4 + $0x148] sm:$0xff]
    %v129 = vld [vmem:[#allocation4 + $0x150] sm:$0xff]
    %v130 = vld [vmem:[#allocation4 + $0x158] sm:$0xff]
    %v131 = vld [vmem:[#allocation4 + $0x160] sm:$0xff]
    %v132 = vld [vmem:[#allocation4 + $0x168] sm:$0xff]
    %v133 = vld [vmem:[#allocation4 + $0x170] sm:$0xff]
    %v134 = vld [vmem:[#allocation4 + $0x178] sm:$0xff]
    %v135 = vld [vmem:[#allocation4 + $0x180] sm:$0xff]
    %v136 = vld [vmem:[#allocation4 + $0x188] sm:$0xff]
    %v137 = vld [vmem:[#allocation4 + $0x190] sm:$0xff]
    %v138 = vld [vmem:[#allocation4 + $0x198] sm:$0xff]
    %v139 = vld [vmem:[#allocation4 + $0x1a0] sm:$0xff]
    %v140 = vld [vmem:[#allocation4 + $0x1a8] sm:$0xff]
    %v141 = vld [vmem:[#allocation4 + $0x1b0] sm:$0xff]
    %v142 = vld [vmem:[#allocation4 + $0x1b8] sm:$0xff]
    %v143 = vld [vmem:[#allocation4 + $0x1c0] sm:$0xff]
    %v144 = vld [vmem:[#allocation4 + $0x1c8] sm:$0xff]
    %v145 = vld [vmem:[#allocation4 + $0x1d0] sm:$0xff]
    %v146 = vld [vmem:[#allocation4 + $0x1d8] sm:$0xff]
    %v147 = vld [vmem:[#allocation4 + $0x1e0] sm:$0xff]
    %v148 = vld [vmem:[#allocation4 + $0x1e8] sm:$0xff]
    %v149 = vld [vmem:[#allocation4 + $0x1f0] sm:$0xff]
    %v150 = vld [vmem:[#allocation4 + $0x1f8] sm:$0xff]
    %v151 = vld [vmem:[#allocation6] sm:$0xff]
    %v152 = vld [vmem:[#allocation6 + $0x8] sm:$0xff]
    %v153 = vld [vmem:[#allocation6 + $0x10] sm:$0xff]
    %v154 = vld [vmem:[#allocation6 + $0x18] sm:$0xff]
    %v155 = vld [vmem:[#allocation6 + $0x20] sm:$0xff]
    %v156 = vld [vmem:[#allocation6 + $0x28] sm:$0xff]
    %v157 = vld [vmem:[#allocation6 + $0x30] sm:$0xff]
    %v158 = vld [vmem:[#allocation6 + $0x38] sm:$0xff]
    %v159 = vld [vmem:[#allocation6 + $0x40] sm:$0xff]
    %v160 = vld [vmem:[#allocation6 + $0x48] sm:$0xff]
    %v161 = vld [vmem:[#allocation6 + $0x50] sm:$0xff]
    %v162 = vld [vmem:[#allocation6 + $0x58] sm:$0xff]
    %v163 = vld [vmem:[#allocation6 + $0x60] sm:$0xff]
    %v164 = vld [vmem:[#allocation6 + $0x68] sm:$0xff]
    %v165 = vld [vmem:[#allocation6 + $0x70] sm:$0xff]
    %v166 = vld [vmem:[#allocation6 + $0x78] sm:$0xff]
    %v167 = vld [vmem:[#allocation6 + $0x80] sm:$0xff]
    %v168 = vld [vmem:[#allocation6 + $0x88] sm:$0xff]
    %v169 = vld [vmem:[#allocation6 + $0x90] sm:$0xff]
    %v170 = vld [vmem:[#allocation6 + $0x98] sm:$0xff]
    %v171 = vld [vmem:[#allocation6 + $0xa0] sm:$0xff]
    %v172 = vld [vmem:[#allocation6 + $0xa8] sm:$0xff]
    %v173 = vld [vmem:[#allocation6 + $0xb0] sm:$0xff]
    %v174 = vld [vmem:[#allocation6 + $0xb8] sm:$0xff]
    %v175 = vld [vmem:[#allocation6 + $0xc0] sm:$0xff]
    %v176 = vld [vmem:[#allocation6 + $0xc8] sm:$0xff]
    %v177 = vld [vmem:[#allocation6 + $0xd0] sm:$0xff]
    %v178 = vld [vmem:[#allocation6 + $0xd8] sm:$0xff]
    %v179 = vld [vmem:[#allocation6 + $0xe0] sm:$0xff]
    %v180 = vld [vmem:[#allocation6 + $0xe8] sm:$0xff]
    %v181 = vld [vmem:[#allocation6 + $0xf0] sm:$0xff]
    %v182 = vld [vmem:[#allocation6 + $0xf8] sm:$0xff]
    %v183 = vld [vmem:[#allocation6 + $0x100] sm:$0xff]
    %v184 = vld [vmem:[#allocation6 + $0x108] sm:$0xff]
    %v185 = vld [vmem:[#allocation6 + $0x110] sm:$0xff]
    %v186 = vld [vmem:[#allocation6 + $0x118] sm:$0xff]
    %v187 = vld [vmem:[#allocation6 + $0x120] sm:$0xff]
    %v188 = vld [vmem:[#allocation6 + $0x128] sm:$0xff]
    %v189 = vld [vmem:[#allocation6 + $0x130] sm:$0xff]
    %v190 = vld [vmem:[#allocation6 + $0x138] sm:$0xff]
    %v191 = vld [vmem:[#allocation6 + $0x140] sm:$0xff]
    %v192 = vld [vmem:[#allocation6 + $0x148] sm:$0xff]
    %v193 = vld [vmem:[#allocation6 + $0x150] sm:$0xff]
    %v194 = vld [vmem:[#allocation6 + $0x158] sm:$0xff]
    %v195 = vld [vmem:[#allocation6 + $0x160] sm:$0xff]
    %v196 = vld [vmem:[#allocation6 + $0x168] sm:$0xff]
    %v197 = vld [vmem:[#allocation6 + $0x170] sm:$0xff]
    %v198 = vld [vmem:[#allocation6 + $0x178] sm:$0xff]
    %v199 = vld [vmem:[#allocation6 + $0x180] sm:$0xff]
    %v200 = vld [vmem:[#allocation6 + $0x188] sm:$0xff]
    %v201 = vld [vmem:[#allocation6 + $0x190] sm:$0xff]
    %v202 = vld [vmem:[#allocation6 + $0x198] sm:$0xff]
    %v203 = vld [vmem:[#allocation6 + $0x1a0] sm:$0xff]
    %v204 = vld [vmem:[#allocation6 + $0x1a8] sm:$0xff]
    %v205 = vld [vmem:[#allocation6 + $0x1b0] sm:$0xff]
    %v206 = vld [vmem:[#allocation6 + $0x1b8] sm:$0xff]
    %v207 = vld [vmem:[#allocation6 + $0x1c0] sm:$0xff]
    %v208 = vld [vmem:[#allocation6 + $0x1c8] sm:$0xff]
    %v209 = vld [vmem:[#allocation6 + $0x1d0] sm:$0xff]
    %v210 = vld [vmem:[#allocation6 + $0x1d8] sm:$0xff]
    %v211 = vld [vmem:[#allocation6 + $0x1e0] sm:$0xff]
    %v212 = vld [vmem:[#allocation6 + $0x1e8] sm:$0xff]
    %v213 = vld [vmem:[#allocation6 + $0x1f0] sm:$0xff]
    %v214 = vld [vmem:[#allocation6 + $0x1f8] sm:$0xff]
    %v215 = vld [vmem:[%s3] sm:$0xf]
    %v216 = vld [vmem:[%s0] sm:$0xff]
    %v217 = vld [vmem:[%s0 + $0x8] sm:$0xff]
    %v218 = vld [vmem:[%s0 + $0x10] sm:$0xff]
    %v219 = vld [vmem:[%s0 + $0x18] sm:$0xff]
    %v220 = vld [vmem:[%s0 + $0x20] sm:$0xff]
    %v221 = vld [vmem:[%s0 + $0x28] sm:$0xff]
    %v222 = vld [vmem:[%s0 + $0x30] sm:$0xff]
    %v223 = vld [vmem:[%s0 + $0x38] sm:$0xff]
    %v225 = vlaneseq
    %v226 = vshrl.u32 %v225, 7
    %v227 = vsub.s32 0, %v226
    %v228 = vrot.slane %v215, %v227
    %v229 = vlaneseq
    %v230 = vshrl.u32 %v229, 7
    %v231 = vsub.s32 1, %v230
    %v232 = vrot.slane %v215, %v231
    %v233 = vlaneseq
    %v234 = vshrl.u32 %v233, 7
    %v235 = vsub.s32 2, %v234
    %v236 = vrot.slane %v215, %v235
    %v237 = vlaneseq
    %v238 = vshrl.u32 %v237, 7
    %v239 = vsub.s32 3, %v238
    %v240 = vrot.slane %v215, %v239
    %245 = vmatprep.subr.mxu0 %v88
    %246 = vmatpush1.msra.mxu0 %v87
    %247 = vmatprep.subr.mxu0 %v92
    %248 = vmatpush1.msra.mxu0 %v91
    %249 = vmatprep.subr.mxu0 %v96
    %250 = vmatpush1.msra.mxu0 %v95
    %251 = vmatprep.subr.mxu0 %v100
    %252 = vmatpush1.msra.mxu0 %v99
    %253 = vmatprep.subr.mxu0 %v104
    %254 = vmatpush1.msra.mxu0 %v103
    %255 = vmatprep.subr.mxu0 %v108
    %256 = vmatpush1.msra.mxu0 %v107
    %257 = vmatprep.subr.mxu0 %v112
    %258 = vmatpush1.msra.mxu0 %v111
    %259 = vmatprep.subr.mxu0 %v116
    %260 = vmatpush1.msra.mxu0 %v115
    %261 = vmatprep.subr.mxu0 %v120
    %262 = vmatpush1.msra.mxu0 %v119
    %263 = vmatprep.subr.mxu0 %v124
    %264 = vmatpush1.msra.mxu0 %v123
    %265 = vmatprep.subr.mxu0 %v128
    %266 = vmatpush1.msra.mxu0 %v127
    %267 = vmatprep.subr.mxu0 %v132
    %268 = vmatpush1.msra.mxu0 %v131
    %269 = vmatprep.subr.mxu0 %v136
    %270 = vmatpush1.msra.mxu0 %v135
    %271 = vmatprep.subr.mxu0 %v140
    %272 = vmatpush1.msra.mxu0 %v139
    %273 = vmatprep.subr.mxu0 %v144
    %274 = vmatpush1.msra.mxu0 %v143
    %275 = vmatprep.subr.mxu0 %v148
    %276 = vmatpush1.msra.mxu0 %v147
    %277 = vmatprep.subr.mxu0 0.0
    %278 = vmatpush1.msra.mxu0 0.0
    %279 = vmatprep.subr.mxu0 0.0
    %280 = vmatpush1.msra.mxu0 0.0
    %281 = vmatprep.subr.mxu0 0.0
    %282 = vmatpush1.msra.mxu0 0.0
    %283 = vmatprep.subr.mxu0 0.0
    %284 = vmatpush1.msra.mxu0 0.0
    %285 = vmatprep.subr.mxu0 0.0
    %286 = vmatpush1.msra.mxu0 0.0
    %287 = vmatprep.subr.mxu0 0.0
    %288 = vmatpush1.msra.mxu0 0.0
    %289 = vmatprep.subr.mxu0 0.0
    %290 = vmatpush1.msra.mxu0 0.0
    %291 = vmatprep.subr.mxu0 0.0
    %292 = vmatpush1.msra.mxu0 0.0
    %293 = vmatprep.subr.mxu0 0.0
    %294 = vmatpush1.msra.mxu0 0.0
    %295 = vmatprep.subr.mxu0 0.0
    %296 = vmatpush1.msra.mxu0 0.0
    %297 = vmatprep.subr.mxu0 0.0
    %298 = vmatpush1.msra.mxu0 0.0
    %299 = vmatprep.subr.mxu0 0.0
    %300 = vmatpush1.msra.mxu0 0.0
    %301 = vmatprep.subr.mxu0 0.0
    %302 = vmatpush1.msra.mxu0 0.0
    %303 = vmatprep.subr.mxu0 0.0
    %304 = vmatpush1.msra.mxu0 0.0
    %305 = vmatprep.subr.mxu0 0.0
    %306 = vmatpush1.msra.mxu0 0.0
    %307 = vmatprep.subr.mxu0 0.0
    %308 = vmatpush1.msra.mxu0 0.0
    %309 = vmatprep.mubr.f32.mxu0 0.0
    %310 = vmatmul.mubr.f32.gmra.mrb[0].mxu0 %v216
    %v311 = vpop.f32.mrb[0].mxu0
    %v312 = vadd.f32 %v228, %v311
    %v313 = vpop.f32.mrb[0].mxu0
    %v314 = vadd.f32 %v232, %v313
    %315 = vmatprep.mubr.f32.mxu0 0.0
    %316 = vmatmul.mubr.f32.gmra.mrb[0].mxu0 %v217
    %v317 = vpop.f32.mrb[0].mxu0
    %v318 = vadd.f32 %v228, %v317
    %v319 = vpop.f32.mrb[0].mxu0
    %v320 = vadd.f32 %v232, %v319
    %321 = vmatprep.mubr.f32.mxu0 0.0
    %322 = vmatmul.mubr.f32.gmra.mrb[0].mxu0 %v218
    %v323 = vpop.f32.mrb[0].mxu0
    %v324 = vadd.f32 %v228, %v323
    %v325 = vpop.f32.mrb[0].mxu0
    %v326 = vadd.f32 %v232, %v325
    %327 = vmatprep.mubr.f32.mxu0 0.0
    %328 = vmatmul.mubr.f32.gmra.mrb[0].mxu0 %v219
    %v329 = vpop.f32.mrb[0].mxu0
    %v330 = vadd.f32 %v228, %v329
    %v331 = vpop.f32.mrb[0].mxu0
    %v332 = vadd.f32 %v232, %v331
    %333 = vmatprep.mubr.f32.mxu0 0.0
    %334 = vmatmul.mubr.f32.gmra.mrb[0].mxu0 %v220
    %v335 = vpop.f32.mrb[0].mxu0
    %v336 = vadd.f32 %v228, %v335
    %v337 = vpop.f32.mrb[0].mxu0
    %v338 = vadd.f32 %v232, %v337
    %339 = vmatprep.mubr.f32.mxu0 0.0
    %340 = vmatmul.mubr.f32.gmra.mrb[0].mxu0 %v221
    %v341 = vpop.f32.mrb[0].mxu0
    %v342 = vadd.f32 %v228, %v341
    %v343 = vpop.f32.mrb[0].mxu0
    %v344 = vadd.f32 %v232, %v343
    %345 = vmatprep.mubr.f32.mxu0 0.0
    %346 = vmatmul.mubr.f32.gmra.mrb[0].mxu0 %v222
    %v347 = vpop.f32.mrb[0].mxu0
    %v348 = vadd.f32 %v228, %v347
    %v349 = vpop.f32.mrb[0].mxu0
    %v350 = vadd.f32 %v232, %v349
    %351 = vmatprep.mubr.f32.mxu0 0.0
    %352 = vmatmul.mubr.f32.gmra.mrb[0].mxu0 %v223
    %v353 = vpop.f32.mrb[0].mxu0
    %v354 = vadd.f32 %v228, %v353
    %v355 = vpop.f32.mrb[0].mxu0
    %v356 = vadd.f32 %v232, %v355
    %357 = vdwg.mxu0
    %358 = vmatprep.subr.mxu0 %v90
    %359 = vmatpush1.msra.mxu0 %v89
    %360 = vmatprep.subr.mxu0 %v94
    %361 = vmatpush1.msra.mxu0 %v93
    %362 = vmatprep.subr.mxu0 %v98
    %363 = vmatpush1.msra.mxu0 %v97
    %364 = vmatprep.subr.mxu0 %v102
    %365 = vmatpush1.msra.mxu0 %v101
    %366 = vmatprep.subr.mxu0 %v106
    %367 = vmatpush1.msra.mxu0 %v105
    %368 = vmatprep.subr.mxu0 %v110
    %369 = vmatpush1.msra.mxu0 %v109
    %370 = vmatprep.subr.mxu0 %v114
    %371 = vmatpush1.msra.mxu0 %v113
    %372 = vmatprep.subr.mxu0 %v118
    %373 = vmatpush1.msra.mxu0 %v117
    %374 = vmatprep.subr.mxu0 %v122
    %375 = vmatpush1.msra.mxu0 %v121
    %376 = vmatprep.subr.mxu0 %v126
    %377 = vmatpush1.msra.mxu0 %v125
    %378 = vmatprep.subr.mxu0 %v130
    %379 = vmatpush1.msra.mxu0 %v129
    %380 = vmatprep.subr.mxu0 %v134
    %381 = vmatpush1.msra.mxu0 %v133
    %382 = vmatprep.subr.mxu0 %v138
    %383 = vmatpush1.msra.mxu0 %v137
    %384 = vmatprep.subr.mxu0 %v142
    %385 = vmatpush1.msra.mxu0 %v141
    %386 = vmatprep.subr.mxu0 %v146
    %387 = vmatpush1.msra.mxu0 %v145
    %388 = vmatprep.subr.mxu0 %v150
    %389 = vmatpush1.msra.mxu0 %v149
    %390 = vmatprep.subr.mxu0 0.0
    %391 = vmatpush1.msra.mxu0 0.0
    %392 = vmatprep.subr.mxu0 0.0
    %393 = vmatpush1.msra.mxu0 0.0
    %394 = vmatprep.subr.mxu0 0.0
    %395 = vmatpush1.msra.mxu0 0.0
    %396 = vmatprep.subr.mxu0 0.0
    %397 = vmatpush1.msra.mxu0 0.0
    %398 = vmatprep.subr.mxu0 0.0
    %399 = vmatpush1.msra.mxu0 0.0
    %400 = vmatprep.subr.mxu0 0.0
    %401 = vmatpush1.msra.mxu0 0.0
    %402 = vmatprep.subr.mxu0 0.0
    %403 = vmatpush1.msra.mxu0 0.0
    %404 = vmatprep.subr.mxu0 0.0
    %405 = vmatpush1.msra.mxu0 0.0
    %406 = vmatprep.subr.mxu0 0.0
    %407 = vmatpush1.msra.mxu0 0.0
    %408 = vmatprep.subr.mxu0 0.0
    %409 = vmatpush1.msra.mxu0 0.0
    %410 = vmatprep.subr.mxu0 0.0
    %411 = vmatpush1.msra.mxu0 0.0
    %412 = vmatprep.subr.mxu0 0.0
    %413 = vmatpush1.msra.mxu0 0.0
    %414 = vmatprep.subr.mxu0 0.0
    %415 = vmatpush1.msra.mxu0 0.0
    %416 = vmatprep.subr.mxu0 0.0
    %417 = vmatpush1.msra.mxu0 0.0
    %418 = vmatprep.subr.mxu0 0.0
    %419 = vmatpush1.msra.mxu0 0.0
    %420 = vmatprep.subr.mxu0 0.0
    %421 = vmatpush1.msra.mxu0 0.0
    %422 = vmatprep.mubr.f32.mxu0 0.0
    %423 = vmatmul.mubr.f32.gmra.mrb[0].mxu0 %v216
    %v424 = vpop.f32.mrb[0].mxu0
    %v425 = vadd.f32 %v236, %v424
    %v426 = vpop.f32.mrb[0].mxu0
    %v427 = vadd.f32 %v240, %v426
    %428 = vmatprep.mubr.f32.mxu0 0.0
    %429 = vmatmul.mubr.f32.gmra.mrb[0].mxu0 %v217
    %v430 = vpop.f32.mrb[0].mxu0
    %v431 = vadd.f32 %v236, %v430
    %v432 = vpop.f32.mrb[0].mxu0
    %v433 = vadd.f32 %v240, %v432
    %434 = vmatprep.mubr.f32.mxu0 0.0
    %435 = vmatmul.mubr.f32.gmra.mrb[0].mxu0 %v218
    %v436 = vpop.f32.mrb[0].mxu0
    %v437 = vadd.f32 %v236, %v436
    %v438 = vpop.f32.mrb[0].mxu0
    %v439 = vadd.f32 %v240, %v438
    %440 = vmatprep.mubr.f32.mxu0 0.0
    %441 = vmatmul.mubr.f32.gmra.mrb[0].mxu0 %v219
    %v442 = vpop.f32.mrb[0].mxu0
    %v443 = vadd.f32 %v236, %v442
    %v444 = vpop.f32.mrb[0].mxu0
    %v445 = vadd.f32 %v240, %v444
    %446 = vmatprep.mubr.f32.mxu0 0.0
    %447 = vmatmul.mubr.f32.gmra.mrb[0].mxu0 %v220
    %v448 = vpop.f32.mrb[0].mxu0
    %v449 = vadd.f32 %v236, %v448
    %v450 = vpop.f32.mrb[0].mxu0
    %v451 = vadd.f32 %v240, %v450
    %452 = vmatprep.mubr.f32.mxu0 0.0
    %453 = vmatmul.mubr.f32.gmra.mrb[0].mxu0 %v221
    %v454 = vpop.f32.mrb[0].mxu0
    %v455 = vadd.f32 %v236, %v454
    %v456 = vpop.f32.mrb[0].mxu0
    %v457 = vadd.f32 %v240, %v456
    %458 = vmatprep.mubr.f32.mxu0 0.0
    %459 = vmatmul.mubr.f32.gmra.mrb[0].mxu0 %v222
    %v460 = vpop.f32.mrb[0].mxu0
    %v461 = vadd.f32 %v236, %v460
    %v462 = vpop.f32.mrb[0].mxu0
    %v463 = vadd.f32 %v240, %v462
    %464 = vmatprep.mubr.f32.mxu0 0.0
    %465 = vmatmul.mubr.f32.gmra.mrb[0].mxu0 %v223
    %v466 = vpop.f32.mrb[0].mxu0
    %v467 = vadd.f32 %v236, %v466
    %v468 = vpop.f32.mrb[0].mxu0
    %v469 = vadd.f32 %v240, %v468
    %470 = vdwg.mxu0
    %471 = vst [vmem:[#allocation2] sm:$0xff] %v312
    %472 = vst [vmem:[#allocation2 + $0x8] sm:$0xff] %v314
    %473 = vst [vmem:[#allocation2 + $0x10] sm:$0xff] %v425
    %474 = vst [vmem:[#allocation2 + $0x18] sm:$0xff] %v427
    %475 = vst [vmem:[#allocation2 + $0x20] sm:$0xff] %v318
    %476 = vst [vmem:[#allocation2 + $0x28] sm:$0xff] %v320
    %477 = vst [vmem:[#allocation2 + $0x30] sm:$0xff] %v431
    %478 = vst [vmem:[#allocation2 + $0x38] sm:$0xff] %v433
    %479 = vst [vmem:[#allocation2 + $0x40] sm:$0xff] %v324
    %480 = vst [vmem:[#allocation2 + $0x48] sm:$0xff] %v326
    %481 = vst [vmem:[#allocation2 + $0x50] sm:$0xff] %v437
    %482 = vst [vmem:[#allocation2 + $0x58] sm:$0xff] %v439
    %483 = vst [vmem:[#allocation2 + $0x60] sm:$0xff] %v330
    %484 = vst [vmem:[#allocation2 + $0x68] sm:$0xff] %v332
    %485 = vst [vmem:[#allocation2 + $0x70] sm:$0xff] %v443
    %486 = vst [vmem:[#allocation2 + $0x78] sm:$0xff] %v445
    %487 = vst [vmem:[#allocation2 + $0x80] sm:$0xff] %v336
    %488 = vst [vmem:[#allocation2 + $0x88] sm:$0xff] %v338
    %489 = vst [vmem:[#allocation2 + $0x90] sm:$0xff] %v449
    %490 = vst [vmem:[#allocation2 + $0x98] sm:$0xff] %v451
    %491 = vst [vmem:[#allocation2 + $0xa0] sm:$0xff] %v342
    %492 = vst [vmem:[#allocation2 + $0xa8] sm:$0xff] %v344
    %493 = vst [vmem:[#allocation2 + $0xb0] sm:$0xff] %v455
    %494 = vst [vmem:[#allocation2 + $0xb8] sm:$0xff] %v457
    %495 = vst [vmem:[#allocation2 + $0xc0] sm:$0xff] %v348
    %496 = vst [vmem:[#allocation2 + $0xc8] sm:$0xff] %v350
    %497 = vst [vmem:[#allocation2 + $0xd0] sm:$0xff] %v461
    %498 = vst [vmem:[#allocation2 + $0xd8] sm:$0xff] %v463
    %499 = vst [vmem:[#allocation2 + $0xe0] sm:$0xff] %v354
    %500 = vst [vmem:[#allocation2 + $0xe8] sm:$0xff] %v356
    %501 = vst [vmem:[#allocation2 + $0xf0] sm:$0xff] %v467
    %502 = vst [vmem:[#allocation2 + $0xf8] sm:$0xff] %v469
    %v503 = vld [vmem:[#allocation2] sm:$0xff]
    %v504 = vld [vmem:[#allocation2 + $0x8] sm:$0xff]
    %v505 = vld [vmem:[#allocation2 + $0x10] sm:$0xff]
    %v506 = vld [vmem:[#allocation2 + $0x18] sm:$0xff]
    %507 = vmatprep.subr.mxu0 %v152
    %508 = vmatpush1.msra.mxu0 %v151
    %509 = vmatprep.subr.mxu0 %v156
    %510 = vmatpush1.msra.mxu0 %v155
    %511 = vmatprep.subr.mxu0 %v160
    %512 = vmatpush1.msra.mxu0 %v159
    %513 = vmatprep.subr.mxu0 %v164
    %514 = vmatpush1.msra.mxu0 %v163
    %515 = vmatprep.subr.mxu0 %v168
    %516 = vmatpush1.msra.mxu0 %v167
    %517 = vmatprep.subr.mxu0 %v172
    %518 = vmatpush1.msra.mxu0 %v171
    %519 = vmatprep.subr.mxu0 %v176
    %520 = vmatpush1.msra.mxu0 %v175
    %521 = vmatprep.subr.mxu0 %v180
    %522 = vmatpush1.msra.mxu0 %v179
    %523 = vmatprep.subr.mxu0 %v184
    %524 = vmatpush1.msra.mxu0 %v183
    %525 = vmatprep.subr.mxu0 %v188
    %526 = vmatpush1.msra.mxu0 %v187
    %527 = vmatprep.subr.mxu0 %v192
    %528 = vmatpush1.msra.mxu0 %v191
    %529 = vmatprep.subr.mxu0 %v196
    %530 = vmatpush1.msra.mxu0 %v195
    %531 = vmatprep.subr.mxu0 %v200
    %532 = vmatpush1.msra.mxu0 %v199
    %533 = vmatprep.subr.mxu0 %v204
    %534 = vmatpush1.msra.mxu0 %v203
    %535 = vmatprep.subr.mxu0 %v208
    %536 = vmatpush1.msra.mxu0 %v207
    %537 = vmatprep.subr.mxu0 %v212
    %538 = vmatpush1.msra.mxu0 %v211
    %539 = vmatprep.subr.mxu0 0.0
    %540 = vmatpush1.msra.mxu0 0.0
    %541 = vmatprep.subr.mxu0 0.0
    %542 = vmatpush1.msra.mxu0 0.0
    %543 = vmatprep.subr.mxu0 0.0
    %544 = vmatpush1.msra.mxu0 0.0
    %545 = vmatprep.subr.mxu0 0.0
    %546 = vmatpush1.msra.mxu0 0.0
    %547 = vmatprep.subr.mxu0 0.0
    %548 = vmatpush1.msra.mxu0 0.0
    %549 = vmatprep.subr.mxu0 0.0
    %550 = vmatpush1.msra.mxu0 0.0
    %551 = vmatprep.subr.mxu0 0.0
    %552 = vmatpush1.msra.mxu0 0.0
    %553 = vmatprep.subr.mxu0 0.0
    %554 = vmatpush1.msra.mxu0 0.0
    %555 = vmatprep.subr.mxu0 0.0
    %556 = vmatpush1.msra.mxu0 0.0
    %557 = vmatprep.subr.mxu0 0.0
    %558 = vmatpush1.msra.mxu0 0.0
    %559 = vmatprep.subr.mxu0 0.0
    %560 = vmatpush1.msra.mxu0 0.0
    %561 = vmatprep.subr.mxu0 0.0
    %562 = vmatpush1.msra.mxu0 0.0
    %563 = vmatprep.subr.mxu0 0.0
    %564 = vmatpush1.msra.mxu0 0.0
    %565 = vmatprep.subr.mxu0 0.0
    %566 = vmatpush1.msra.mxu0 0.0
    %567 = vmatprep.subr.mxu0 0.0
    %568 = vmatpush1.msra.mxu0 0.0
    %569 = vmatprep.subr.mxu0 0.0
    %570 = vmatpush1.msra.mxu0 0.0
    %571 = vmatprep.mubr.f32.mxu0 0.0
    %572 = vmatmul.mubr.f32.gmra.mrb[0].mxu0 0.0
    %v573 = vpop.f32.mrb[0].mxu0
    %v574 = vadd.f32 0.0, %v573
    %v575 = vpop.f32.mrb[0].mxu0
    %v576 = vadd.f32 0.0, %v575
    %577 = vdwg.mxu0
    %578 = vmatprep.subr.mxu0 %v154
    %579 = vmatpush1.msra.mxu0 %v153
    %580 = vmatprep.subr.mxu0 %v158
    %581 = vmatpush1.msra.mxu0 %v157
    %582 = vmatprep.subr.mxu0 %v162
    %583 = vmatpush1.msra.mxu0 %v161
    %584 = vmatprep.subr.mxu0 %v166
    %585 = vmatpush1.msra.mxu0 %v165
    %586 = vmatprep.subr.mxu0 %v170
    %587 = vmatpush1.msra.mxu0 %v169
    %588 = vmatprep.subr.mxu0 %v174
    %589 = vmatpush1.msra.mxu0 %v173
    %590 = vmatprep.subr.mxu0 %v178
    %591 = vmatpush1.msra.mxu0 %v177
    %592 = vmatprep.subr.mxu0 %v182
    %593 = vmatpush1.msra.mxu0 %v181
    %594 = vmatprep.subr.mxu0 %v186
    %595 = vmatpush1.msra.mxu0 %v185
    %596 = vmatprep.subr.mxu0 %v190
    %597 = vmatpush1.msra.mxu0 %v189
    %598 = vmatprep.subr.mxu0 %v194
    %599 = vmatpush1.msra.mxu0 %v193
    %600 = vmatprep.subr.mxu0 %v198
    %601 = vmatpush1.msra.mxu0 %v197
    %602 = vmatprep.subr.mxu0 %v202
    %603 = vmatpush1.msra.mxu0 %v201
    %604 = vmatprep.subr.mxu0 %v206
    %605 = vmatpush1.msra.mxu0 %v205
    %606 = vmatprep.subr.mxu0 %v210
    %607 = vmatpush1.msra.mxu0 %v209
    %608 = vmatprep.subr.mxu0 %v214
    %609 = vmatpush1.msra.mxu0 %v213
    %610 = vmatprep.subr.mxu0 0.0
    %611 = vmatpush1.msra.mxu0 0.0
    %612 = vmatprep.subr.mxu0 0.0
    %613 = vmatpush1.msra.mxu0 0.0
    %614 = vmatprep.subr.mxu0 0.0
    %615 = vmatpush1.msra.mxu0 0.0
    %616 = vmatprep.subr.mxu0 0.0
    %617 = vmatpush1.msra.mxu0 0.0
    %618 = vmatprep.subr.mxu0 0.0
    %619 = vmatpush1.msra.mxu0 0.0
    %620 = vmatprep.subr.mxu0 0.0
    %621 = vmatpush1.msra.mxu0 0.0
    %622 = vmatprep.subr.mxu0 0.0
    %623 = vmatpush1.msra.mxu0 0.0
    %624 = vmatprep.subr.mxu0 0.0
    %625 = vmatpush1.msra.mxu0 0.0
    %626 = vmatprep.subr.mxu0 0.0
    %627 = vmatpush1.msra.mxu0 0.0
    %628 = vmatprep.subr.mxu0 0.0
    %629 = vmatpush1.msra.mxu0 0.0
    %630 = vmatprep.subr.mxu0 0.0
    %631 = vmatpush1.msra.mxu0 0.0
    %632 = vmatprep.subr.mxu0 0.0
    %633 = vmatpush1.msra.mxu0 0.0
    %634 = vmatprep.subr.mxu0 0.0
    %635 = vmatpush1.msra.mxu0 0.0
    %636 = vmatprep.subr.mxu0 0.0
    %637 = vmatpush1.msra.mxu0 0.0
    %638 = vmatprep.subr.mxu0 0.0
    %639 = vmatpush1.msra.mxu0 0.0
    %640 = vmatprep.subr.mxu0 0.0
    %641 = vmatpush1.msra.mxu0 0.0
    %642 = vmatprep.mubr.f32.mxu0 0.0
    %643 = vmatmul.mubr.f32.gmra.mrb[0].mxu0 0.0
    %v644 = vpop.f32.mrb[0].mxu0
    %v645 = vadd.f32 0.0, %v644
    %v646 = vpop.f32.mrb[0].mxu0
    %v647 = vadd.f32 0.0, %v646
    %648 = vdwg.mxu0
    %v649 = vadd.f32 %v503, %v574
    %v650 = vadd.f32 %v504, %v576
    %v651 = vadd.f32 %v505, %v645
    %v652 = vadd.f32 %v506, %v647
    %v653 = vxor.u32 %v649, 2147483648
    %v654 = vmul.f32 %v653, 1.442695
    %v655 = vpow.pop %v654
    %v656 = vadd.f32 %v655, 1.0
    %v657 = vrcp.pop %v656
    %v658 = vmul.f32 1.0, %v657
    %v659 = vxor.u32 %v650, 2147483648
    %v660 = vmul.f32 %v659, 1.442695
    %v661 = vpow.pop %v660
    %v662 = vadd.f32 %v661, 1.0
    %v663 = vrcp.pop %v662
    %v664 = vmul.f32 1.0, %v663
    %v665 = vtanh.pop %v651
    %v666 = vxor.u32 %v652, 2147483648
    %v667 = vmul.f32 %v666, 1.442695
    %v668 = vpow.pop %v667
    %v669 = vadd.f32 %v668, 1.0
    %v670 = vrcp.pop %v669
    %v671 = vmul.f32 1.0, %v670
    %v672 = vmul.f32 %v664, 0.0
    %v673 = vmul.f32 %v658, %v665
    %v674 = vadd.f32 %v672, %v673
    %v675 = vtanh.pop %v674
    %v676 = vmul.f32 %v671, %v675
    %677 = vst [vmem:[#allocation3] sm:$0xff] %v676
    %v678 = vld [vmem:[#allocation2 + $0x20] sm:$0xff]
    %v679 = vld [vmem:[#allocation2 + $0x28] sm:$0xff]
    %v680 = vld [vmem:[#allocation2 + $0x30] sm:$0xff]
    %v681 = vld [vmem:[#allocation2 + $0x38] sm:$0xff]
    %682 = vmatprep.subr.mxu0 %v152
    %683 = vmatpush1.msra.mxu0 %v151
    %684 = vmatprep.subr.mxu0 %v156
    %685 = vmatpush1.msra.mxu0 %v155
    %686 = vmatprep.subr.mxu0 %v160
    %687 = vmatpush1.msra.mxu0 %v159
    %688 = vmatprep.subr.mxu0 %v164
    %689 = vmatpush1.msra.mxu0 %v163
    %690 = vmatprep.subr.mxu0 %v168
    %691 = vmatpush1.msra.mxu0 %v167
    %692 = vmatprep.subr.mxu0 %v172
    %693 = vmatpush1.msra.mxu0 %v171
    %694 = vmatprep.subr.mxu0 %v176
    %695 = vmatpush1.msra.mxu0 %v175
    %696 = vmatprep.subr.mxu0 %v180
    %697 = vmatpush1.msra.mxu0 %v179
    %698 = vmatprep.subr.mxu0 %v184
    %699 = vmatpush1.msra.mxu0 %v183
    %700 = vmatprep.subr.mxu0 %v188
    %701 = vmatpush1.msra.mxu0 %v187
    %702 = vmatprep.subr.mxu0 %v192
    %703 = vmatpush1.msra.mxu0 %v191
    %704 = vmatprep.subr.mxu0 %v196
    %705 = vmatpush1.msra.mxu0 %v195
    %706 = vmatprep.subr.mxu0 %v200
    %707 = vmatpush1.msra.mxu0 %v199
    %708 = vmatprep.subr.mxu0 %v204
    %709 = vmatpush1.msra.mxu0 %v203
    %710 = vmatprep.subr.mxu0 %v208
    %711 = vmatpush1.msra.mxu0 %v207
    %712 = vmatprep.subr.mxu0 %v212
    %713 = vmatpush1.msra.mxu0 %v211
    %714 = vmatprep.subr.mxu0 0.0
    %715 = vmatpush1.msra.mxu0 0.0
    %716 = vmatprep.subr.mxu0 0.0
    %717 = vmatpush1.msra.mxu0 0.0
    %718 = vmatprep.subr.mxu0 0.0
    %719 = vmatpush1.msra.mxu0 0.0
    %720 = vmatprep.subr.mxu0 0.0
    %721 = vmatpush1.msra.mxu0 0.0
    %722 = vmatprep.subr.mxu0 0.0
    %723 = vmatpush1.msra.mxu0 0.0
    %724 = vmatprep.subr.mxu0 0.0
    %725 = vmatpush1.msra.mxu0 0.0
    %726 = vmatprep.subr.mxu0 0.0
    %727 = vmatpush1.msra.mxu0 0.0
    %728 = vmatprep.subr.mxu0 0.0
    %729 = vmatpush1.msra.mxu0 0.0
    %730 = vmatprep.subr.mxu0 0.0
    %731 = vmatpush1.msra.mxu0 0.0
    %732 = vmatprep.subr.mxu0 0.0
    %733 = vmatpush1.msra.mxu0 0.0
    %734 = vmatprep.subr.mxu0 0.0
    %735 = vmatpush1.msra.mxu0 0.0
    %736 = vmatprep.subr.mxu0 0.0
    %737 = vmatpush1.msra.mxu0 0.0
    %738 = vmatprep.subr.mxu0 0.0
    %739 = vmatpush1.msra.mxu0 0.0
    %740 = vmatprep.subr.mxu0 0.0
    %741 = vmatpush1.msra.mxu0 0.0
    %742 = vmatprep.subr.mxu0 0.0
    %743 = vmatpush1.msra.mxu0 0.0
    %744 = vmatprep.subr.mxu0 0.0
    %745 = vmatpush1.msra.mxu0 0.0
    %746 = vmatprep.mubr.f32.mxu0 0.0
    %747 = vmatmul.mubr.f32.gmra.mrb[0].mxu0 %v676
    %v748 = vpop.f32.mrb[0].mxu0
    %v749 = vadd.f32 0.0, %v748
    %v750 = vpop.f32.mrb[0].mxu0
    %v751 = vadd.f32 0.0, %v750
    %752 = vdwg.mxu0
    %753 = vmatprep.subr.mxu0 %v154
    %754 = vmatpush1.msra.mxu0 %v153
    %755 = vmatprep.subr.mxu0 %v158
    %756 = vmatpush1.msra.mxu0 %v157
    %757 = vmatprep.subr.mxu0 %v162
    %758 = vmatpush1.msra.mxu0 %v161
    %759 = vmatprep.subr.mxu0 %v166
    %760 = vmatpush1.msra.mxu0 %v165
    %761 = vmatprep.subr.mxu0 %v170
    %762 = vmatpush1.msra.mxu0 %v169
    %763 = vmatprep.subr.mxu0 %v174
    %764 = vmatpush1.msra.mxu0 %v173
    %765 = vmatprep.subr.mxu0 %v178
    %766 = vmatpush1.msra.mxu0 %v177
    %767 = vmatprep.subr.mxu0 %v182
    %768 = vmatpush1.msra.mxu0 %v181
    %769 = vmatprep.subr.mxu0 %v186
    %770 = vmatpush1.msra.mxu0 %v185
    %771 = vmatprep.subr.mxu0 %v190
    %772 = vmatpush1.msra.mxu0 %v189
    %773 = vmatprep.subr.mxu0 %v194
    %774 = vmatpush1.msra.mxu0 %v193
    %775 = vmatprep.subr.mxu0 %v198
    %776 = vmatpush1.msra.mxu0 %v197
    %777 = vmatprep.subr.mxu0 %v202
    %778 = vmatpush1.msra.mxu0 %v201
    %779 = vmatprep.subr.mxu0 %v206
    %780 = vmatpush1.msra.mxu0 %v205
    %781 = vmatprep.subr.mxu0 %v210
    %782 = vmatpush1.msra.mxu0 %v209
    %783 = vmatprep.subr.mxu0 %v214
    %784 = vmatpush1.msra.mxu0 %v213
    %785 = vmatprep.subr.mxu0 0.0
    %786 = vmatpush1.msra.mxu0 0.0
    %787 = vmatprep.subr.mxu0 0.0
    %788 = vmatpush1.msra.mxu0 0.0
    %789 = vmatprep.subr.mxu0 0.0
    %790 = vmatpush1.msra.mxu0 0.0
    %791 = vmatprep.subr.mxu0 0.0
    %792 = vmatpush1.msra.mxu0 0.0
    %793 = vmatprep.subr.mxu0 0.0
    %794 = vmatpush1.msra.mxu0 0.0
    %795 = vmatprep.subr.mxu0 0.0
    %796 = vmatpush1.msra.mxu0 0.0
    %797 = vmatprep.subr.mxu0 0.0
    %798 = vmatpush1.msra.mxu0 0.0
    %799 = vmatprep.subr.mxu0 0.0
    %800 = vmatpush1.msra.mxu0 0.0
    %801 = vmatprep.subr.mxu0 0.0
    %802 = vmatpush1.msra.mxu0 0.0
    %803 = vmatprep.subr.mxu0 0.0
    %804 = vmatpush1.msra.mxu0 0.0
    %805 = vmatprep.subr.mxu0 0.0
    %806 = vmatpush1.msra.mxu0 0.0
    %807 = vmatprep.subr.mxu0 0.0
    %808 = vmatpush1.msra.mxu0 0.0
    %809 = vmatprep.subr.mxu0 0.0
    %810 = vmatpush1.msra.mxu0 0.0
    %811 = vmatprep.subr.mxu0 0.0
    %812 = vmatpush1.msra.mxu0 0.0
    %813 = vmatprep.subr.mxu0 0.0
    %814 = vmatpush1.msra.mxu0 0.0
    %815 = vmatprep.subr.mxu0 0.0
    %816 = vmatpush1.msra.mxu0 0.0
    %817 = vmatprep.mubr.f32.mxu0 0.0
    %818 = vmatmul.mubr.f32.gmra.mrb[0].mxu0 %v676
    %v819 = vpop.f32.mrb[0].mxu0
    %v820 = vadd.f32 0.0, %v819
    %v821 = vpop.f32.mrb[0].mxu0
    %v822 = vadd.f32 0.0, %v821
    %823 = vdwg.mxu0
    %v824 = vadd.f32 %v678, %v749
    %v825 = vadd.f32 %v679, %v751
    %v826 = vadd.f32 %v680, %v820
    %v827 = vadd.f32 %v681, %v822
    %v828 = vxor.u32 %v824, 2147483648
    %v829 = vmul.f32 %v828, 1.442695
    %v830 = vpow.pop %v829
    %v831 = vadd.f32 %v830, 1.0
    %v832 = vrcp.pop %v831
    %v833 = vmul.f32 1.0, %v832
    %v834 = vxor.u32 %v825, 2147483648
    %v835 = vmul.f32 %v834, 1.442695
    %v836 = vpow.pop %v835
    %v837 = vadd.f32 %v836, 1.0
    %v838 = vrcp.pop %v837
    %v839 = vmul.f32 1.0, %v838
    %v840 = vtanh.pop %v826
    %v841 = vxor.u32 %v827, 2147483648
    %v842 = vmul.f32 %v841, 1.442695
    %v843 = vpow.pop %v842
    %v844 = vadd.f32 %v843, 1.0
    %v845 = vrcp.pop %v844
    %v846 = vmul.f32 1.0, %v845
    %v847 = vmul.f32 %v839, %v674
    %v848 = vmul.f32 %v833, %v840
    %v849 = vadd.f32 %v847, %v848
    %v850 = vtanh.pop %v849
    %v851 = vmul.f32 %v846, %v850
    %852 = vst [vmem:[#allocation3 + $0x8] sm:$0xff] %v851
    %v853 = vld [vmem:[#allocation2 + $0x40] sm:$0xff]
    %v854 = vld [vmem:[#allocation2 + $0x48] sm:$0xff]
    %v855 = vld [vmem:[#allocation2 + $0x50] sm:$0xff]
    %v856 = vld [vmem:[#allocation2 + $0x58] sm:$0xff]
    %857 = vmatprep.subr.mxu0 %v152
    %858 = vmatpush1.msra.mxu0 %v151
    %859 = vmatprep.subr.mxu0 %v156
    %860 = vmatpush1.msra.mxu0 %v155
    %861 = vmatprep.subr.mxu0 %v160
    %862 = vmatpush1.msra.mxu0 %v159
    %863 = vmatprep.subr.mxu0 %v164
    %864 = vmatpush1.msra.mxu0 %v163
    %865 = vmatprep.subr.mxu0 %v168
    %866 = vmatpush1.msra.mxu0 %v167
    %867 = vmatprep.subr.mxu0 %v172
    %868 = vmatpush1.msra.mxu0 %v171
    %869 = vmatprep.subr.mxu0 %v176
    %870 = vmatpush1.msra.mxu0 %v175
    %871 = vmatprep.subr.mxu0 %v180
    %872 = vmatpush1.msra.mxu0 %v179
    %873 = vmatprep.subr.mxu0 %v184
    %874 = vmatpush1.msra.mxu0 %v183
    %875 = vmatprep.subr.mxu0 %v188
    %876 = vmatpush1.msra.mxu0 %v187
    %877 = vmatprep.subr.mxu0 %v192
    %878 = vmatpush1.msra.mxu0 %v191
    %879 = vmatprep.subr.mxu0 %v196
    %880 = vmatpush1.msra.mxu0 %v195
    %881 = vmatprep.subr.mxu0 %v200
    %882 = vmatpush1.msra.mxu0 %v199
    %883 = vmatprep.subr.mxu0 %v204
    %884 = vmatpush1.msra.mxu0 %v203
    %885 = vmatprep.subr.mxu0 %v208
    %886 = vmatpush1.msra.mxu0 %v207
    %887 = vmatprep.subr.mxu0 %v212
    %888 = vmatpush1.msra.mxu0 %v211
    %889 = vmatprep.subr.mxu0 0.0
    %890 = vmatpush1.msra.mxu0 0.0
    %891 = vmatprep.subr.mxu0 0.0
    %892 = vmatpush1.msra.mxu0 0.0
    %893 = vmatprep.subr.mxu0 0.0
    %894 = vmatpush1.msra.mxu0 0.0
    %895 = vmatprep.subr.mxu0 0.0
    %896 = vmatpush1.msra.mxu0 0.0
    %897 = vmatprep.subr.mxu0 0.0
    %898 = vmatpush1.msra.mxu0 0.0
    %899 = vmatprep.subr.mxu0 0.0
    %900 = vmatpush1.msra.mxu0 0.0
    %901 = vmatprep.subr.mxu0 0.0
    %902 = vmatpush1.msra.mxu0 0.0
    %903 = vmatprep.subr.mxu0 0.0
    %904 = vmatpush1.msra.mxu0 0.0
    %905 = vmatprep.subr.mxu0 0.0
    %906 = vmatpush1.msra.mxu0 0.0
    %907 = vmatprep.subr.mxu0 0.0
    %908 = vmatpush1.msra.mxu0 0.0
    %909 = vmatprep.subr.mxu0 0.0
    %910 = vmatpush1.msra.mxu0 0.0
    %911 = vmatprep.subr.mxu0 0.0
    %912 = vmatpush1.msra.mxu0 0.0
    %913 = vmatprep.subr.mxu0 0.0
    %914 = vmatpush1.msra.mxu0 0.0
    %915 = vmatprep.subr.mxu0 0.0
    %916 = vmatpush1.msra.mxu0 0.0
    %917 = vmatprep.subr.mxu0 0.0
    %918 = vmatpush1.msra.mxu0 0.0
    %919 = vmatprep.subr.mxu0 0.0
    %920 = vmatpush1.msra.mxu0 0.0
    %921 = vmatprep.mubr.f32.mxu0 0.0
    %922 = vmatmul.mubr.f32.gmra.mrb[0].mxu0 %v851
    %v923 = vpop.f32.mrb[0].mxu0
    %v924 = vadd.f32 0.0, %v923
    %v925 = vpop.f32.mrb[0].mxu0
    %v926 = vadd.f32 0.0, %v925
    %927 = vdwg.mxu0
    %928 = vmatprep.subr.mxu0 %v154
    %929 = vmatpush1.msra.mxu0 %v153
    %930 = vmatprep.subr.mxu0 %v158
    %931 = vmatpush1.msra.mxu0 %v157
    %932 = vmatprep.subr.mxu0 %v162
    %933 = vmatpush1.msra.mxu0 %v161
    %934 = vmatprep.subr.mxu0 %v166
    %935 = vmatpush1.msra.mxu0 %v165
    %936 = vmatprep.subr.mxu0 %v170
    %937 = vmatpush1.msra.mxu0 %v169
    %938 = vmatprep.subr.mxu0 %v174
    %939 = vmatpush1.msra.mxu0 %v173
    %940 = vmatprep.subr.mxu0 %v178
    %941 = vmatpush1.msra.mxu0 %v177
    %942 = vmatprep.subr.mxu0 %v182
    %943 = vmatpush1.msra.mxu0 %v181
    %944 = vmatprep.subr.mxu0 %v186
    %945 = vmatpush1.msra.mxu0 %v185
    %946 = vmatprep.subr.mxu0 %v190
    %947 = vmatpush1.msra.mxu0 %v189
    %948 = vmatprep.subr.mxu0 %v194
    %949 = vmatpush1.msra.mxu0 %v193
    %950 = vmatprep.subr.mxu0 %v198
    %951 = vmatpush1.msra.mxu0 %v197
    %952 = vmatprep.subr.mxu0 %v202
    %953 = vmatpush1.msra.mxu0 %v201
    %954 = vmatprep.subr.mxu0 %v206
    %955 = vmatpush1.msra.mxu0 %v205
    %956 = vmatprep.subr.mxu0 %v210
    %957 = vmatpush1.msra.mxu0 %v209
    %958 = vmatprep.subr.mxu0 %v214
    %959 = vmatpush1.msra.mxu0 %v213
    %960 = vmatprep.subr.mxu0 0.0
    %961 = vmatpush1.msra.mxu0 0.0
    %962 = vmatprep.subr.mxu0 0.0
    %963 = vmatpush1.msra.mxu0 0.0
    %964 = vmatprep.subr.mxu0 0.0
    %965 = vmatpush1.msra.mxu0 0.0
    %966 = vmatprep.subr.mxu0 0.0
    %967 = vmatpush1.msra.mxu0 0.0
    %968 = vmatprep.subr.mxu0 0.0
    %969 = vmatpush1.msra.mxu0 0.0
    %970 = vmatprep.subr.mxu0 0.0
    %971 = vmatpush1.msra.mxu0 0.0
    %972 = vmatprep.subr.mxu0 0.0
    %973 = vmatpush1.msra.mxu0 0.0
    %974 = vmatprep.subr.mxu0 0.0
    %975 = vmatpush1.msra.mxu0 0.0
    %976 = vmatprep.subr.mxu0 0.0
    %977 = vmatpush1.msra.mxu0 0.0
    %978 = vmatprep.subr.mxu0 0.0
    %979 = vmatpush1.msra.mxu0 0.0
    %980 = vmatprep.subr.mxu0 0.0
    %981 = vmatpush1.msra.mxu0 0.0
    %982 = vmatprep.subr.mxu0 0.0
    %983 = vmatpush1.msra.mxu0 0.0
    %984 = vmatprep.subr.mxu0 0.0
    %985 = vmatpush1.msra.mxu0 0.0
    %986 = vmatprep.subr.mxu0 0.0
    %987 = vmatpush1.msra.mxu0 0.0
    %988 = vmatprep.subr.mxu0 0.0
    %989 = vmatpush1.msra.mxu0 0.0
    %990 = vmatprep.subr.mxu0 0.0
    %991 = vmatpush1.msra.mxu0 0.0
    %992 = vmatprep.mubr.f32.mxu0 0.0
    %993 = vmatmul.mubr.f32.gmra.mrb[0].mxu0 %v851
    %v994 = vpop.f32.mrb[0].mxu0
    %v995 = vadd.f32 0.0, %v994
    %v996 = vpop.f32.mrb[0].mxu0
    %v997 = vadd.f32 0.0, %v996
    %998 = vdwg.mxu0
    %v999 = vadd.f32 %v853, %v924
    %v1000 = vadd.f32 %v854, %v926
    %v1001 = vadd.f32 %v855, %v995
    %v1002 = vadd.f32 %v856, %v997
    %v1003 = vxor.u32 %v999, 2147483648
    %v1004 = vmul.f32 %v1003, 1.442695
    %v1005 = vpow.pop %v1004
    %v1006 = vadd.f32 %v1005, 1.0
    %v1007 = vrcp.pop %v1006
    %v1008 = vmul.f32 1.0, %v1007
    %v1009 = vxor.u32 %v1000, 2147483648
    %v1010 = vmul.f32 %v1009, 1.442695
    %v1011 = vpow.pop %v1010
    %v1012 = vadd.f32 %v1011, 1.0
    %v1013 = vrcp.pop %v1012
    %v1014 = vmul.f32 1.0, %v1013
    %v1015 = vtanh.pop %v1001
    %v1016 = vxor.u32 %v1002, 2147483648
    %v1017 = vmul.f32 %v1016, 1.442695
    %v1018 = vpow.pop %v1017
    %v1019 = vadd.f32 %v1018, 1.0
    %v1020 = vrcp.pop %v1019
    %v1021 = vmul.f32 1.0, %v1020
    %v1022 = vmul.f32 %v1014, %v849
    %v1023 = vmul.f32 %v1008, %v1015
    %v1024 = vadd.f32 %v1022, %v1023
    %v1025 = vtanh.pop %v1024
    %v1026 = vmul.f32 %v1021, %v1025
    %1027 = vst [vmem:[#allocation3 + $0x10] sm:$0xff] %v1026
    %v1028 = vld [vmem:[#allocation2 + $0x60] sm:$0xff]
    %v1029 = vld [vmem:[#allocation2 + $0x68] sm:$0xff]
    %v1030 = vld [vmem:[#allocation2 + $0x70] sm:$0xff]
    %v1031 = vld [vmem:[#allocation2 + $0x78] sm:$0xff]
    %1032 = vmatprep.subr.mxu0 %v152
    %1033 = vmatpush1.msra.mxu0 %v151
    %1034 = vmatprep.subr.mxu0 %v156
    %1035 = vmatpush1.msra.mxu0 %v155
    %1036 = vmatprep.subr.mxu0 %v160
    %1037 = vmatpush1.msra.mxu0 %v159
    %1038 = vmatprep.subr.mxu0 %v164
    %1039 = vmatpush1.msra.mxu0 %v163
    %1040 = vmatprep.subr.mxu0 %v168
    %1041 = vmatpush1.msra.mxu0 %v167
    %1042 = vmatprep.subr.mxu0 %v172
    %1043 = vmatpush1.msra.mxu0 %v171
    %1044 = vmatprep.subr.mxu0 %v176
    %1045 = vmatpush1.msra.mxu0 %v175
    %1046 = vmatprep.subr.mxu0 %v180
    %1047 = vmatpush1.msra.mxu0 %v179
    %1048 = vmatprep.subr.mxu0 %v184
    %1049 = vmatpush1.msra.mxu0 %v183
    %1050 = vmatprep.subr.mxu0 %v188
    %1051 = vmatpush1.msra.mxu0 %v187
    %1052 = vmatprep.subr.mxu0 %v192
    %1053 = vmatpush1.msra.mxu0 %v191
    %1054 = vmatprep.subr.mxu0 %v196
    %1055 = vmatpush1.msra.mxu0 %v195
    %1056 = vmatprep.subr.mxu0 %v200
    %1057 = vmatpush1.msra.mxu0 %v199
    %1058 = vmatprep.subr.mxu0 %v204
    %1059 = vmatpush1.msra.mxu0 %v203
    %1060 = vmatprep.subr.mxu0 %v208
    %1061 = vmatpush1.msra.mxu0 %v207
    %1062 = vmatprep.subr.mxu0 %v212
    %1063 = vmatpush1.msra.mxu0 %v211
    %1064 = vmatprep.subr.mxu0 0.0
    %1065 = vmatpush1.msra.mxu0 0.0
    %1066 = vmatprep.subr.mxu0 0.0
    %1067 = vmatpush1.msra.mxu0 0.0
    %1068 = vmatprep.subr.mxu0 0.0
    %1069 = vmatpush1.msra.mxu0 0.0
    %1070 = vmatprep.subr.mxu0 0.0
    %1071 = vmatpush1.msra.mxu0 0.0
    %1072 = vmatprep.subr.mxu0 0.0
    %1073 = vmatpush1.msra.mxu0 0.0
    %1074 = vmatprep.subr.mxu0 0.0
    %1075 = vmatpush1.msra.mxu0 0.0
    %1076 = vmatprep.subr.mxu0 0.0
    %1077 = vmatpush1.msra.mxu0 0.0
    %1078 = vmatprep.subr.mxu0 0.0
    %1079 = vmatpush1.msra.mxu0 0.0
    %1080 = vmatprep.subr.mxu0 0.0
    %1081 = vmatpush1.msra.mxu0 0.0
    %1082 = vmatprep.subr.mxu0 0.0
    %1083 = vmatpush1.msra.mxu0 0.0
    %1084 = vmatprep.subr.mxu0 0.0
    %1085 = vmatpush1.msra.mxu0 0.0
    %1086 = vmatprep.subr.mxu0 0.0
    %1087 = vmatpush1.msra.mxu0 0.0
    %1088 = vmatprep.subr.mxu0 0.0
    %1089 = vmatpush1.msra.mxu0 0.0
    %1090 = vmatprep.subr.mxu0 0.0
    %1091 = vmatpush1.msra.mxu0 0.0
    %1092 = vmatprep.subr.mxu0 0.0
    %1093 = vmatpush1.msra.mxu0 0.0
    %1094 = vmatprep.subr.mxu0 0.0
    %1095 = vmatpush1.msra.mxu0 0.0
    %1096 = vmatprep.mubr.f32.mxu0 0.0
    %1097 = vmatmul.mubr.f32.gmra.mrb[0].mxu0 %v1026
    %v1098 = vpop.f32.mrb[0].mxu0
    %v1099 = vadd.f32 0.0, %v1098
    %v1100 = vpop.f32.mrb[0].mxu0
    %v1101 = vadd.f32 0.0, %v1100
    %1102 = vdwg.mxu0
    %1103 = vmatprep.subr.mxu0 %v154
    %1104 = vmatpush1.msra.mxu0 %v153
    %1105 = vmatprep.subr.mxu0 %v158
    %1106 = vmatpush1.msra.mxu0 %v157
    %1107 = vmatprep.subr.mxu0 %v162
    %1108 = vmatpush1.msra.mxu0 %v161
    %1109 = vmatprep.subr.mxu0 %v166
    %1110 = vmatpush1.msra.mxu0 %v165
    %1111 = vmatprep.subr.mxu0 %v170
    %1112 = vmatpush1.msra.mxu0 %v169
    %1113 = vmatprep.subr.mxu0 %v174
    %1114 = vmatpush1.msra.mxu0 %v173
    %1115 = vmatprep.subr.mxu0 %v178
    %1116 = vmatpush1.msra.mxu0 %v177
    %1117 = vmatprep.subr.mxu0 %v182
    %1118 = vmatpush1.msra.mxu0 %v181
    %1119 = vmatprep.subr.mxu0 %v186
    %1120 = vmatpush1.msra.mxu0 %v185
    %1121 = vmatprep.subr.mxu0 %v190
    %1122 = vmatpush1.msra.mxu0 %v189
    %1123 = vmatprep.subr.mxu0 %v194
    %1124 = vmatpush1.msra.mxu0 %v193
    %1125 = vmatprep.subr.mxu0 %v198
    %1126 = vmatpush1.msra.mxu0 %v197
    %1127 = vmatprep.subr.mxu0 %v202
    %1128 = vmatpush1.msra.mxu0 %v201
    %1129 = vmatprep.subr.mxu0 %v206
    %1130 = vmatpush1.msra.mxu0 %v205
    %1131 = vmatprep.subr.mxu0 %v210
    %1132 = vmatpush1.msra.mxu0 %v209
    %1133 = vmatprep.subr.mxu0 %v214
    %1134 = vmatpush1.msra.mxu0 %v213
    %1135 = vmatprep.subr.mxu0 0.0
    %1136 = vmatpush1.msra.mxu0 0.0
    %1137 = vmatprep.subr.mxu0 0.0
    %1138 = vmatpush1.msra.mxu0 0.0
    %1139 = vmatprep.subr.mxu0 0.0
    %1140 = vmatpush1.msra.mxu0 0.0
    %1141 = vmatprep.subr.mxu0 0.0
    %1142 = vmatpush1.msra.mxu0 0.0
    %1143 = vmatprep.subr.mxu0 0.0
    %1144 = vmatpush1.msra.mxu0 0.0
    %1145 = vmatprep.subr.mxu0 0.0
    %1146 = vmatpush1.msra.mxu0 0.0
    %1147 = vmatprep.subr.mxu0 0.0
    %1148 = vmatpush1.msra.mxu0 0.0
    %1149 = vmatprep.subr.mxu0 0.0
    %1150 = vmatpush1.msra.mxu0 0.0
    %1151 = vmatprep.subr.mxu0 0.0
    %1152 = vmatpush1.msra.mxu0 0.0
    %1153 = vmatprep.subr.mxu0 0.0
    %1154 = vmatpush1.msra.mxu0 0.0
    %1155 = vmatprep.subr.mxu0 0.0
    %1156 = vmatpush1.msra.mxu0 0.0
    %1157 = vmatprep.subr.mxu0 0.0
    %1158 = vmatpush1.msra.mxu0 0.0
    %1159 = vmatprep.subr.mxu0 0.0
    %1160 = vmatpush1.msra.mxu0 0.0
    %1161 = vmatprep.subr.mxu0 0.0
    %1162 = vmatpush1.msra.mxu0 0.0
    %1163 = vmatprep.subr.mxu0 0.0
    %1164 = vmatpush1.msra.mxu0 0.0
    %1165 = vmatprep.subr.mxu0 0.0
    %1166 = vmatpush1.msra.mxu0 0.0
    %1167 = vmatprep.mubr.f32.mxu0 0.0
    %1168 = vmatmul.mubr.f32.gmra.mrb[0].mxu0 %v1026
    %v1169 = vpop.f32.mrb[0].mxu0
    %v1170 = vadd.f32 0.0, %v1169
    %v1171 = vpop.f32.mrb[0].mxu0
    %v1172 = vadd.f32 0.0, %v1171
    %1173 = vdwg.mxu0
    %v1174 = vadd.f32 %v1028, %v1099
    %v1175 = vadd.f32 %v1029, %v1101
    %v1176 = vadd.f32 %v1030, %v1170
    %v1177 = vadd.f32 %v1031, %v1172
    %v1178 = vxor.u32 %v1174, 2147483648
    %v1179 = vmul.f32 %v1178, 1.442695
    %v1180 = vpow.pop %v1179
    %v1181 = vadd.f32 %v1180, 1.0
    %v1182 = vrcp.pop %v1181
    %v1183 = vmul.f32 1.0, %v1182
    %v1184 = vxor.u32 %v1175, 2147483648
    %v1185 = vmul.f32 %v1184, 1.442695
    %v1186 = vpow.pop %v1185
    %v1187 = vadd.f32 %v1186, 1.0
    %v1188 = vrcp.pop %v1187
    %v1189 = vmul.f32 1.0, %v1188
    %v1190 = vtanh.pop %v1176
    %v1191 = vxor.u32 %v1177, 2147483648
    %v1192 = vmul.f32 %v1191, 1.442695
    %v1193 = vpow.pop %v1192
    %v1194 = vadd.f32 %v1193, 1.0
    %v1195 = vrcp.pop %v1194
    %v1196 = vmul.f32 1.0, %v1195
    %v1197 = vmul.f32 %v1189, %v1024
    %v1198 = vmul.f32 %v1183, %v1190
    %v1199 = vadd.f32 %v1197, %v1198
    %v1200 = vtanh.pop %v1199
    %v1201 = vmul.f32 %v1196, %v1200
    %1202 = vst [vmem:[#allocation3 + $0x18] sm:$0xff] %v1201
    %v1203 = vld [vmem:[#allocation2 + $0x80] sm:$0xff]
    %v1204 = vld [vmem:[#allocation2 + $0x88] sm:$0xff]
    %v1205 = vld [vmem:[#allocation2 + $0x90] sm:$0xff]
    %v1206 = vld [vmem:[#allocation2 + $0x98] sm:$0xff]
    %1207 = vmatprep.subr.mxu0 %v152
    %1208 = vmatpush1.msra.mxu0 %v151
    %1209 = vmatprep.subr.mxu0 %v156
    %1210 = vmatpush1.msra.mxu0 %v155
    %1211 = vmatprep.subr.mxu0 %v160
    %1212 = vmatpush1.msra.mxu0 %v159
    %1213 = vmatprep.subr.mxu0 %v164
    %1214 = vmatpush1.msra.mxu0 %v163
    %1215 = vmatprep.subr.mxu0 %v168
    %1216 = vmatpush1.msra.mxu0 %v167
    %1217 = vmatprep.subr.mxu0 %v172
    %1218 = vmatpush1.msra.mxu0 %v171
    %1219 = vmatprep.subr.mxu0 %v176
    %1220 = vmatpush1.msra.mxu0 %v175
    %1221 = vmatprep.subr.mxu0 %v180
    %1222 = vmatpush1.msra.mxu0 %v179
    %1223 = vmatprep.subr.mxu0 %v184
    %1224 = vmatpush1.msra.mxu0 %v183
    %1225 = vmatprep.subr.mxu0 %v188
    %1226 = vmatpush1.msra.mxu0 %v187
    %1227 = vmatprep.subr.mxu0 %v192
    %1228 = vmatpush1.msra.mxu0 %v191
    %1229 = vmatprep.subr.mxu0 %v196
    %1230 = vmatpush1.msra.mxu0 %v195
    %1231 = vmatprep.subr.mxu0 %v200
    %1232 = vmatpush1.msra.mxu0 %v199
    %1233 = vmatprep.subr.mxu0 %v204
    %1234 = vmatpush1.msra.mxu0 %v203
    %1235 = vmatprep.subr.mxu0 %v208
    %1236 = vmatpush1.msra.mxu0 %v207
    %1237 = vmatprep.subr.mxu0 %v212
    %1238 = vmatpush1.msra.mxu0 %v211
    %1239 = vmatprep.subr.mxu0 0.0
    %1240 = vmatpush1.msra.mxu0 0.0
    %1241 = vmatprep.subr.mxu0 0.0
    %1242 = vmatpush1.msra.mxu0 0.0
    %1243 = vmatprep.subr.mxu0 0.0
    %1244 = vmatpush1.msra.mxu0 0.0
    %1245 = vmatprep.subr.mxu0 0.0
    %1246 = vmatpush1.msra.mxu0 0.0
    %1247 = vmatprep.subr.mxu0 0.0
    %1248 = vmatpush1.msra.mxu0 0.0
    %1249 = vmatprep.subr.mxu0 0.0
    %1250 = vmatpush1.msra.mxu0 0.0
    %1251 = vmatprep.subr.mxu0 0.0
    %1252 = vmatpush1.msra.mxu0 0.0
    %1253 = vmatprep.subr.mxu0 0.0
    %1254 = vmatpush1.msra.mxu0 0.0
    %1255 = vmatprep.subr.mxu0 0.0
    %1256 = vmatpush1.msra.mxu0 0.0
    %1257 = vmatprep.subr.mxu0 0.0
    %1258 = vmatpush1.msra.mxu0 0.0
    %1259 = vmatprep.subr.mxu0 0.0
    %1260 = vmatpush1.msra.mxu0 0.0
    %1261 = vmatprep.subr.mxu0 0.0
    %1262 = vmatpush1.msra.mxu0 0.0
    %1263 = vmatprep.subr.mxu0 0.0
    %1264 = vmatpush1.msra.mxu0 0.0
    %1265 = vmatprep.subr.mxu0 0.0
    %1266 = vmatpush1.msra.mxu0 0.0
    %1267 = vmatprep.subr.mxu0 0.0
    %1268 = vmatpush1.msra.mxu0 0.0
    %1269 = vmatprep.subr.mxu0 0.0
    %1270 = vmatpush1.msra.mxu0 0.0
    %1271 = vmatprep.mubr.f32.mxu0 0.0
    %1272 = vmatmul.mubr.f32.gmra.mrb[0].mxu0 %v1201
    %v1273 = vpop.f32.mrb[0].mxu0
    %v1274 = vadd.f32 0.0, %v1273
    %v1275 = vpop.f32.mrb[0].mxu0
    %v1276 = vadd.f32 0.0, %v1275
    %1277 = vdwg.mxu0
    %1278 = vmatprep.subr.mxu0 %v154
    %1279 = vmatpush1.msra.mxu0 %v153
    %1280 = vmatprep.subr.mxu0 %v158
    %1281 = vmatpush1.msra.mxu0 %v157
    %1282 = vmatprep.subr.mxu0 %v162
    %1283 = vmatpush1.msra.mxu0 %v161
    %1284 = vmatprep.subr.mxu0 %v166
    %1285 = vmatpush1.msra.mxu0 %v165
    %1286 = vmatprep.subr.mxu0 %v170
    %1287 = vmatpush1.msra.mxu0 %v169
    %1288 = vmatprep.subr.mxu0 %v174
    %1289 = vmatpush1.msra.mxu0 %v173
    %1290 = vmatprep.subr.mxu0 %v178
    %1291 = vmatpush1.msra.mxu0 %v177
    %1292 = vmatprep.subr.mxu0 %v182
    %1293 = vmatpush1.msra.mxu0 %v181
    %1294 = vmatprep.subr.mxu0 %v186
    %1295 = vmatpush1.msra.mxu0 %v185
    %1296 = vmatprep.subr.mxu0 %v190
    %1297 = vmatpush1.msra.mxu0 %v189
    %1298 = vmatprep.subr.mxu0 %v194
    %1299 = vmatpush1.msra.mxu0 %v193
    %1300 = vmatprep.subr.mxu0 %v198
    %1301 = vmatpush1.msra.mxu0 %v197
    %1302 = vmatprep.subr.mxu0 %v202
    %1303 = vmatpush1.msra.mxu0 %v201
    %1304 = vmatprep.subr.mxu0 %v206
    %1305 = vmatpush1.msra.mxu0 %v205
    %1306 = vmatprep.subr.mxu0 %v210
    %1307 = vmatpush1.msra.mxu0 %v209
    %1308 = vmatprep.subr.mxu0 %v214
    %1309 = vmatpush1.msra.mxu0 %v213
    %1310 = vmatprep.subr.mxu0 0.0
    %1311 = vmatpush1.msra.mxu0 0.0
    %1312 = vmatprep.subr.mxu0 0.0
    %1313 = vmatpush1.msra.mxu0 0.0
    %1314 = vmatprep.subr.mxu0 0.0
    %1315 = vmatpush1.msra.mxu0 0.0
    %1316 = vmatprep.subr.mxu0 0.0
    %1317 = vmatpush1.msra.mxu0 0.0
    %1318 = vmatprep.subr.mxu0 0.0
    %1319 = vmatpush1.msra.mxu0 0.0
    %1320 = vmatprep.subr.mxu0 0.0
    %1321 = vmatpush1.msra.mxu0 0.0
    %1322 = vmatprep.subr.mxu0 0.0
    %1323 = vmatpush1.msra.mxu0 0.0
    %1324 = vmatprep.subr.mxu0 0.0
    %1325 = vmatpush1.msra.mxu0 0.0
    %1326 = vmatprep.subr.mxu0 0.0
    %1327 = vmatpush1.msra.mxu0 0.0
    %1328 = vmatprep.subr.mxu0 0.0
    %1329 = vmatpush1.msra.mxu0 0.0
    %1330 = vmatprep.subr.mxu0 0.0
    %1331 = vmatpush1.msra.mxu0 0.0
    %1332 = vmatprep.subr.mxu0 0.0
    %1333 = vmatpush1.msra.mxu0 0.0
    %1334 = vmatprep.subr.mxu0 0.0
    %1335 = vmatpush1.msra.mxu0 0.0
    %1336 = vmatprep.subr.mxu0 0.0
    %1337 = vmatpush1.msra.mxu0 0.0
    %1338 = vmatprep.subr.mxu0 0.0
    %1339 = vmatpush1.msra.mxu0 0.0
    %1340 = vmatprep.subr.mxu0 0.0
    %1341 = vmatpush1.msra.mxu0 0.0
    %1342 = vmatprep.mubr.f32.mxu0 0.0
    %1343 = vmatmul.mubr.f32.gmra.mrb[0].mxu0 %v1201
    %v1344 = vpop.f32.mrb[0].mxu0
    %v1345 = vadd.f32 0.0, %v1344
    %v1346 = vpop.f32.mrb[0].mxu0
    %v1347 = vadd.f32 0.0, %v1346
    %1348 = vdwg.mxu0
    %v1349 = vadd.f32 %v1203, %v1274
    %v1350 = vadd.f32 %v1204, %v1276
    %v1351 = vadd.f32 %v1205, %v1345
    %v1352 = vadd.f32 %v1206, %v1347
    %v1353 = vxor.u32 %v1349, 2147483648
    %v1354 = vmul.f32 %v1353, 1.442695
    %v1355 = vpow.pop %v1354
    %v1356 = vadd.f32 %v1355, 1.0
    %v1357 = vrcp.pop %v1356
    %v1358 = vmul.f32 1.0, %v1357
    %v1359 = vxor.u32 %v1350, 2147483648
    %v1360 = vmul.f32 %v1359, 1.442695
    %v1361 = vpow.pop %v1360
    %v1362 = vadd.f32 %v1361, 1.0
    %v1363 = vrcp.pop %v1362
    %v1364 = vmul.f32 1.0, %v1363
    %v1365 = vtanh.pop %v1351
    %v1366 = vxor.u32 %v1352, 2147483648
    %v1367 = vmul.f32 %v1366, 1.442695
    %v1368 = vpow.pop %v1367
    %v1369 = vadd.f32 %v1368, 1.0
    %v1370 = vrcp.pop %v1369
    %v1371 = vmul.f32 1.0, %v1370
    %v1372 = vmul.f32 %v1364, %v1199
    %v1373 = vmul.f32 %v1358, %v1365
    %v1374 = vadd.f32 %v1372, %v1373
    %v1375 = vtanh.pop %v1374
    %v1376 = vmul.f32 %v1371, %v1375
    %1377 = vst [vmem:[#allocation3 + $0x20] sm:$0xff] %v1376
    %v1378 = vld [vmem:[#allocation2 + $0xa0] sm:$0xff]
    %v1379 = vld [vmem:[#allocation2 + $0xa8] sm:$0xff]
    %v1380 = vld [vmem:[#allocation2 + $0xb0] sm:$0xff]
    %v1381 = vld [vmem:[#allocation2 + $0xb8] sm:$0xff]
    %1382 = vmatprep.subr.mxu0 %v152
    %1383 = vmatpush1.msra.mxu0 %v151
    %1384 = vmatprep.subr.mxu0 %v156
    %1385 = vmatpush1.msra.mxu0 %v155
    %1386 = vmatprep.subr.mxu0 %v160
    %1387 = vmatpush1.msra.mxu0 %v159
    %1388 = vmatprep.subr.mxu0 %v164
    %1389 = vmatpush1.msra.mxu0 %v163
    %1390 = vmatprep.subr.mxu0 %v168
    %1391 = vmatpush1.msra.mxu0 %v167
    %1392 = vmatprep.subr.mxu0 %v172
    %1393 = vmatpush1.msra.mxu0 %v171
    %1394 = vmatprep.subr.mxu0 %v176
    %1395 = vmatpush1.msra.mxu0 %v175
    %1396 = vmatprep.subr.mxu0 %v180
    %1397 = vmatpush1.msra.mxu0 %v179
    %1398 = vmatprep.subr.mxu0 %v184
    %1399 = vmatpush1.msra.mxu0 %v183
    %1400 = vmatprep.subr.mxu0 %v188
    %1401 = vmatpush1.msra.mxu0 %v187
    %1402 = vmatprep.subr.mxu0 %v192
    %1403 = vmatpush1.msra.mxu0 %v191
    %1404 = vmatprep.subr.mxu0 %v196
    %1405 = vmatpush1.msra.mxu0 %v195
    %1406 = vmatprep.subr.mxu0 %v200
    %1407 = vmatpush1.msra.mxu0 %v199
    %1408 = vmatprep.subr.mxu0 %v204
    %1409 = vmatpush1.msra.mxu0 %v203
    %1410 = vmatprep.subr.mxu0 %v208
    %1411 = vmatpush1.msra.mxu0 %v207
    %1412 = vmatprep.subr.mxu0 %v212
    %1413 = vmatpush1.msra.mxu0 %v211
    %1414 = vmatprep.subr.mxu0 0.0
    %1415 = vmatpush1.msra.mxu0 0.0
    %1416 = vmatprep.subr.mxu0 0.0
    %1417 = vmatpush1.msra.mxu0 0.0
    %1418 = vmatprep.subr.mxu0 0.0
    %1419 = vmatpush1.msra.mxu0 0.0
    %1420 = vmatprep.subr.mxu0 0.0
    %1421 = vmatpush1.msra.mxu0 0.0
    %1422 = vmatprep.subr.mxu0 0.0
    %1423 = vmatpush1.msra.mxu0 0.0
    %1424 = vmatprep.subr.mxu0 0.0
    %1425 = vmatpush1.msra.mxu0 0.0
    %1426 = vmatprep.subr.mxu0 0.0
    %1427 = vmatpush1.msra.mxu0 0.0
    %1428 = vmatprep.subr.mxu0 0.0
    %1429 = vmatpush1.msra.mxu0 0.0
    %1430 = vmatprep.subr.mxu0 0.0
    %1431 = vmatpush1.msra.mxu0 0.0
    %1432 = vmatprep.subr.mxu0 0.0
    %1433 = vmatpush1.msra.mxu0 0.0
    %1434 = vmatprep.subr.mxu0 0.0
    %1435 = vmatpush1.msra.mxu0 0.0
    %1436 = vmatprep.subr.mxu0 0.0
    %1437 = vmatpush1.msra.mxu0 0.0
    %1438 = vmatprep.subr.mxu0 0.0
    %1439 = vmatpush1.msra.mxu0 0.0
    %1440 = vmatprep.subr.mxu0 0.0
    %1441 = vmatpush1.msra.mxu0 0.0
    %1442 = vmatprep.subr.mxu0 0.0
    %1443 = vmatpush1.msra.mxu0 0.0
    %1444 = vmatprep.subr.mxu0 0.0
    %1445 = vmatpush1.msra.mxu0 0.0
    %1446 = vmatprep.mubr.f32.mxu0 0.0
    %1447 = vmatmul.mubr.f32.gmra.mrb[0].mxu0 %v1376
    %v1448 = vpop.f32.mrb[0].mxu0
    %v1449 = vadd.f32 0.0, %v1448
    %v1450 = vpop.f32.mrb[0].mxu0
    %v1451 = vadd.f32 0.0, %v1450
    %1452 = vdwg.mxu0
    %1453 = vmatprep.subr.mxu0 %v154
    %1454 = vmatpush1.msra.mxu0 %v153
    %1455 = vmatprep.subr.mxu0 %v158
    %1456 = vmatpush1.msra.mxu0 %v157
    %1457 = vmatprep.subr.mxu0 %v162
    %1458 = vmatpush1.msra.mxu0 %v161
    %1459 = vmatprep.subr.mxu0 %v166
    %1460 = vmatpush1.msra.mxu0 %v165
    %1461 = vmatprep.subr.mxu0 %v170
    %1462 = vmatpush1.msra.mxu0 %v169
    %1463 = vmatprep.subr.mxu0 %v174
    %1464 = vmatpush1.msra.mxu0 %v173
    %1465 = vmatprep.subr.mxu0 %v178
    %1466 = vmatpush1.msra.mxu0 %v177
    %1467 = vmatprep.subr.mxu0 %v182
    %1468 = vmatpush1.msra.mxu0 %v181
    %1469 = vmatprep.subr.mxu0 %v186
    %1470 = vmatpush1.msra.mxu0 %v185
    %1471 = vmatprep.subr.mxu0 %v190
    %1472 = vmatpush1.msra.mxu0 %v189
    %1473 = vmatprep.subr.mxu0 %v194
    %1474 = vmatpush1.msra.mxu0 %v193
    %1475 = vmatprep.subr.mxu0 %v198
    %1476 = vmatpush1.msra.mxu0 %v197
    %1477 = vmatprep.subr.mxu0 %v202
    %1478 = vmatpush1.msra.mxu0 %v201
    %1479 = vmatprep.subr.mxu0 %v206
    %1480 = vmatpush1.msra.mxu0 %v205
    %1481 = vmatprep.subr.mxu0 %v210
    %1482 = vmatpush1.msra.mxu0 %v209
    %1483 = vmatprep.subr.mxu0 %v214
    %1484 = vmatpush1.msra.mxu0 %v213
    %1485 = vmatprep.subr.mxu0 0.0
    %1486 = vmatpush1.msra.mxu0 0.0
    %1487 = vmatprep.subr.mxu0 0.0
    %1488 = vmatpush1.msra.mxu0 0.0
    %1489 = vmatprep.subr.mxu0 0.0
    %1490 = vmatpush1.msra.mxu0 0.0
    %1491 = vmatprep.subr.mxu0 0.0
    %1492 = vmatpush1.msra.mxu0 0.0
    %1493 = vmatprep.subr.mxu0 0.0
    %1494 = vmatpush1.msra.mxu0 0.0
    %1495 = vmatprep.subr.mxu0 0.0
    %1496 = vmatpush1.msra.mxu0 0.0
    %1497 = vmatprep.subr.mxu0 0.0
    %1498 = vmatpush1.msra.mxu0 0.0
    %1499 = vmatprep.subr.mxu0 0.0
    %1500 = vmatpush1.msra.mxu0 0.0
    %1501 = vmatprep.subr.mxu0 0.0
    %1502 = vmatpush1.msra.mxu0 0.0
    %1503 = vmatprep.subr.mxu0 0.0
    %1504 = vmatpush1.msra.mxu0 0.0
    %1505 = vmatprep.subr.mxu0 0.0
    %1506 = vmatpush1.msra.mxu0 0.0
    %1507 = vmatprep.subr.mxu0 0.0
    %1508 = vmatpush1.msra.mxu0 0.0
    %1509 = vmatprep.subr.mxu0 0.0
    %1510 = vmatpush1.msra.mxu0 0.0
    %1511 = vmatprep.subr.mxu0 0.0
    %1512 = vmatpush1.msra.mxu0 0.0
    %1513 = vmatprep.subr.mxu0 0.0
    %1514 = vmatpush1.msra.mxu0 0.0
    %1515 = vmatprep.subr.mxu0 0.0
    %1516 = vmatpush1.msra.mxu0 0.0
    %1517 = vmatprep.mubr.f32.mxu0 0.0
    %1518 = vmatmul.mubr.f32.gmra.mrb[0].mxu0 %v1376
    %v1519 = vpop.f32.mrb[0].mxu0
    %v1520 = vadd.f32 0.0, %v1519
    %v1521 = vpop.f32.mrb[0].mxu0
    %v1522 = vadd.f32 0.0, %v1521
    %1523 = vdwg.mxu0
    %v1524 = vadd.f32 %v1378, %v1449
    %v1525 = vadd.f32 %v1379, %v1451
    %v1526 = vadd.f32 %v1380, %v1520
    %v1527 = vadd.f32 %v1381, %v1522
    %v1528 = vxor.u32 %v1524, 2147483648
    %v1529 = vmul.f32 %v1528, 1.442695
    %v1530 = vpow.pop %v1529
    %v1531 = vadd.f32 %v1530, 1.0
    %v1532 = vrcp.pop %v1531
    %v1533 = vmul.f32 1.0, %v1532
    %v1534 = vxor.u32 %v1525, 2147483648
    %v1535 = vmul.f32 %v1534, 1.442695
    %v1536 = vpow.pop %v1535
    %v1537 = vadd.f32 %v1536, 1.0
    %v1538 = vrcp.pop %v1537
    %v1539 = vmul.f32 1.0, %v1538
    %v1540 = vtanh.pop %v1526
    %v1541 = vxor.u32 %v1527, 2147483648
    %v1542 = vmul.f32 %v1541, 1.442695
    %v1543 = vpow.pop %v1542
    %v1544 = vadd.f32 %v1543, 1.0
    %v1545 = vrcp.pop %v1544
    %v1546 = vmul.f32 1.0, %v1545
    %v1547 = vmul.f32 %v1539, %v1374
    %v1548 = vmul.f32 %v1533, %v1540
    %v1549 = vadd.f32 %v1547, %v1548
    %v1550 = vtanh.pop %v1549
    %v1551 = vmul.f32 %v1546, %v1550
    %1552 = vst [vmem:[#allocation3 + $0x28] sm:$0xff] %v1551
    %v1553 = vld [vmem:[#allocation2 + $0xc0] sm:$0xff]
    %v1554 = vld [vmem:[#allocation2 + $0xc8] sm:$0xff]
    %v1555 = vld [vmem:[#allocation2 + $0xd0] sm:$0xff]
    %v1556 = vld [vmem:[#allocation2 + $0xd8] sm:$0xff]
    %1557 = vmatprep.subr.mxu0 %v152
    %1558 = vmatpush1.msra.mxu0 %v151
    %1559 = vmatprep.subr.mxu0 %v156
    %1560 = vmatpush1.msra.mxu0 %v155
    %1561 = vmatprep.subr.mxu0 %v160
    %1562 = vmatpush1.msra.mxu0 %v159
    %1563 = vmatprep.subr.mxu0 %v164
    %1564 = vmatpush1.msra.mxu0 %v163
    %1565 = vmatprep.subr.mxu0 %v168
    %1566 = vmatpush1.msra.mxu0 %v167
    %1567 = vmatprep.subr.mxu0 %v172
    %1568 = vmatpush1.msra.mxu0 %v171
    %1569 = vmatprep.subr.mxu0 %v176
    %1570 = vmatpush1.msra.mxu0 %v175
    %1571 = vmatprep.subr.mxu0 %v180
    %1572 = vmatpush1.msra.mxu0 %v179
    %1573 = vmatprep.subr.mxu0 %v184
    %1574 = vmatpush1.msra.mxu0 %v183
    %1575 = vmatprep.subr.mxu0 %v188
    %1576 = vmatpush1.msra.mxu0 %v187
    %1577 = vmatprep.subr.mxu0 %v192
    %1578 = vmatpush1.msra.mxu0 %v191
    %1579 = vmatprep.subr.mxu0 %v196
    %1580 = vmatpush1.msra.mxu0 %v195
    %1581 = vmatprep.subr.mxu0 %v200
    %1582 = vmatpush1.msra.mxu0 %v199
    %1583 = vmatprep.subr.mxu0 %v204
    %1584 = vmatpush1.msra.mxu0 %v203
    %1585 = vmatprep.subr.mxu0 %v208
    %1586 = vmatpush1.msra.mxu0 %v207
    %1587 = vmatprep.subr.mxu0 %v212
    %1588 = vmatpush1.msra.mxu0 %v211
    %1589 = vmatprep.subr.mxu0 0.0
    %1590 = vmatpush1.msra.mxu0 0.0
    %1591 = vmatprep.subr.mxu0 0.0
    %1592 = vmatpush1.msra.mxu0 0.0
    %1593 = vmatprep.subr.mxu0 0.0
    %1594 = vmatpush1.msra.mxu0 0.0
    %1595 = vmatprep.subr.mxu0 0.0
    %1596 = vmatpush1.msra.mxu0 0.0
    %1597 = vmatprep.subr.mxu0 0.0
    %1598 = vmatpush1.msra.mxu0 0.0
    %1599 = vmatprep.subr.mxu0 0.0
    %1600 = vmatpush1.msra.mxu0 0.0
    %1601 = vmatprep.subr.mxu0 0.0
    %1602 = vmatpush1.msra.mxu0 0.0
    %1603 = vmatprep.subr.mxu0 0.0
    %1604 = vmatpush1.msra.mxu0 0.0
    %1605 = vmatprep.subr.mxu0 0.0
    %1606 = vmatpush1.msra.mxu0 0.0
    %1607 = vmatprep.subr.mxu0 0.0
    %1608 = vmatpush1.msra.mxu0 0.0
    %1609 = vmatprep.subr.mxu0 0.0
    %1610 = vmatpush1.msra.mxu0 0.0
    %1611 = vmatprep.subr.mxu0 0.0
    %1612 = vmatpush1.msra.mxu0 0.0
    %1613 = vmatprep.subr.mxu0 0.0
    %1614 = vmatpush1.msra.mxu0 0.0
    %1615 = vmatprep.subr.mxu0 0.0
    %1616 = vmatpush1.msra.mxu0 0.0
    %1617 = vmatprep.subr.mxu0 0.0
    %1618 = vmatpush1.msra.mxu0 0.0
    %1619 = vmatprep.subr.mxu0 0.0
    %1620 = vmatpush1.msra.mxu0 0.0
    %1621 = vmatprep.mubr.f32.mxu0 0.0
    %1622 = vmatmul.mubr.f32.gmra.mrb[0].mxu0 %v1551
    %v1623 = vpop.f32.mrb[0].mxu0
    %v1624 = vadd.f32 0.0, %v1623
    %v1625 = vpop.f32.mrb[0].mxu0
    %v1626 = vadd.f32 0.0, %v1625
    %1627 = vdwg.mxu0
    %1628 = vmatprep.subr.mxu0 %v154
    %1629 = vmatpush1.msra.mxu0 %v153
    %1630 = vmatprep.subr.mxu0 %v158
    %1631 = vmatpush1.msra.mxu0 %v157
    %1632 = vmatprep.subr.mxu0 %v162
    %1633 = vmatpush1.msra.mxu0 %v161
    %1634 = vmatprep.subr.mxu0 %v166
    %1635 = vmatpush1.msra.mxu0 %v165
    %1636 = vmatprep.subr.mxu0 %v170
    %1637 = vmatpush1.msra.mxu0 %v169
    %1638 = vmatprep.subr.mxu0 %v174
    %1639 = vmatpush1.msra.mxu0 %v173
    %1640 = vmatprep.subr.mxu0 %v178
    %1641 = vmatpush1.msra.mxu0 %v177
    %1642 = vmatprep.subr.mxu0 %v182
    %1643 = vmatpush1.msra.mxu0 %v181
    %1644 = vmatprep.subr.mxu0 %v186
    %1645 = vmatpush1.msra.mxu0 %v185
    %1646 = vmatprep.subr.mxu0 %v190
    %1647 = vmatpush1.msra.mxu0 %v189
    %1648 = vmatprep.subr.mxu0 %v194
    %1649 = vmatpush1.msra.mxu0 %v193
    %1650 = vmatprep.subr.mxu0 %v198
    %1651 = vmatpush1.msra.mxu0 %v197
    %1652 = vmatprep.subr.mxu0 %v202
    %1653 = vmatpush1.msra.mxu0 %v201
    %1654 = vmatprep.subr.mxu0 %v206
    %1655 = vmatpush1.msra.mxu0 %v205
    %1656 = vmatprep.subr.mxu0 %v210
    %1657 = vmatpush1.msra.mxu0 %v209
    %1658 = vmatprep.subr.mxu0 %v214
    %1659 = vmatpush1.msra.mxu0 %v213
    %1660 = vmatprep.subr.mxu0 0.0
    %1661 = vmatpush1.msra.mxu0 0.0
    %1662 = vmatprep.subr.mxu0 0.0
    %1663 = vmatpush1.msra.mxu0 0.0
    %1664 = vmatprep.subr.mxu0 0.0
    %1665 = vmatpush1.msra.mxu0 0.0
    %1666 = vmatprep.subr.mxu0 0.0
    %1667 = vmatpush1.msra.mxu0 0.0
    %1668 = vmatprep.subr.mxu0 0.0
    %1669 = vmatpush1.msra.mxu0 0.0
    %1670 = vmatprep.subr.mxu0 0.0
    %1671 = vmatpush1.msra.mxu0 0.0
    %1672 = vmatprep.subr.mxu0 0.0
    %1673 = vmatpush1.msra.mxu0 0.0
    %1674 = vmatprep.subr.mxu0 0.0
    %1675 = vmatpush1.msra.mxu0 0.0
    %1676 = vmatprep.subr.mxu0 0.0
    %1677 = vmatpush1.msra.mxu0 0.0
    %1678 = vmatprep.subr.mxu0 0.0
    %1679 = vmatpush1.msra.mxu0 0.0
    %1680 = vmatprep.subr.mxu0 0.0
    %1681 = vmatpush1.msra.mxu0 0.0
    %1682 = vmatprep.subr.mxu0 0.0
    %1683 = vmatpush1.msra.mxu0 0.0
    %1684 = vmatprep.subr.mxu0 0.0
    %1685 = vmatpush1.msra.mxu0 0.0
    %1686 = vmatprep.subr.mxu0 0.0
    %1687 = vmatpush1.msra.mxu0 0.0
    %1688 = vmatprep.subr.mxu0 0.0
    %1689 = vmatpush1.msra.mxu0 0.0
    %1690 = vmatprep.subr.mxu0 0.0
    %1691 = vmatpush1.msra.mxu0 0.0
    %1692 = vmatprep.mubr.f32.mxu0 0.0
    %1693 = vmatmul.mubr.f32.gmra.mrb[0].mxu0 %v1551
    %v1694 = vpop.f32.mrb[0].mxu0
    %v1695 = vadd.f32 0.0, %v1694
    %v1696 = vpop.f32.mrb[0].mxu0
    %v1697 = vadd.f32 0.0, %v1696
    %1698 = vdwg.mxu0
    %v1699 = vadd.f32 %v1553, %v1624
    %v1700 = vadd.f32 %v1554, %v1626
    %v1701 = vadd.f32 %v1555, %v1695
    %v1702 = vadd.f32 %v1556, %v1697
    %v1703 = vxor.u32 %v1699, 2147483648
    %v1704 = vmul.f32 %v1703, 1.442695
    %v1705 = vpow.pop %v1704
    %v1706 = vadd.f32 %v1705, 1.0
    %v1707 = vrcp.pop %v1706
    %v1708 = vmul.f32 1.0, %v1707
    %v1709 = vxor.u32 %v1700, 2147483648
    %v1710 = vmul.f32 %v1709, 1.442695
    %v1711 = vpow.pop %v1710
    %v1712 = vadd.f32 %v1711, 1.0
    %v1713 = vrcp.pop %v1712
    %v1714 = vmul.f32 1.0, %v1713
    %v1715 = vtanh.pop %v1701
    %v1716 = vxor.u32 %v1702, 2147483648
    %v1717 = vmul.f32 %v1716, 1.442695
    %v1718 = vpow.pop %v1717
    %v1719 = vadd.f32 %v1718, 1.0
    %v1720 = vrcp.pop %v1719
    %v1721 = vmul.f32 1.0, %v1720
    %v1722 = vmul.f32 %v1714, %v1549
    %v1723 = vmul.f32 %v1708, %v1715
    %v1724 = vadd.f32 %v1722, %v1723
    %v1725 = vtanh.pop %v1724
    %v1726 = vmul.f32 %v1721, %v1725
    %1727 = vst [vmem:[#allocation3 + $0x30] sm:$0xff] %v1726
    %v1728 = vld [vmem:[#allocation2 + $0xe0] sm:$0xff]
    %v1729 = vld [vmem:[#allocation2 + $0xe8] sm:$0xff]
    %v1730 = vld [vmem:[#allocation2 + $0xf0] sm:$0xff]
    %v1731 = vld [vmem:[#allocation2 + $0xf8] sm:$0xff]
    %1732 = vmatprep.subr.mxu0 %v152
    %1733 = vmatpush1.msra.mxu0 %v151
    %1734 = vmatprep.subr.mxu0 %v156
    %1735 = vmatpush1.msra.mxu0 %v155
    %1736 = vmatprep.subr.mxu0 %v160
    %1737 = vmatpush1.msra.mxu0 %v159
    %1738 = vmatprep.subr.mxu0 %v164
    %1739 = vmatpush1.msra.mxu0 %v163
    %1740 = vmatprep.subr.mxu0 %v168
    %1741 = vmatpush1.msra.mxu0 %v167
    %1742 = vmatprep.subr.mxu0 %v172
    %1743 = vmatpush1.msra.mxu0 %v171
    %1744 = vmatprep.subr.mxu0 %v176
    %1745 = vmatpush1.msra.mxu0 %v175
    %1746 = vmatprep.subr.mxu0 %v180
    %1747 = vmatpush1.msra.mxu0 %v179
    %1748 = vmatprep.subr.mxu0 %v184
    %1749 = vmatpush1.msra.mxu0 %v183
    %1750 = vmatprep.subr.mxu0 %v188
    %1751 = vmatpush1.msra.mxu0 %v187
    %1752 = vmatprep.subr.mxu0 %v192
    %1753 = vmatpush1.msra.mxu0 %v191
    %1754 = vmatprep.subr.mxu0 %v196
    %1755 = vmatpush1.msra.mxu0 %v195
    %1756 = vmatprep.subr.mxu0 %v200
    %1757 = vmatpush1.msra.mxu0 %v199
    %1758 = vmatprep.subr.mxu0 %v204
    %1759 = vmatpush1.msra.mxu0 %v203
    %1760 = vmatprep.subr.mxu0 %v208
    %1761 = vmatpush1.msra.mxu0 %v207
    %1762 = vmatprep.subr.mxu0 %v212
    %1763 = vmatpush1.msra.mxu0 %v211
    %1764 = vmatprep.subr.mxu0 0.0
    %1765 = vmatpush1.msra.mxu0 0.0
    %1766 = vmatprep.subr.mxu0 0.0
    %1767 = vmatpush1.msra.mxu0 0.0
    %1768 = vmatprep.subr.mxu0 0.0
    %1769 = vmatpush1.msra.mxu0 0.0
    %1770 = vmatprep.subr.mxu0 0.0
    %1771 = vmatpush1.msra.mxu0 0.0
    %1772 = vmatprep.subr.mxu0 0.0
    %1773 = vmatpush1.msra.mxu0 0.0
    %1774 = vmatprep.subr.mxu0 0.0
    %1775 = vmatpush1.msra.mxu0 0.0
    %1776 = vmatprep.subr.mxu0 0.0
    %1777 = vmatpush1.msra.mxu0 0.0
    %1778 = vmatprep.subr.mxu0 0.0
    %1779 = vmatpush1.msra.mxu0 0.0
    %1780 = vmatprep.subr.mxu0 0.0
    %1781 = vmatpush1.msra.mxu0 0.0
    %1782 = vmatprep.subr.mxu0 0.0
    %1783 = vmatpush1.msra.mxu0 0.0
    %1784 = vmatprep.subr.mxu0 0.0
    %1785 = vmatpush1.msra.mxu0 0.0
    %1786 = vmatprep.subr.mxu0 0.0
    %1787 = vmatpush1.msra.mxu0 0.0
    %1788 = vmatprep.subr.mxu0 0.0
    %1789 = vmatpush1.msra.mxu0 0.0
    %1790 = vmatprep.subr.mxu0 0.0
    %1791 = vmatpush1.msra.mxu0 0.0
    %1792 = vmatprep.subr.mxu0 0.0
    %1793 = vmatpush1.msra.mxu0 0.0
    %1794 = vmatprep.subr.mxu0 0.0
    %1795 = vmatpush1.msra.mxu0 0.0
    %1796 = vmatprep.mubr.f32.mxu0 0.0
    %1797 = vmatmul.mubr.f32.gmra.mrb[0].mxu0 %v1726
    %v1798 = vpop.f32.mrb[0].mxu0
    %v1799 = vadd.f32 0.0, %v1798
    %v1800 = vpop.f32.mrb[0].mxu0
    %v1801 = vadd.f32 0.0, %v1800
    %1802 = vdwg.mxu0
    %1803 = vmatprep.subr.mxu0 %v154
    %1804 = vmatpush1.msra.mxu0 %v153
    %1805 = vmatprep.subr.mxu0 %v158
    %1806 = vmatpush1.msra.mxu0 %v157
    %1807 = vmatprep.subr.mxu0 %v162
    %1808 = vmatpush1.msra.mxu0 %v161
    %1809 = vmatprep.subr.mxu0 %v166
    %1810 = vmatpush1.msra.mxu0 %v165
    %1811 = vmatprep.subr.mxu0 %v170
    %1812 = vmatpush1.msra.mxu0 %v169
    %1813 = vmatprep.subr.mxu0 %v174
    %1814 = vmatpush1.msra.mxu0 %v173
    %1815 = vmatprep.subr.mxu0 %v178
    %1816 = vmatpush1.msra.mxu0 %v177
    %1817 = vmatprep.subr.mxu0 %v182
    %1818 = vmatpush1.msra.mxu0 %v181
    %1819 = vmatprep.subr.mxu0 %v186
    %1820 = vmatpush1.msra.mxu0 %v185
    %1821 = vmatprep.subr.mxu0 %v190
    %1822 = vmatpush1.msra.mxu0 %v189
    %1823 = vmatprep.subr.mxu0 %v194
    %1824 = vmatpush1.msra.mxu0 %v193
    %1825 = vmatprep.subr.mxu0 %v198
    %1826 = vmatpush1.msra.mxu0 %v197
    %1827 = vmatprep.subr.mxu0 %v202
    %1828 = vmatpush1.msra.mxu0 %v201
    %1829 = vmatprep.subr.mxu0 %v206
    %1830 = vmatpush1.msra.mxu0 %v205
    %1831 = vmatprep.subr.mxu0 %v210
    %1832 = vmatpush1.msra.mxu0 %v209
    %1833 = vmatprep.subr.mxu0 %v214
    %1834 = vmatpush1.msra.mxu0 %v213
    %1835 = vmatprep.subr.mxu0 0.0
    %1836 = vmatpush1.msra.mxu0 0.0
    %1837 = vmatprep.subr.mxu0 0.0
    %1838 = vmatpush1.msra.mxu0 0.0
    %1839 = vmatprep.subr.mxu0 0.0
    %1840 = vmatpush1.msra.mxu0 0.0
    %1841 = vmatprep.subr.mxu0 0.0
    %1842 = vmatpush1.msra.mxu0 0.0
    %1843 = vmatprep.subr.mxu0 0.0
    %1844 = vmatpush1.msra.mxu0 0.0
    %1845 = vmatprep.subr.mxu0 0.0
    %1846 = vmatpush1.msra.mxu0 0.0
    %1847 = vmatprep.subr.mxu0 0.0
    %1848 = vmatpush1.msra.mxu0 0.0
    %1849 = vmatprep.subr.mxu0 0.0
    %1850 = vmatpush1.msra.mxu0 0.0
    %1851 = vmatprep.subr.mxu0 0.0
    %1852 = vmatpush1.msra.mxu0 0.0
    %1853 = vmatprep.subr.mxu0 0.0
    %1854 = vmatpush1.msra.mxu0 0.0
    %1855 = vmatprep.subr.mxu0 0.0
    %1856 = vmatpush1.msra.mxu0 0.0
    %1857 = vmatprep.subr.mxu0 0.0
    %1858 = vmatpush1.msra.mxu0 0.0
    %1859 = vmatprep.subr.mxu0 0.0
    %1860 = vmatpush1.msra.mxu0 0.0
    %1861 = vmatprep.subr.mxu0 0.0
    %1862 = vmatpush1.msra.mxu0 0.0
    %1863 = vmatprep.subr.mxu0 0.0
    %1864 = vmatpush1.msra.mxu0 0.0
    %1865 = vmatprep.subr.mxu0 0.0
    %1866 = vmatpush1.msra.mxu0 0.0
    %1867 = vmatprep.mubr.f32.mxu0 0.0
    %1868 = vmatmul.mubr.f32.gmra.mrb[0].mxu0 %v1726
    %v1869 = vpop.f32.mrb[0].mxu0
    %v1870 = vadd.f32 0.0, %v1869
    %v1871 = vpop.f32.mrb[0].mxu0
    %v1872 = vadd.f32 0.0, %v1871
    %1873 = vdwg.mxu0
    %v1874 = vadd.f32 %v1728, %v1799
    %v1875 = vadd.f32 %v1729, %v1801
    %v1876 = vadd.f32 %v1730, %v1870
    %v1877 = vadd.f32 %v1731, %v1872
    %v1878 = vxor.u32 %v1874, 2147483648
    %v1879 = vmul.f32 %v1878, 1.442695
    %v1880 = vpow.pop %v1879
    %v1881 = vadd.f32 %v1880, 1.0
    %v1882 = vrcp.pop %v1881
    %v1883 = vmul.f32 1.0, %v1882
    %v1884 = vxor.u32 %v1875, 2147483648
    %v1885 = vmul.f32 %v1884, 1.442695
    %v1886 = vpow.pop %v1885
    %v1887 = vadd.f32 %v1886, 1.0
    %v1888 = vrcp.pop %v1887
    %v1889 = vmul.f32 1.0, %v1888
    %v1890 = vtanh.pop %v1876
    %v1891 = vxor.u32 %v1877, 2147483648
    %v1892 = vmul.f32 %v1891, 1.442695
    %v1893 = vpow.pop %v1892
    %v1894 = vadd.f32 %v1893, 1.0
    %v1895 = vrcp.pop %v1894
    %v1896 = vmul.f32 1.0, %v1895
    %v1897 = vmul.f32 %v1889, %v1724
    %v1898 = vmul.f32 %v1883, %v1890
    %v1899 = vadd.f32 %v1897, %v1898
    %v1900 = vtanh.pop %v1899
    %v1901 = vmul.f32 %v1896, %v1900
    %1902 = vst [vmem:[#allocation3 + $0x38] sm:$0xff] %v1901
    %v1903 = vld [vmem:[#allocation8] sm:$0xff]
    %v1904 = vld [vmem:[#allocation8 + $0x8] sm:$0xff]
    %v1905 = vld [vmem:[#allocation8 + $0x10] sm:$0xff]
    %v1906 = vld [vmem:[#allocation8 + $0x18] sm:$0xff]
    %v1907 = vld [vmem:[#allocation8 + $0x20] sm:$0xff]
    %v1908 = vld [vmem:[#allocation8 + $0x28] sm:$0xff]
    %v1909 = vld [vmem:[#allocation8 + $0x30] sm:$0xff]
    %v1910 = vld [vmem:[#allocation8 + $0x38] sm:$0xff]
    %v1911 = vld [vmem:[#allocation8 + $0x40] sm:$0xff]
    %v1912 = vld [vmem:[#allocation8 + $0x48] sm:$0xff]
    %v1913 = vld [vmem:[#allocation8 + $0x50] sm:$0xff]
    %v1914 = vld [vmem:[#allocation8 + $0x58] sm:$0xff]
    %v1915 = vld [vmem:[#allocation8 + $0x60] sm:$0xff]
    %v1916 = vld [vmem:[#allocation8 + $0x68] sm:$0xff]
    %v1917 = vld [vmem:[#allocation8 + $0x70] sm:$0xff]
    %v1918 = vld [vmem:[#allocation8 + $0x78] sm:$0xff]
    %v1919 = vld [vmem:[#allocation8 + $0x80] sm:$0xff]
    %v1920 = vld [vmem:[#allocation8 + $0x88] sm:$0xff]
    %v1921 = vld [vmem:[#allocation8 + $0x90] sm:$0xff]
    %v1922 = vld [vmem:[#allocation8 + $0x98] sm:$0xff]
    %v1923 = vld [vmem:[#allocation8 + $0xa0] sm:$0xff]
    %v1924 = vld [vmem:[#allocation8 + $0xa8] sm:$0xff]
    %v1925 = vld [vmem:[#allocation8 + $0xb0] sm:$0xff]
    %v1926 = vld [vmem:[#allocation8 + $0xb8] sm:$0xff]
    %v1927 = vld [vmem:[#allocation8 + $0xc0] sm:$0xff]
    %v1928 = vld [vmem:[#allocation8 + $0xc8] sm:$0xff]
    %v1929 = vld [vmem:[#allocation8 + $0xd0] sm:$0xff]
    %v1930 = vld [vmem:[#allocation8 + $0xd8] sm:$0xff]
    %v1931 = vld [vmem:[#allocation8 + $0xe0] sm:$0xff]
    %v1932 = vld [vmem:[#allocation8 + $0xe8] sm:$0xff]
    %v1933 = vld [vmem:[#allocation8 + $0xf0] sm:$0xff]
    %v1934 = vld [vmem:[#allocation8 + $0xf8] sm:$0xff]
    %v1935 = vld [vmem:[#allocation8 + $0x100] sm:$0xff]
    %v1936 = vld [vmem:[#allocation8 + $0x108] sm:$0xff]
    %v1937 = vld [vmem:[#allocation8 + $0x110] sm:$0xff]
    %v1938 = vld [vmem:[#allocation8 + $0x118] sm:$0xff]
    %v1939 = vld [vmem:[#allocation8 + $0x120] sm:$0xff]
    %v1940 = vld [vmem:[#allocation8 + $0x128] sm:$0xff]
    %v1941 = vld [vmem:[#allocation8 + $0x130] sm:$0xff]
    %v1942 = vld [vmem:[#allocation8 + $0x138] sm:$0xff]
    %v1943 = vld [vmem:[#allocation8 + $0x140] sm:$0xff]
    %v1944 = vld [vmem:[#allocation8 + $0x148] sm:$0xff]
    %v1945 = vld [vmem:[#allocation8 + $0x150] sm:$0xff]
    %v1946 = vld [vmem:[#allocation8 + $0x158] sm:$0xff]
    %v1947 = vld [vmem:[#allocation8 + $0x160] sm:$0xff]
    %v1948 = vld [vmem:[#allocation8 + $0x168] sm:$0xff]
    %v1949 = vld [vmem:[#allocation8 + $0x170] sm:$0xff]
    %v1950 = vld [vmem:[#allocation8 + $0x178] sm:$0xff]
    %v1951 = vld [vmem:[#allocation8 + $0x180] sm:$0xff]
    %v1952 = vld [vmem:[#allocation8 + $0x188] sm:$0xff]
    %v1953 = vld [vmem:[#allocation8 + $0x190] sm:$0xff]
    %v1954 = vld [vmem:[#allocation8 + $0x198] sm:$0xff]
    %v1955 = vld [vmem:[#allocation8 + $0x1a0] sm:$0xff]
    %v1956 = vld [vmem:[#allocation8 + $0x1a8] sm:$0xff]
    %v1957 = vld [vmem:[#allocation8 + $0x1b0] sm:$0xff]
    %v1958 = vld [vmem:[#allocation8 + $0x1b8] sm:$0xff]
    %v1959 = vld [vmem:[#allocation8 + $0x1c0] sm:$0xff]
    %v1960 = vld [vmem:[#allocation8 + $0x1c8] sm:$0xff]
    %v1961 = vld [vmem:[#allocation8 + $0x1d0] sm:$0xff]
    %v1962 = vld [vmem:[#allocation8 + $0x1d8] sm:$0xff]
    %v1963 = vld [vmem:[#allocation8 + $0x1e0] sm:$0xff]
    %v1964 = vld [vmem:[#allocation8 + $0x1e8] sm:$0xff]
    %v1965 = vld [vmem:[#allocation8 + $0x1f0] sm:$0xff]
    %v1966 = vld [vmem:[#allocation8 + $0x1f8] sm:$0xff]
    %v1967 = vld [vmem:[#allocation9] sm:$0xff]
    %v1968 = vld [vmem:[#allocation9 + $0x8] sm:$0xff]
    %v1969 = vld [vmem:[#allocation9 + $0x10] sm:$0xff]
    %v1970 = vld [vmem:[#allocation9 + $0x18] sm:$0xff]
    %v1971 = vld [vmem:[#allocation9 + $0x20] sm:$0xff]
    %v1972 = vld [vmem:[#allocation9 + $0x28] sm:$0xff]
    %v1973 = vld [vmem:[#allocation9 + $0x30] sm:$0xff]
    %v1974 = vld [vmem:[#allocation9 + $0x38] sm:$0xff]
    %v1975 = vld [vmem:[#allocation9 + $0x40] sm:$0xff]
    %v1976 = vld [vmem:[#allocation9 + $0x48] sm:$0xff]
    %v1977 = vld [vmem:[#allocation9 + $0x50] sm:$0xff]
    %v1978 = vld [vmem:[#allocation9 + $0x58] sm:$0xff]
    %v1979 = vld [vmem:[#allocation9 + $0x60] sm:$0xff]
    %v1980 = vld [vmem:[#allocation9 + $0x68] sm:$0xff]
    %v1981 = vld [vmem:[#allocation9 + $0x70] sm:$0xff]
    %v1982 = vld [vmem:[#allocation9 + $0x78] sm:$0xff]
    %v1983 = vld [vmem:[#allocation9 + $0x80] sm:$0xff]
    %v1984 = vld [vmem:[#allocation9 + $0x88] sm:$0xff]
    %v1985 = vld [vmem:[#allocation9 + $0x90] sm:$0xff]
    %v1986 = vld [vmem:[#allocation9 + $0x98] sm:$0xff]
    %v1987 = vld [vmem:[#allocation9 + $0xa0] sm:$0xff]
    %v1988 = vld [vmem:[#allocation9 + $0xa8] sm:$0xff]
    %v1989 = vld [vmem:[#allocation9 + $0xb0] sm:$0xff]
    %v1990 = vld [vmem:[#allocation9 + $0xb8] sm:$0xff]
    %v1991 = vld [vmem:[#allocation9 + $0xc0] sm:$0xff]
    %v1992 = vld [vmem:[#allocation9 + $0xc8] sm:$0xff]
    %v1993 = vld [vmem:[#allocation9 + $0xd0] sm:$0xff]
    %v1994 = vld [vmem:[#allocation9 + $0xd8] sm:$0xff]
    %v1995 = vld [vmem:[#allocation9 + $0xe0] sm:$0xff]
    %v1996 = vld [vmem:[#allocation9 + $0xe8] sm:$0xff]
    %v1997 = vld [vmem:[#allocation9 + $0xf0] sm:$0xff]
    %v1998 = vld [vmem:[#allocation9 + $0xf8] sm:$0xff]
    %v1999 = vld [vmem:[#allocation9 + $0x100] sm:$0xff]
    %v2000 = vld [vmem:[#allocation9 + $0x108] sm:$0xff]
    %v2001 = vld [vmem:[#allocation9 + $0x110] sm:$0xff]
    %v2002 = vld [vmem:[#allocation9 + $0x118] sm:$0xff]
    %v2003 = vld [vmem:[#allocation9 + $0x120] sm:$0xff]
    %v2004 = vld [vmem:[#allocation9 + $0x128] sm:$0xff]
    %v2005 = vld [vmem:[#allocation9 + $0x130] sm:$0xff]
    %v2006 = vld [vmem:[#allocation9 + $0x138] sm:$0xff]
    %v2007 = vld [vmem:[#allocation9 + $0x140] sm:$0xff]
    %v2008 = vld [vmem:[#allocation9 + $0x148] sm:$0xff]
    %v2009 = vld [vmem:[#allocation9 + $0x150] sm:$0xff]
    %v2010 = vld [vmem:[#allocation9 + $0x158] sm:$0xff]
    %v2011 = vld [vmem:[#allocation9 + $0x160] sm:$0xff]
    %v2012 = vld [vmem:[#allocation9 + $0x168] sm:$0xff]
    %v2013 = vld [vmem:[#allocation9 + $0x170] sm:$0xff]
    %v2014 = vld [vmem:[#allocation9 + $0x178] sm:$0xff]
    %v2015 = vld [vmem:[#allocation9 + $0x180] sm:$0xff]
    %v2016 = vld [vmem:[#allocation9 + $0x188] sm:$0xff]
    %v2017 = vld [vmem:[#allocation9 + $0x190] sm:$0xff]
    %v2018 = vld [vmem:[#allocation9 + $0x198] sm:$0xff]
    %v2019 = vld [vmem:[#allocation9 + $0x1a0] sm:$0xff]
    %v2020 = vld [vmem:[#allocation9 + $0x1a8] sm:$0xff]
    %v2021 = vld [vmem:[#allocation9 + $0x1b0] sm:$0xff]
    %v2022 = vld [vmem:[#allocation9 + $0x1b8] sm:$0xff]
    %v2023 = vld [vmem:[#allocation9 + $0x1c0] sm:$0xff]
    %v2024 = vld [vmem:[#allocation9 + $0x1c8] sm:$0xff]
    %v2025 = vld [vmem:[#allocation9 + $0x1d0] sm:$0xff]
    %v2026 = vld [vmem:[#allocation9 + $0x1d8] sm:$0xff]
    %v2027 = vld [vmem:[#allocation9 + $0x1e0] sm:$0xff]
    %v2028 = vld [vmem:[#allocation9 + $0x1e8] sm:$0xff]
    %v2029 = vld [vmem:[#allocation9 + $0x1f0] sm:$0xff]
    %v2030 = vld [vmem:[#allocation9 + $0x1f8] sm:$0xff]
    %v2031 = vld [vmem:[%s6] sm:$0xf]
    %v2032 = vld [vmem:[#allocation3] sm:$0xff]
    %v2033 = vld [vmem:[#allocation3 + $0x8] sm:$0xff]
    %v2034 = vld [vmem:[#allocation3 + $0x10] sm:$0xff]
    %v2035 = vld [vmem:[#allocation3 + $0x18] sm:$0xff]
    %v2036 = vld [vmem:[#allocation3 + $0x20] sm:$0xff]
    %v2037 = vld [vmem:[#allocation3 + $0x28] sm:$0xff]
    %v2038 = vld [vmem:[#allocation3 + $0x30] sm:$0xff]
    %v2039 = vld [vmem:[#allocation3 + $0x38] sm:$0xff]
    %v2041 = vlaneseq
    %v2042 = vshrl.u32 %v2041, 7
    %v2043 = vsub.s32 0, %v2042
    %v2044 = vrot.slane %v2031, %v2043
    %v2045 = vlaneseq
    %v2046 = vshrl.u32 %v2045, 7
    %v2047 = vsub.s32 1, %v2046
    %v2048 = vrot.slane %v2031, %v2047
    %v2049 = vlaneseq
    %v2050 = vshrl.u32 %v2049, 7
    %v2051 = vsub.s32 2, %v2050
    %v2052 = vrot.slane %v2031, %v2051
    %v2053 = vlaneseq
    %v2054 = vshrl.u32 %v2053, 7
    %v2055 = vsub.s32 3, %v2054
    %v2056 = vrot.slane %v2031, %v2055
    %2061 = vmatprep.subr.mxu0 %v1904
    %2062 = vmatpush1.msra.mxu0 %v1903
    %2063 = vmatprep.subr.mxu0 %v1908
    %2064 = vmatpush1.msra.mxu0 %v1907
    %2065 = vmatprep.subr.mxu0 %v1912
    %2066 = vmatpush1.msra.mxu0 %v1911
    %2067 = vmatprep.subr.mxu0 %v1916
    %2068 = vmatpush1.msra.mxu0 %v1915
    %2069 = vmatprep.subr.mxu0 %v1920
    %2070 = vmatpush1.msra.mxu0 %v1919
    %2071 = vmatprep.subr.mxu0 %v1924
    %2072 = vmatpush1.msra.mxu0 %v1923
    %2073 = vmatprep.subr.mxu0 %v1928
    %2074 = vmatpush1.msra.mxu0 %v1927
    %2075 = vmatprep.subr.mxu0 %v1932
    %2076 = vmatpush1.msra.mxu0 %v1931
    %2077 = vmatprep.subr.mxu0 %v1936
    %2078 = vmatpush1.msra.mxu0 %v1935
    %2079 = vmatprep.subr.mxu0 %v1940
    %2080 = vmatpush1.msra.mxu0 %v1939
    %2081 = vmatprep.subr.mxu0 %v1944
    %2082 = vmatpush1.msra.mxu0 %v1943
    %2083 = vmatprep.subr.mxu0 %v1948
    %2084 = vmatpush1.msra.mxu0 %v1947
    %2085 = vmatprep.subr.mxu0 %v1952
    %2086 = vmatpush1.msra.mxu0 %v1951
    %2087 = vmatprep.subr.mxu0 %v1956
    %2088 = vmatpush1.msra.mxu0 %v1955
    %2089 = vmatprep.subr.mxu0 %v1960
    %2090 = vmatpush1.msra.mxu0 %v1959
    %2091 = vmatprep.subr.mxu0 %v1964
    %2092 = vmatpush1.msra.mxu0 %v1963
    %2093 = vmatprep.subr.mxu0 0.0
    %2094 = vmatpush1.msra.mxu0 0.0
    %2095 = vmatprep.subr.mxu0 0.0
    %2096 = vmatpush1.msra.mxu0 0.0
    %2097 = vmatprep.subr.mxu0 0.0
    %2098 = vmatpush1.msra.mxu0 0.0
    %2099 = vmatprep.subr.mxu0 0.0
    %2100 = vmatpush1.msra.mxu0 0.0
    %2101 = vmatprep.subr.mxu0 0.0
    %2102 = vmatpush1.msra.mxu0 0.0
    %2103 = vmatprep.subr.mxu0 0.0
    %2104 = vmatpush1.msra.mxu0 0.0
    %2105 = vmatprep.subr.mxu0 0.0
    %2106 = vmatpush1.msra.mxu0 0.0
    %2107 = vmatprep.subr.mxu0 0.0
    %2108 = vmatpush1.msra.mxu0 0.0
    %2109 = vmatprep.subr.mxu0 0.0
    %2110 = vmatpush1.msra.mxu0 0.0
    %2111 = vmatprep.subr.mxu0 0.0
    %2112 = vmatpush1.msra.mxu0 0.0
    %2113 = vmatprep.subr.mxu0 0.0
    %2114 = vmatpush1.msra.mxu0 0.0
    %2115 = vmatprep.subr.mxu0 0.0
    %2116 = vmatpush1.msra.mxu0 0.0
    %2117 = vmatprep.subr.mxu0 0.0
    %2118 = vmatpush1.msra.mxu0 0.0
    %2119 = vmatprep.subr.mxu0 0.0
    %2120 = vmatpush1.msra.mxu0 0.0
    %2121 = vmatprep.subr.mxu0 0.0
    %2122 = vmatpush1.msra.mxu0 0.0
    %2123 = vmatprep.subr.mxu0 0.0
    %2124 = vmatpush1.msra.mxu0 0.0
    %2125 = vmatprep.mubr.f32.mxu0 0.0
    %2126 = vmatmul.mubr.f32.gmra.mrb[0].mxu0 %v2032
    %v2127 = vpop.f32.mrb[0].mxu0
    %v2128 = vadd.f32 %v2044, %v2127
    %v2129 = vpop.f32.mrb[0].mxu0
    %v2130 = vadd.f32 %v2048, %v2129
    %2131 = vmatprep.mubr.f32.mxu0 0.0
    %2132 = vmatmul.mubr.f32.gmra.mrb[0].mxu0 %v2033
    %v2133 = vpop.f32.mrb[0].mxu0
    %v2134 = vadd.f32 %v2044, %v2133
    %v2135 = vpop.f32.mrb[0].mxu0
    %v2136 = vadd.f32 %v2048, %v2135
    %2137 = vmatprep.mubr.f32.mxu0 0.0
    %2138 = vmatmul.mubr.f32.gmra.mrb[0].mxu0 %v2034
    %v2139 = vpop.f32.mrb[0].mxu0
    %v2140 = vadd.f32 %v2044, %v2139
    %v2141 = vpop.f32.mrb[0].mxu0
    %v2142 = vadd.f32 %v2048, %v2141
    %2143 = vmatprep.mubr.f32.mxu0 0.0
    %2144 = vmatmul.mubr.f32.gmra.mrb[0].mxu0 %v2035
    %v2145 = vpop.f32.mrb[0].mxu0
    %v2146 = vadd.f32 %v2044, %v2145
    %v2147 = vpop.f32.mrb[0].mxu0
    %v2148 = vadd.f32 %v2048, %v2147
    %2149 = vmatprep.mubr.f32.mxu0 0.0
    %2150 = vmatmul.mubr.f32.gmra.mrb[0].mxu0 %v2036
    %v2151 = vpop.f32.mrb[0].mxu0
    %v2152 = vadd.f32 %v2044, %v2151
    %v2153 = vpop.f32.mrb[0].mxu0
    %v2154 = vadd.f32 %v2048, %v2153
    %2155 = vmatprep.mubr.f32.mxu0 0.0
    %2156 = vmatmul.mubr.f32.gmra.mrb[0].mxu0 %v2037
    %v2157 = vpop.f32.mrb[0].mxu0
    %v2158 = vadd.f32 %v2044, %v2157
    %v2159 = vpop.f32.mrb[0].mxu0
    %v2160 = vadd.f32 %v2048, %v2159
    %2161 = vmatprep.mubr.f32.mxu0 0.0
    %2162 = vmatmul.mubr.f32.gmra.mrb[0].mxu0 %v2038
    %v2163 = vpop.f32.mrb[0].mxu0
    %v2164 = vadd.f32 %v2044, %v2163
    %v2165 = vpop.f32.mrb[0].mxu0
    %v2166 = vadd.f32 %v2048, %v2165
    %2167 = vmatprep.mubr.f32.mxu0 0.0
    %2168 = vmatmul.mubr.f32.gmra.mrb[0].mxu0 %v2039
    %v2169 = vpop.f32.mrb[0].mxu0
    %v2170 = vadd.f32 %v2044, %v2169
    %v2171 = vpop.f32.mrb[0].mxu0
    %v2172 = vadd.f32 %v2048, %v2171
    %2173 = vdwg.mxu0
    %2174 = vmatprep.subr.mxu0 %v1906
    %2175 = vmatpush1.msra.mxu0 %v1905
    %2176 = vmatprep.subr.mxu0 %v1910
    %2177 = vmatpush1.msra.mxu0 %v1909
    %2178 = vmatprep.subr.mxu0 %v1914
    %2179 = vmatpush1.msra.mxu0 %v1913
    %2180 = vmatprep.subr.mxu0 %v1918
    %2181 = vmatpush1.msra.mxu0 %v1917
    %2182 = vmatprep.subr.mxu0 %v1922
    %2183 = vmatpush1.msra.mxu0 %v1921
    %2184 = vmatprep.subr.mxu0 %v1926
    %2185 = vmatpush1.msra.mxu0 %v1925
    %2186 = vmatprep.subr.mxu0 %v1930
    %2187 = vmatpush1.msra.mxu0 %v1929
    %2188 = vmatprep.subr.mxu0 %v1934
    %2189 = vmatpush1.msra.mxu0 %v1933
    %2190 = vmatprep.subr.mxu0 %v1938
    %2191 = vmatpush1.msra.mxu0 %v1937
    %2192 = vmatprep.subr.mxu0 %v1942
    %2193 = vmatpush1.msra.mxu0 %v1941
    %2194 = vmatprep.subr.mxu0 %v1946
    %2195 = vmatpush1.msra.mxu0 %v1945
    %2196 = vmatprep.subr.mxu0 %v1950
    %2197 = vmatpush1.msra.mxu0 %v1949
    %2198 = vmatprep.subr.mxu0 %v1954
    %2199 = vmatpush1.msra.mxu0 %v1953
    %2200 = vmatprep.subr.mxu0 %v1958
    %2201 = vmatpush1.msra.mxu0 %v1957
    %2202 = vmatprep.subr.mxu0 %v1962
    %2203 = vmatpush1.msra.mxu0 %v1961
    %2204 = vmatprep.subr.mxu0 %v1966
    %2205 = vmatpush1.msra.mxu0 %v1965
    %2206 = vmatprep.subr.mxu0 0.0
    %2207 = vmatpush1.msra.mxu0 0.0
    %2208 = vmatprep.subr.mxu0 0.0
    %2209 = vmatpush1.msra.mxu0 0.0
    %2210 = vmatprep.subr.mxu0 0.0
    %2211 = vmatpush1.msra.mxu0 0.0
    %2212 = vmatprep.subr.mxu0 0.0
    %2213 = vmatpush1.msra.mxu0 0.0
    %2214 = vmatprep.subr.mxu0 0.0
    %2215 = vmatpush1.msra.mxu0 0.0
    %2216 = vmatprep.subr.mxu0 0.0
    %2217 = vmatpush1.msra.mxu0 0.0
    %2218 = vmatprep.subr.mxu0 0.0
    %2219 = vmatpush1.msra.mxu0 0.0
    %2220 = vmatprep.subr.mxu0 0.0
    %2221 = vmatpush1.msra.mxu0 0.0
    %2222 = vmatprep.subr.mxu0 0.0
    %2223 = vmatpush1.msra.mxu0 0.0
    %2224 = vmatprep.subr.mxu0 0.0
    %2225 = vmatpush1.msra.mxu0 0.0
    %2226 = vmatprep.subr.mxu0 0.0
    %2227 = vmatpush1.msra.mxu0 0.0
    %2228 = vmatprep.subr.mxu0 0.0
    %2229 = vmatpush1.msra.mxu0 0.0
    %2230 = vmatprep.subr.mxu0 0.0
    %2231 = vmatpush1.msra.mxu0 0.0
    %2232 = vmatprep.subr.mxu0 0.0
    %2233 = vmatpush1.msra.mxu0 0.0
    %2234 = vmatprep.subr.mxu0 0.0
    %2235 = vmatpush1.msra.mxu0 0.0
    %2236 = vmatprep.subr.mxu0 0.0
    %2237 = vmatpush1.msra.mxu0 0.0
    %2238 = vmatprep.mubr.f32.mxu0 0.0
    %2239 = vmatmul.mubr.f32.gmra.mrb[0].mxu0 %v2032
    %v2240 = vpop.f32.mrb[0].mxu0
    %v2241 = vadd.f32 %v2052, %v2240
    %v2242 = vpop.f32.mrb[0].mxu0
    %v2243 = vadd.f32 %v2056, %v2242
    %2244 = vmatprep.mubr.f32.mxu0 0.0
    %2245 = vmatmul.mubr.f32.gmra.mrb[0].mxu0 %v2033
    %v2246 = vpop.f32.mrb[0].mxu0
    %v2247 = vadd.f32 %v2052, %v2246
    %v2248 = vpop.f32.mrb[0].mxu0
    %v2249 = vadd.f32 %v2056, %v2248
    %2250 = vmatprep.mubr.f32.mxu0 0.0
    %2251 = vmatmul.mubr.f32.gmra.mrb[0].mxu0 %v2034
    %v2252 = vpop.f32.mrb[0].mxu0
    %v2253 = vadd.f32 %v2052, %v2252
    %v2254 = vpop.f32.mrb[0].mxu0
    %v2255 = vadd.f32 %v2056, %v2254
    %2256 = vmatprep.mubr.f32.mxu0 0.0
    %2257 = vmatmul.mubr.f32.gmra.mrb[0].mxu0 %v2035
    %v2258 = vpop.f32.mrb[0].mxu0
    %v2259 = vadd.f32 %v2052, %v2258
    %v2260 = vpop.f32.mrb[0].mxu0
    %v2261 = vadd.f32 %v2056, %v2260
    %2262 = vmatprep.mubr.f32.mxu0 0.0
    %2263 = vmatmul.mubr.f32.gmra.mrb[0].mxu0 %v2036
    %v2264 = vpop.f32.mrb[0].mxu0
    %v2265 = vadd.f32 %v2052, %v2264
    %v2266 = vpop.f32.mrb[0].mxu0
    %v2267 = vadd.f32 %v2056, %v2266
    %2268 = vmatprep.mubr.f32.mxu0 0.0
    %2269 = vmatmul.mubr.f32.gmra.mrb[0].mxu0 %v2037
    %v2270 = vpop.f32.mrb[0].mxu0
    %v2271 = vadd.f32 %v2052, %v2270
    %v2272 = vpop.f32.mrb[0].mxu0
    %v2273 = vadd.f32 %v2056, %v2272
    %2274 = vmatprep.mubr.f32.mxu0 0.0
    %2275 = vmatmul.mubr.f32.gmra.mrb[0].mxu0 %v2038
    %v2276 = vpop.f32.mrb[0].mxu0
    %v2277 = vadd.f32 %v2052, %v2276
    %v2278 = vpop.f32.mrb[0].mxu0
    %v2279 = vadd.f32 %v2056, %v2278
    %2280 = vmatprep.mubr.f32.mxu0 0.0
    %2281 = vmatmul.mubr.f32.gmra.mrb[0].mxu0 %v2039
    %v2282 = vpop.f32.mrb[0].mxu0
    %v2283 = vadd.f32 %v2052, %v2282
    %v2284 = vpop.f32.mrb[0].mxu0
    %v2285 = vadd.f32 %v2056, %v2284
    %2286 = vdwg.mxu0
    %2287 = vst [vmem:[#allocation2] sm:$0xff] %v2128
    %2288 = vst [vmem:[#allocation2 + $0x8] sm:$0xff] %v2130
    %2289 = vst [vmem:[#allocation2 + $0x10] sm:$0xff] %v2241
    %2290 = vst [vmem:[#allocation2 + $0x18] sm:$0xff] %v2243
    %2291 = vst [vmem:[#allocation2 + $0x20] sm:$0xff] %v2134
    %2292 = vst [vmem:[#allocation2 + $0x28] sm:$0xff] %v2136
    %2293 = vst [vmem:[#allocation2 + $0x30] sm:$0xff] %v2247
    %2294 = vst [vmem:[#allocation2 + $0x38] sm:$0xff] %v2249
    %2295 = vst [vmem:[#allocation2 + $0x40] sm:$0xff] %v2140
    %2296 = vst [vmem:[#allocation2 + $0x48] sm:$0xff] %v2142
    %2297 = vst [vmem:[#allocation2 + $0x50] sm:$0xff] %v2253
    %2298 = vst [vmem:[#allocation2 + $0x58] sm:$0xff] %v2255
    %2299 = vst [vmem:[#allocation2 + $0x60] sm:$0xff] %v2146
    %2300 = vst [vmem:[#allocation2 + $0x68] sm:$0xff] %v2148
    %2301 = vst [vmem:[#allocation2 + $0x70] sm:$0xff] %v2259
    %2302 = vst [vmem:[#allocation2 + $0x78] sm:$0xff] %v2261
    %2303 = vst [vmem:[#allocation2 + $0x80] sm:$0xff] %v2152
    %2304 = vst [vmem:[#allocation2 + $0x88] sm:$0xff] %v2154
    %2305 = vst [vmem:[#allocation2 + $0x90] sm:$0xff] %v2265
    %2306 = vst [vmem:[#allocation2 + $0x98] sm:$0xff] %v2267
    %2307 = vst [vmem:[#allocation2 + $0xa0] sm:$0xff] %v2158
    %2308 = vst [vmem:[#allocation2 + $0xa8] sm:$0xff] %v2160
    %2309 = vst [vmem:[#allocation2 + $0xb0] sm:$0xff] %v2271
    %2310 = vst [vmem:[#allocation2 + $0xb8] sm:$0xff] %v2273
    %2311 = vst [vmem:[#allocation2 + $0xc0] sm:$0xff] %v2164
    %2312 = vst [vmem:[#allocation2 + $0xc8] sm:$0xff] %v2166
    %2313 = vst [vmem:[#allocation2 + $0xd0] sm:$0xff] %v2277
    %2314 = vst [vmem:[#allocation2 + $0xd8] sm:$0xff] %v2279
    %2315 = vst [vmem:[#allocation2 + $0xe0] sm:$0xff] %v2170
    %2316 = vst [vmem:[#allocation2 + $0xe8] sm:$0xff] %v2172
    %2317 = vst [vmem:[#allocation2 + $0xf0] sm:$0xff] %v2283
    %2318 = vst [vmem:[#allocation2 + $0xf8] sm:$0xff] %v2285
    %v2319 = vld [vmem:[#allocation2] sm:$0xff]
    %v2320 = vld [vmem:[#allocation2 + $0x8] sm:$0xff]
    %v2321 = vld [vmem:[#allocation2 + $0x10] sm:$0xff]
    %v2322 = vld [vmem:[#allocation2 + $0x18] sm:$0xff]
    %2323 = vmatprep.subr.mxu0 %v1968
    %2324 = vmatpush1.msra.mxu0 %v1967
    %2325 = vmatprep.subr.mxu0 %v1972
    %2326 = vmatpush1.msra.mxu0 %v1971
    %2327 = vmatprep.subr.mxu0 %v1976
    %2328 = vmatpush1.msra.mxu0 %v1975
    %2329 = vmatprep.subr.mxu0 %v1980
    %2330 = vmatpush1.msra.mxu0 %v1979
    %2331 = vmatprep.subr.mxu0 %v1984
    %2332 = vmatpush1.msra.mxu0 %v1983
    %2333 = vmatprep.subr.mxu0 %v1988
    %2334 = vmatpush1.msra.mxu0 %v1987
    %2335 = vmatprep.subr.mxu0 %v1992
    %2336 = vmatpush1.msra.mxu0 %v1991
    %2337 = vmatprep.subr.mxu0 %v1996
    %2338 = vmatpush1.msra.mxu0 %v1995
    %2339 = vmatprep.subr.mxu0 %v2000
    %2340 = vmatpush1.msra.mxu0 %v1999
    %2341 = vmatprep.subr.mxu0 %v2004
    %2342 = vmatpush1.msra.mxu0 %v2003
    %2343 = vmatprep.subr.mxu0 %v2008
    %2344 = vmatpush1.msra.mxu0 %v2007
    %2345 = vmatprep.subr.mxu0 %v2012
    %2346 = vmatpush1.msra.mxu0 %v2011
    %2347 = vmatprep.subr.mxu0 %v2016
    %2348 = vmatpush1.msra.mxu0 %v2015
    %2349 = vmatprep.subr.mxu0 %v2020
    %2350 = vmatpush1.msra.mxu0 %v2019
    %2351 = vmatprep.subr.mxu0 %v2024
    %2352 = vmatpush1.msra.mxu0 %v2023
    %2353 = vmatprep.subr.mxu0 %v2028
    %2354 = vmatpush1.msra.mxu0 %v2027
    %2355 = vmatprep.subr.mxu0 0.0
    %2356 = vmatpush1.msra.mxu0 0.0
    %2357 = vmatprep.subr.mxu0 0.0
    %2358 = vmatpush1.msra.mxu0 0.0
    %2359 = vmatprep.subr.mxu0 0.0
    %2360 = vmatpush1.msra.mxu0 0.0
    %2361 = vmatprep.subr.mxu0 0.0
    %2362 = vmatpush1.msra.mxu0 0.0
    %2363 = vmatprep.subr.mxu0 0.0
    %2364 = vmatpush1.msra.mxu0 0.0
    %2365 = vmatprep.subr.mxu0 0.0
    %2366 = vmatpush1.msra.mxu0 0.0
    %2367 = vmatprep.subr.mxu0 0.0
    %2368 = vmatpush1.msra.mxu0 0.0
    %2369 = vmatprep.subr.mxu0 0.0
    %2370 = vmatpush1.msra.mxu0 0.0
    %2371 = vmatprep.subr.mxu0 0.0
    %2372 = vmatpush1.msra.mxu0 0.0
    %2373 = vmatprep.subr.mxu0 0.0
    %2374 = vmatpush1.msra.mxu0 0.0
    %2375 = vmatprep.subr.mxu0 0.0
    %2376 = vmatpush1.msra.mxu0 0.0
    %2377 = vmatprep.subr.mxu0 0.0
    %2378 = vmatpush1.msra.mxu0 0.0
    %2379 = vmatprep.subr.mxu0 0.0
    %2380 = vmatpush1.msra.mxu0 0.0
    %2381 = vmatprep.subr.mxu0 0.0
    %2382 = vmatpush1.msra.mxu0 0.0
    %2383 = vmatprep.subr.mxu0 0.0
    %2384 = vmatpush1.msra.mxu0 0.0
    %2385 = vmatprep.subr.mxu0 0.0
    %2386 = vmatpush1.msra.mxu0 0.0
    %2387 = vmatprep.mubr.f32.mxu0 0.0
    %2388 = vmatmul.mubr.f32.gmra.mrb[0].mxu0 0.0
    %v2389 = vpop.f32.mrb[0].mxu0
    %v2390 = vadd.f32 0.0, %v2389
    %v2391 = vpop.f32.mrb[0].mxu0
    %v2392 = vadd.f32 0.0, %v2391
    %2393 = vdwg.mxu0
    %2394 = vmatprep.subr.mxu0 %v1970
    %2395 = vmatpush1.msra.mxu0 %v1969
    %2396 = vmatprep.subr.mxu0 %v1974
    %2397 = vmatpush1.msra.mxu0 %v1973
    %2398 = vmatprep.subr.mxu0 %v1978
    %2399 = vmatpush1.msra.mxu0 %v1977
    %2400 = vmatprep.subr.mxu0 %v1982
    %2401 = vmatpush1.msra.mxu0 %v1981
    %2402 = vmatprep.subr.mxu0 %v1986
    %2403 = vmatpush1.msra.mxu0 %v1985
    %2404 = vmatprep.subr.mxu0 %v1990
    %2405 = vmatpush1.msra.mxu0 %v1989
    %2406 = vmatprep.subr.mxu0 %v1994
    %2407 = vmatpush1.msra.mxu0 %v1993
    %2408 = vmatprep.subr.mxu0 %v1998
    %2409 = vmatpush1.msra.mxu0 %v1997
    %2410 = vmatprep.subr.mxu0 %v2002
    %2411 = vmatpush1.msra.mxu0 %v2001
    %2412 = vmatprep.subr.mxu0 %v2006
    %2413 = vmatpush1.msra.mxu0 %v2005
    %2414 = vmatprep.subr.mxu0 %v2010
    %2415 = vmatpush1.msra.mxu0 %v2009
    %2416 = vmatprep.subr.mxu0 %v2014
    %2417 = vmatpush1.msra.mxu0 %v2013
    %2418 = vmatprep.subr.mxu0 %v2018
    %2419 = vmatpush1.msra.mxu0 %v2017
    %2420 = vmatprep.subr.mxu0 %v2022
    %2421 = vmatpush1.msra.mxu0 %v2021
    %2422 = vmatprep.subr.mxu0 %v2026
    %2423 = vmatpush1.msra.mxu0 %v2025
    %2424 = vmatprep.subr.mxu0 %v2030
    %2425 = vmatpush1.msra.mxu0 %v2029
    %2426 = vmatprep.subr.mxu0 0.0
    %2427 = vmatpush1.msra.mxu0 0.0
    %2428 = vmatprep.subr.mxu0 0.0
    %2429 = vmatpush1.msra.mxu0 0.0
    %2430 = vmatprep.subr.mxu0 0.0
    %2431 = vmatpush1.msra.mxu0 0.0
    %2432 = vmatprep.subr.mxu0 0.0
    %2433 = vmatpush1.msra.mxu0 0.0
    %2434 = vmatprep.subr.mxu0 0.0
    %2435 = vmatpush1.msra.mxu0 0.0
    %2436 = vmatprep.subr.mxu0 0.0
    %2437 = vmatpush1.msra.mxu0 0.0
    %2438 = vmatprep.subr.mxu0 0.0
    %2439 = vmatpush1.msra.mxu0 0.0
    %2440 = vmatprep.subr.mxu0 0.0
    %2441 = vmatpush1.msra.mxu0 0.0
    %2442 = vmatprep.subr.mxu0 0.0
    %2443 = vmatpush1.msra.mxu0 0.0
    %2444 = vmatprep.subr.mxu0 0.0
    %2445 = vmatpush1.msra.mxu0 0.0
    %2446 = vmatprep.subr.mxu0 0.0
    %2447 = vmatpush1.msra.mxu0 0.0
    %2448 = vmatprep.subr.mxu0 0.0
    %2449 = vmatpush1.msra.mxu0 0.0
    %2450 = vmatprep.subr.mxu0 0.0
    %2451 = vmatpush1.msra.mxu0 0.0
    %2452 = vmatprep.subr.mxu0 0.0
    %2453 = vmatpush1.msra.mxu0 0.0
    %2454 = vmatprep.subr.mxu0 0.0
    %2455 = vmatpush1.msra.mxu0 0.0
    %2456 = vmatprep.subr.mxu0 0.0
    %2457 = vmatpush1.msra.mxu0 0.0
    %2458 = vmatprep.mubr.f32.mxu0 0.0
    %2459 = vmatmul.mubr.f32.gmra.mrb[0].mxu0 0.0
    %v2460 = vpop.f32.mrb[0].mxu0
    %v2461 = vadd.f32 0.0, %v2460
    %v2462 = vpop.f32.mrb[0].mxu0
    %v2463 = vadd.f32 0.0, %v2462
    %2464 = vdwg.mxu0
    %v2465 = vadd.f32 %v2319, %v2390
    %v2466 = vadd.f32 %v2320, %v2392
    %v2467 = vadd.f32 %v2321, %v2461
    %v2468 = vadd.f32 %v2322, %v2463
    %v2469 = vxor.u32 %v2465, 2147483648
    %v2470 = vmul.f32 %v2469, 1.442695
    %v2471 = vpow.pop %v2470
    %v2472 = vadd.f32 %v2471, 1.0
    %v2473 = vrcp.pop %v2472
    %v2474 = vmul.f32 1.0, %v2473
    %v2475 = vxor.u32 %v2466, 2147483648
    %v2476 = vmul.f32 %v2475, 1.442695
    %v2477 = vpow.pop %v2476
    %v2478 = vadd.f32 %v2477, 1.0
    %v2479 = vrcp.pop %v2478
    %v2480 = vmul.f32 1.0, %v2479
    %v2481 = vtanh.pop %v2467
    %v2482 = vxor.u32 %v2468, 2147483648
    %v2483 = vmul.f32 %v2482, 1.442695
    %v2484 = vpow.pop %v2483
    %v2485 = vadd.f32 %v2484, 1.0
    %v2486 = vrcp.pop %v2485
    %v2487 = vmul.f32 1.0, %v2486
    %v2488 = vmul.f32 %v2480, 0.0
    %v2489 = vmul.f32 %v2474, %v2481
    %v2490 = vadd.f32 %v2488, %v2489
    %v2491 = vtanh.pop %v2490
    %v2492 = vmul.f32 %v2487, %v2491
    %2493 = vst [vmem:[#allocation3] sm:$0xff] %v2492
    %v2494 = vld [vmem:[#allocation2 + $0x20] sm:$0xff]
    %v2495 = vld [vmem:[#allocation2 + $0x28] sm:$0xff]
    %v2496 = vld [vmem:[#allocation2 + $0x30] sm:$0xff]
    %v2497 = vld [vmem:[#allocation2 + $0x38] sm:$0xff]
    %2498 = vmatprep.subr.mxu0 %v1968
    %2499 = vmatpush1.msra.mxu0 %v1967
    %2500 = vmatprep.subr.mxu0 %v1972
    %2501 = vmatpush1.msra.mxu0 %v1971
    %2502 = vmatprep.subr.mxu0 %v1976
    %2503 = vmatpush1.msra.mxu0 %v1975
    %2504 = vmatprep.subr.mxu0 %v1980
    %2505 = vmatpush1.msra.mxu0 %v1979
    %2506 = vmatprep.subr.mxu0 %v1984
    %2507 = vmatpush1.msra.mxu0 %v1983
    %2508 = vmatprep.subr.mxu0 %v1988
    %2509 = vmatpush1.msra.mxu0 %v1987
    %2510 = vmatprep.subr.mxu0 %v1992
    %2511 = vmatpush1.msra.mxu0 %v1991
    %2512 = vmatprep.subr.mxu0 %v1996
    %2513 = vmatpush1.msra.mxu0 %v1995
    %2514 = vmatprep.subr.mxu0 %v2000
    %2515 = vmatpush1.msra.mxu0 %v1999
    %2516 = vmatprep.subr.mxu0 %v2004
    %2517 = vmatpush1.msra.mxu0 %v2003
    %2518 = vmatprep.subr.mxu0 %v2008
    %2519 = vmatpush1.msra.mxu0 %v2007
    %2520 = vmatprep.subr.mxu0 %v2012
    %2521 = vmatpush1.msra.mxu0 %v2011
    %2522 = vmatprep.subr.mxu0 %v2016
    %2523 = vmatpush1.msra.mxu0 %v2015
    %2524 = vmatprep.subr.mxu0 %v2020
    %2525 = vmatpush1.msra.mxu0 %v2019
    %2526 = vmatprep.subr.mxu0 %v2024
    %2527 = vmatpush1.msra.mxu0 %v2023
    %2528 = vmatprep.subr.mxu0 %v2028
    %2529 = vmatpush1.msra.mxu0 %v2027
    %2530 = vmatprep.subr.mxu0 0.0
    %2531 = vmatpush1.msra.mxu0 0.0
    %2532 = vmatprep.subr.mxu0 0.0
    %2533 = vmatpush1.msra.mxu0 0.0
    %2534 = vmatprep.subr.mxu0 0.0
    %2535 = vmatpush1.msra.mxu0 0.0
    %2536 = vmatprep.subr.mxu0 0.0
    %2537 = vmatpush1.msra.mxu0 0.0
    %2538 = vmatprep.subr.mxu0 0.0
    %2539 = vmatpush1.msra.mxu0 0.0
    %2540 = vmatprep.subr.mxu0 0.0
    %2541 = vmatpush1.msra.mxu0 0.0
    %2542 = vmatprep.subr.mxu0 0.0
    %2543 = vmatpush1.msra.mxu0 0.0
    %2544 = vmatprep.subr.mxu0 0.0
    %2545 = vmatpush1.msra.mxu0 0.0
    %2546 = vmatprep.subr.mxu0 0.0
    %2547 = vmatpush1.msra.mxu0 0.0
    %2548 = vmatprep.subr.mxu0 0.0
    %2549 = vmatpush1.msra.mxu0 0.0
    %2550 = vmatprep.subr.mxu0 0.0
    %2551 = vmatpush1.msra.mxu0 0.0
    %2552 = vmatprep.subr.mxu0 0.0
    %2553 = vmatpush1.msra.mxu0 0.0
    %2554 = vmatprep.subr.mxu0 0.0
    %2555 = vmatpush1.msra.mxu0 0.0
    %2556 = vmatprep.subr.mxu0 0.0
    %2557 = vmatpush1.msra.mxu0 0.0
    %2558 = vmatprep.subr.mxu0 0.0
    %2559 = vmatpush1.msra.mxu0 0.0
    %2560 = vmatprep.subr.mxu0 0.0
    %2561 = vmatpush1.msra.mxu0 0.0
    %2562 = vmatprep.mubr.f32.mxu0 0.0
    %2563 = vmatmul.mubr.f32.gmra.mrb[0].mxu0 %v2492
    %v2564 = vpop.f32.mrb[0].mxu0
    %v2565 = vadd.f32 0.0, %v2564
    %v2566 = vpop.f32.mrb[0].mxu0
    %v2567 = vadd.f32 0.0, %v2566
    %2568 = vdwg.mxu0
    %2569 = vmatprep.subr.mxu0 %v1970
    %2570 = vmatpush1.msra.mxu0 %v1969
    %2571 = vmatprep.subr.mxu0 %v1974
    %2572 = vmatpush1.msra.mxu0 %v1973
    %2573 = vmatprep.subr.mxu0 %v1978
    %2574 = vmatpush1.msra.mxu0 %v1977
    %2575 = vmatprep.subr.mxu0 %v1982
    %2576 = vmatpush1.msra.mxu0 %v1981
    %2577 = vmatprep.subr.mxu0 %v1986
    %2578 = vmatpush1.msra.mxu0 %v1985
    %2579 = vmatprep.subr.mxu0 %v1990
    %2580 = vmatpush1.msra.mxu0 %v1989
    %2581 = vmatprep.subr.mxu0 %v1994
    %2582 = vmatpush1.msra.mxu0 %v1993
    %2583 = vmatprep.subr.mxu0 %v1998
    %2584 = vmatpush1.msra.mxu0 %v1997
    %2585 = vmatprep.subr.mxu0 %v2002
    %2586 = vmatpush1.msra.mxu0 %v2001
    %2587 = vmatprep.subr.mxu0 %v2006
    %2588 = vmatpush1.msra.mxu0 %v2005
    %2589 = vmatprep.subr.mxu0 %v2010
    %2590 = vmatpush1.msra.mxu0 %v2009
    %2591 = vmatprep.subr.mxu0 %v2014
    %2592 = vmatpush1.msra.mxu0 %v2013
    %2593 = vmatprep.subr.mxu0 %v2018
    %2594 = vmatpush1.msra.mxu0 %v2017
    %2595 = vmatprep.subr.mxu0 %v2022
    %2596 = vmatpush1.msra.mxu0 %v2021
    %2597 = vmatprep.subr.mxu0 %v2026
    %2598 = vmatpush1.msra.mxu0 %v2025
    %2599 = vmatprep.subr.mxu0 %v2030
    %2600 = vmatpush1.msra.mxu0 %v2029
    %2601 = vmatprep.subr.mxu0 0.0
    %2602 = vmatpush1.msra.mxu0 0.0
    %2603 = vmatprep.subr.mxu0 0.0
    %2604 = vmatpush1.msra.mxu0 0.0
    %2605 = vmatprep.subr.mxu0 0.0
    %2606 = vmatpush1.msra.mxu0 0.0
    %2607 = vmatprep.subr.mxu0 0.0
    %2608 = vmatpush1.msra.mxu0 0.0
    %2609 = vmatprep.subr.mxu0 0.0
    %2610 = vmatpush1.msra.mxu0 0.0
    %2611 = vmatprep.subr.mxu0 0.0
    %2612 = vmatpush1.msra.mxu0 0.0
    %2613 = vmatprep.subr.mxu0 0.0
    %2614 = vmatpush1.msra.mxu0 0.0
    %2615 = vmatprep.subr.mxu0 0.0
    %2616 = vmatpush1.msra.mxu0 0.0
    %2617 = vmatprep.subr.mxu0 0.0
    %2618 = vmatpush1.msra.mxu0 0.0
    %2619 = vmatprep.subr.mxu0 0.0
    %2620 = vmatpush1.msra.mxu0 0.0
    %2621 = vmatprep.subr.mxu0 0.0
    %2622 = vmatpush1.msra.mxu0 0.0
    %2623 = vmatprep.subr.mxu0 0.0
    %2624 = vmatpush1.msra.mxu0 0.0
    %2625 = vmatprep.subr.mxu0 0.0
    %2626 = vmatpush1.msra.mxu0 0.0
    %2627 = vmatprep.subr.mxu0 0.0
    %2628 = vmatpush1.msra.mxu0 0.0
    %2629 = vmatprep.subr.mxu0 0.0
    %2630 = vmatpush1.msra.mxu0 0.0
    %2631 = vmatprep.subr.mxu0 0.0
    %2632 = vmatpush1.msra.mxu0 0.0
    %2633 = vmatprep.mubr.f32.mxu0 0.0
    %2634 = vmatmul.mubr.f32.gmra.mrb[0].mxu0 %v2492
    %v2635 = vpop.f32.mrb[0].mxu0
    %v2636 = vadd.f32 0.0, %v2635
    %v2637 = vpop.f32.mrb[0].mxu0
    %v2638 = vadd.f32 0.0, %v2637
    %2639 = vdwg.mxu0
    %v2640 = vadd.f32 %v2494, %v2565
    %v2641 = vadd.f32 %v2495, %v2567
    %v2642 = vadd.f32 %v2496, %v2636
    %v2643 = vadd.f32 %v2497, %v2638
    %v2644 = vxor.u32 %v2640, 2147483648
    %v2645 = vmul.f32 %v2644, 1.442695
    %v2646 = vpow.pop %v2645
    %v2647 = vadd.f32 %v2646, 1.0
    %v2648 = vrcp.pop %v2647
    %v2649 = vmul.f32 1.0, %v2648
    %v2650 = vxor.u32 %v2641, 2147483648
    %v2651 = vmul.f32 %v2650, 1.442695
    %v2652 = vpow.pop %v2651
    %v2653 = vadd.f32 %v2652, 1.0
    %v2654 = vrcp.pop %v2653
    %v2655 = vmul.f32 1.0, %v2654
    %v2656 = vtanh.pop %v2642
    %v2657 = vxor.u32 %v2643, 2147483648
    %v2658 = vmul.f32 %v2657, 1.442695
    %v2659 = vpow.pop %v2658
    %v2660 = vadd.f32 %v2659, 1.0
    %v2661 = vrcp.pop %v2660
    %v2662 = vmul.f32 1.0, %v2661
    %v2663 = vmul.f32 %v2655, %v2490
    %v2664 = vmul.f32 %v2649, %v2656
    %v2665 = vadd.f32 %v2663, %v2664
    %v2666 = vtanh.pop %v2665
    %v2667 = vmul.f32 %v2662, %v2666
    %2668 = vst [vmem:[#allocation3 + $0x8] sm:$0xff] %v2667
    %v2669 = vld [vmem:[#allocation2 + $0x40] sm:$0xff]
    %v2670 = vld [vmem:[#allocation2 + $0x48] sm:$0xff]
    %v2671 = vld [vmem:[#allocation2 + $0x50] sm:$0xff]
    %v2672 = vld [vmem:[#allocation2 + $0x58] sm:$0xff]
    %2673 = vmatprep.subr.mxu0 %v1968
    %2674 = vmatpush1.msra.mxu0 %v1967
    %2675 = vmatprep.subr.mxu0 %v1972
    %2676 = vmatpush1.msra.mxu0 %v1971
    %2677 = vmatprep.subr.mxu0 %v1976
    %2678 = vmatpush1.msra.mxu0 %v1975
    %2679 = vmatprep.subr.mxu0 %v1980
    %2680 = vmatpush1.msra.mxu0 %v1979
    %2681 = vmatprep.subr.mxu0 %v1984
    %2682 = vmatpush1.msra.mxu0 %v1983
    %2683 = vmatprep.subr.mxu0 %v1988
    %2684 = vmatpush1.msra.mxu0 %v1987
    %2685 = vmatprep.subr.mxu0 %v1992
    %2686 = vmatpush1.msra.mxu0 %v1991
    %2687 = vmatprep.subr.mxu0 %v1996
    %2688 = vmatpush1.msra.mxu0 %v1995
    %2689 = vmatprep.subr.mxu0 %v2000
    %2690 = vmatpush1.msra.mxu0 %v1999
    %2691 = vmatprep.subr.mxu0 %v2004
    %2692 = vmatpush1.msra.mxu0 %v2003
    %2693 = vmatprep.subr.mxu0 %v2008
    %2694 = vmatpush1.msra.mxu0 %v2007
    %2695 = vmatprep.subr.mxu0 %v2012
    %2696 = vmatpush1.msra.mxu0 %v2011
    %2697 = vmatprep.subr.mxu0 %v2016
    %2698 = vmatpush1.msra.mxu0 %v2015
    %2699 = vmatprep.subr.mxu0 %v2020
    %2700 = vmatpush1.msra.mxu0 %v2019
    %2701 = vmatprep.subr.mxu0 %v2024
    %2702 = vmatpush1.msra.mxu0 %v2023
    %2703 = vmatprep.subr.mxu0 %v2028
    %2704 = vmatpush1.msra.mxu0 %v2027
    %2705 = vmatprep.subr.mxu0 0.0
    %2706 = vmatpush1.msra.mxu0 0.0
    %2707 = vmatprep.subr.mxu0 0.0
    %2708 = vmatpush1.msra.mxu0 0.0
    %2709 = vmatprep.subr.mxu0 0.0
    %2710 = vmatpush1.msra.mxu0 0.0
    %2711 = vmatprep.subr.mxu0 0.0
    %2712 = vmatpush1.msra.mxu0 0.0
    %2713 = vmatprep.subr.mxu0 0.0
    %2714 = vmatpush1.msra.mxu0 0.0
    %2715 = vmatprep.subr.mxu0 0.0
    %2716 = vmatpush1.msra.mxu0 0.0
    %2717 = vmatprep.subr.mxu0 0.0
    %2718 = vmatpush1.msra.mxu0 0.0
    %2719 = vmatprep.subr.mxu0 0.0
    %2720 = vmatpush1.msra.mxu0 0.0
    %2721 = vmatprep.subr.mxu0 0.0
    %2722 = vmatpush1.msra.mxu0 0.0
    %2723 = vmatprep.subr.mxu0 0.0
    %2724 = vmatpush1.msra.mxu0 0.0
    %2725 = vmatprep.subr.mxu0 0.0
    %2726 = vmatpush1.msra.mxu0 0.0
    %2727 = vmatprep.subr.mxu0 0.0
    %2728 = vmatpush1.msra.mxu0 0.0
    %2729 = vmatprep.subr.mxu0 0.0
    %2730 = vmatpush1.msra.mxu0 0.0
    %2731 = vmatprep.subr.mxu0 0.0
    %2732 = vmatpush1.msra.mxu0 0.0
    %2733 = vmatprep.subr.mxu0 0.0
    %2734 = vmatpush1.msra.mxu0 0.0
    %2735 = vmatprep.subr.mxu0 0.0
    %2736 = vmatpush1.msra.mxu0 0.0
    %2737 = vmatprep.mubr.f32.mxu0 0.0
    %2738 = vmatmul.mubr.f32.gmra.mrb[0].mxu0 %v2667
    %v2739 = vpop.f32.mrb[0].mxu0
    %v2740 = vadd.f32 0.0, %v2739
    %v2741 = vpop.f32.mrb[0].mxu0
    %v2742 = vadd.f32 0.0, %v2741
    %2743 = vdwg.mxu0
    %2744 = vmatprep.subr.mxu0 %v1970
    %2745 = vmatpush1.msra.mxu0 %v1969
    %2746 = vmatprep.subr.mxu0 %v1974
    %2747 = vmatpush1.msra.mxu0 %v1973
    %2748 = vmatprep.subr.mxu0 %v1978
    %2749 = vmatpush1.msra.mxu0 %v1977
    %2750 = vmatprep.subr.mxu0 %v1982
    %2751 = vmatpush1.msra.mxu0 %v1981
    %2752 = vmatprep.subr.mxu0 %v1986
    %2753 = vmatpush1.msra.mxu0 %v1985
    %2754 = vmatprep.subr.mxu0 %v1990
    %2755 = vmatpush1.msra.mxu0 %v1989
    %2756 = vmatprep.subr.mxu0 %v1994
    %2757 = vmatpush1.msra.mxu0 %v1993
    %2758 = vmatprep.subr.mxu0 %v1998
    %2759 = vmatpush1.msra.mxu0 %v1997
    %2760 = vmatprep.subr.mxu0 %v2002
    %2761 = vmatpush1.msra.mxu0 %v2001
    %2762 = vmatprep.subr.mxu0 %v2006
    %2763 = vmatpush1.msra.mxu0 %v2005
    %2764 = vmatprep.subr.mxu0 %v2010
    %2765 = vmatpush1.msra.mxu0 %v2009
    %2766 = vmatprep.subr.mxu0 %v2014
    %2767 = vmatpush1.msra.mxu0 %v2013
    %2768 = vmatprep.subr.mxu0 %v2018
    %2769 = vmatpush1.msra.mxu0 %v2017
    %2770 = vmatprep.subr.mxu0 %v2022
    %2771 = vmatpush1.msra.mxu0 %v2021
    %2772 = vmatprep.subr.mxu0 %v2026
    %2773 = vmatpush1.msra.mxu0 %v2025
    %2774 = vmatprep.subr.mxu0 %v2030
    %2775 = vmatpush1.msra.mxu0 %v2029
    %2776 = vmatprep.subr.mxu0 0.0
    %2777 = vmatpush1.msra.mxu0 0.0
    %2778 = vmatprep.subr.mxu0 0.0
    %2779 = vmatpush1.msra.mxu0 0.0
    %2780 = vmatprep.subr.mxu0 0.0
    %2781 = vmatpush1.msra.mxu0 0.0
    %2782 = vmatprep.subr.mxu0 0.0
    %2783 = vmatpush1.msra.mxu0 0.0
    %2784 = vmatprep.subr.mxu0 0.0
    %2785 = vmatpush1.msra.mxu0 0.0
    %2786 = vmatprep.subr.mxu0 0.0
    %2787 = vmatpush1.msra.mxu0 0.0
    %2788 = vmatprep.subr.mxu0 0.0
    %2789 = vmatpush1.msra.mxu0 0.0
    %2790 = vmatprep.subr.mxu0 0.0
    %2791 = vmatpush1.msra.mxu0 0.0
    %2792 = vmatprep.subr.mxu0 0.0
    %2793 = vmatpush1.msra.mxu0 0.0
    %2794 = vmatprep.subr.mxu0 0.0
    %2795 = vmatpush1.msra.mxu0 0.0
    %2796 = vmatprep.subr.mxu0 0.0
    %2797 = vmatpush1.msra.mxu0 0.0
    %2798 = vmatprep.subr.mxu0 0.0
    %2799 = vmatpush1.msra.mxu0 0.0
    %2800 = vmatprep.subr.mxu0 0.0
    %2801 = vmatpush1.msra.mxu0 0.0
    %2802 = vmatprep.subr.mxu0 0.0
    %2803 = vmatpush1.msra.mxu0 0.0
    %2804 = vmatprep.subr.mxu0 0.0
    %2805 = vmatpush1.msra.mxu0 0.0
    %2806 = vmatprep.subr.mxu0 0.0
    %2807 = vmatpush1.msra.mxu0 0.0
    %2808 = vmatprep.mubr.f32.mxu0 0.0
    %2809 = vmatmul.mubr.f32.gmra.mrb[0].mxu0 %v2667
    %v2810 = vpop.f32.mrb[0].mxu0
    %v2811 = vadd.f32 0.0, %v2810
    %v2812 = vpop.f32.mrb[0].mxu0
    %v2813 = vadd.f32 0.0, %v2812
    %2814 = vdwg.mxu0
    %v2815 = vadd.f32 %v2669, %v2740
    %v2816 = vadd.f32 %v2670, %v2742
    %v2817 = vadd.f32 %v2671, %v2811
    %v2818 = vadd.f32 %v2672, %v2813
    %v2819 = vxor.u32 %v2815, 2147483648
    %v2820 = vmul.f32 %v2819, 1.442695
    %v2821 = vpow.pop %v2820
    %v2822 = vadd.f32 %v2821, 1.0
    %v2823 = vrcp.pop %v2822
    %v2824 = vmul.f32 1.0, %v2823
    %v2825 = vxor.u32 %v2816, 2147483648
    %v2826 = vmul.f32 %v2825, 1.442695
    %v2827 = vpow.pop %v2826
    %v2828 = vadd.f32 %v2827, 1.0
    %v2829 = vrcp.pop %v2828
    %v2830 = vmul.f32 1.0, %v2829
    %v2831 = vtanh.pop %v2817
    %v2832 = vxor.u32 %v2818, 2147483648
    %v2833 = vmul.f32 %v2832, 1.442695
    %v2834 = vpow.pop %v2833
    %v2835 = vadd.f32 %v2834, 1.0
    %v2836 = vrcp.pop %v2835
    %v2837 = vmul.f32 1.0, %v2836
    %v2838 = vmul.f32 %v2830, %v2665
    %v2839 = vmul.f32 %v2824, %v2831
    %v2840 = vadd.f32 %v2838, %v2839
    %v2841 = vtanh.pop %v2840
    %v2842 = vmul.f32 %v2837, %v2841
    %2843 = vst [vmem:[#allocation3 + $0x10] sm:$0xff] %v2842
    %v2844 = vld [vmem:[#allocation2 + $0x60] sm:$0xff]
    %v2845 = vld [vmem:[#allocation2 + $0x68] sm:$0xff]
    %v2846 = vld [vmem:[#allocation2 + $0x70] sm:$0xff]
    %v2847 = vld [vmem:[#allocation2 + $0x78] sm:$0xff]
    %2848 = vmatprep.subr.mxu0 %v1968
    %2849 = vmatpush1.msra.mxu0 %v1967
    %2850 = vmatprep.subr.mxu0 %v1972
    %2851 = vmatpush1.msra.mxu0 %v1971
    %2852 = vmatprep.subr.mxu0 %v1976
    %2853 = vmatpush1.msra.mxu0 %v1975
    %2854 = vmatprep.subr.mxu0 %v1980
    %2855 = vmatpush1.msra.mxu0 %v1979
    %2856 = vmatprep.subr.mxu0 %v1984
    %2857 = vmatpush1.msra.mxu0 %v1983
    %2858 = vmatprep.subr.mxu0 %v1988
    %2859 = vmatpush1.msra.mxu0 %v1987
    %2860 = vmatprep.subr.mxu0 %v1992
    %2861 = vmatpush1.msra.mxu0 %v1991
    %2862 = vmatprep.subr.mxu0 %v1996
    %2863 = vmatpush1.msra.mxu0 %v1995
    %2864 = vmatprep.subr.mxu0 %v2000
    %2865 = vmatpush1.msra.mxu0 %v1999
    %2866 = vmatprep.subr.mxu0 %v2004
    %2867 = vmatpush1.msra.mxu0 %v2003
    %2868 = vmatprep.subr.mxu0 %v2008
    %2869 = vmatpush1.msra.mxu0 %v2007
    %2870 = vmatprep.subr.mxu0 %v2012
    %2871 = vmatpush1.msra.mxu0 %v2011
    %2872 = vmatprep.subr.mxu0 %v2016
    %2873 = vmatpush1.msra.mxu0 %v2015
    %2874 = vmatprep.subr.mxu0 %v2020
    %2875 = vmatpush1.msra.mxu0 %v2019
    %2876 = vmatprep.subr.mxu0 %v2024
    %2877 = vmatpush1.msra.mxu0 %v2023
    %2878 = vmatprep.subr.mxu0 %v2028
    %2879 = vmatpush1.msra.mxu0 %v2027
    %2880 = vmatprep.subr.mxu0 0.0
    %2881 = vmatpush1.msra.mxu0 0.0
    %2882 = vmatprep.subr.mxu0 0.0
    %2883 = vmatpush1.msra.mxu0 0.0
    %2884 = vmatprep.subr.mxu0 0.0
    %2885 = vmatpush1.msra.mxu0 0.0
    %2886 = vmatprep.subr.mxu0 0.0
    %2887 = vmatpush1.msra.mxu0 0.0
    %2888 = vmatprep.subr.mxu0 0.0
    %2889 = vmatpush1.msra.mxu0 0.0
    %2890 = vmatprep.subr.mxu0 0.0
    %2891 = vmatpush1.msra.mxu0 0.0
    %2892 = vmatprep.subr.mxu0 0.0
    %2893 = vmatpush1.msra.mxu0 0.0
    %2894 = vmatprep.subr.mxu0 0.0
    %2895 = vmatpush1.msra.mxu0 0.0
    %2896 = vmatprep.subr.mxu0 0.0
    %2897 = vmatpush1.msra.mxu0 0.0
    %2898 = vmatprep.subr.mxu0 0.0
    %2899 = vmatpush1.msra.mxu0 0.0
    %2900 = vmatprep.subr.mxu0 0.0
    %2901 = vmatpush1.msra.mxu0 0.0
    %2902 = vmatprep.subr.mxu0 0.0
    %2903 = vmatpush1.msra.mxu0 0.0
    %2904 = vmatprep.subr.mxu0 0.0
    %2905 = vmatpush1.msra.mxu0 0.0
    %2906 = vmatprep.subr.mxu0 0.0
    %2907 = vmatpush1.msra.mxu0 0.0
    %2908 = vmatprep.subr.mxu0 0.0
    %2909 = vmatpush1.msra.mxu0 0.0
    %2910 = vmatprep.subr.mxu0 0.0
    %2911 = vmatpush1.msra.mxu0 0.0
    %2912 = vmatprep.mubr.f32.mxu0 0.0
    %2913 = vmatmul.mubr.f32.gmra.mrb[0].mxu0 %v2842
    %v2914 = vpop.f32.mrb[0].mxu0
    %v2915 = vadd.f32 0.0, %v2914
    %v2916 = vpop.f32.mrb[0].mxu0
    %v2917 = vadd.f32 0.0, %v2916
    %2918 = vdwg.mxu0
    %2919 = vmatprep.subr.mxu0 %v1970
    %2920 = vmatpush1.msra.mxu0 %v1969
    %2921 = vmatprep.subr.mxu0 %v1974
    %2922 = vmatpush1.msra.mxu0 %v1973
    %2923 = vmatprep.subr.mxu0 %v1978
    %2924 = vmatpush1.msra.mxu0 %v1977
    %2925 = vmatprep.subr.mxu0 %v1982
    %2926 = vmatpush1.msra.mxu0 %v1981
    %2927 = vmatprep.subr.mxu0 %v1986
    %2928 = vmatpush1.msra.mxu0 %v1985
    %2929 = vmatprep.subr.mxu0 %v1990
    %2930 = vmatpush1.msra.mxu0 %v1989
    %2931 = vmatprep.subr.mxu0 %v1994
    %2932 = vmatpush1.msra.mxu0 %v1993
    %2933 = vmatprep.subr.mxu0 %v1998
    %2934 = vmatpush1.msra.mxu0 %v1997
    %2935 = vmatprep.subr.mxu0 %v2002
    %2936 = vmatpush1.msra.mxu0 %v2001
    %2937 = vmatprep.subr.mxu0 %v2006
    %2938 = vmatpush1.msra.mxu0 %v2005
    %2939 = vmatprep.subr.mxu0 %v2010
    %2940 = vmatpush1.msra.mxu0 %v2009
    %2941 = vmatprep.subr.mxu0 %v2014
    %2942 = vmatpush1.msra.mxu0 %v2013
    %2943 = vmatprep.subr.mxu0 %v2018
    %2944 = vmatpush1.msra.mxu0 %v2017
    %2945 = vmatprep.subr.mxu0 %v2022
    %2946 = vmatpush1.msra.mxu0 %v2021
    %2947 = vmatprep.subr.mxu0 %v2026
    %2948 = vmatpush1.msra.mxu0 %v2025
    %2949 = vmatprep.subr.mxu0 %v2030
    %2950 = vmatpush1.msra.mxu0 %v2029
    %2951 = vmatprep.subr.mxu0 0.0
    %2952 = vmatpush1.msra.mxu0 0.0
    %2953 = vmatprep.subr.mxu0 0.0
    %2954 = vmatpush1.msra.mxu0 0.0
    %2955 = vmatprep.subr.mxu0 0.0
    %2956 = vmatpush1.msra.mxu0 0.0
    %2957 = vmatprep.subr.mxu0 0.0
    %2958 = vmatpush1.msra.mxu0 0.0
    %2959 = vmatprep.subr.mxu0 0.0
    %2960 = vmatpush1.msra.mxu0 0.0
    %2961 = vmatprep.subr.mxu0 0.0
    %2962 = vmatpush1.msra.mxu0 0.0
    %2963 = vmatprep.subr.mxu0 0.0
    %2964 = vmatpush1.msra.mxu0 0.0
    %2965 = vmatprep.subr.mxu0 0.0
    %2966 = vmatpush1.msra.mxu0 0.0
    %2967 = vmatprep.subr.mxu0 0.0
    %2968 = vmatpush1.msra.mxu0 0.0
    %2969 = vmatprep.subr.mxu0 0.0
    %2970 = vmatpush1.msra.mxu0 0.0
    %2971 = vmatprep.subr.mxu0 0.0
    %2972 = vmatpush1.msra.mxu0 0.0
    %2973 = vmatprep.subr.mxu0 0.0
    %2974 = vmatpush1.msra.mxu0 0.0
    %2975 = vmatprep.subr.mxu0 0.0
    %2976 = vmatpush1.msra.mxu0 0.0
    %2977 = vmatprep.subr.mxu0 0.0
    %2978 = vmatpush1.msra.mxu0 0.0
    %2979 = vmatprep.subr.mxu0 0.0
    %2980 = vmatpush1.msra.mxu0 0.0
    %2981 = vmatprep.subr.mxu0 0.0
    %2982 = vmatpush1.msra.mxu0 0.0
    %2983 = vmatprep.mubr.f32.mxu0 0.0
    %2984 = vmatmul.mubr.f32.gmra.mrb[0].mxu0 %v2842
    %v2985 = vpop.f32.mrb[0].mxu0
    %v2986 = vadd.f32 0.0, %v2985
    %v2987 = vpop.f32.mrb[0].mxu0
    %v2988 = vadd.f32 0.0, %v2987
    %2989 = vdwg.mxu0
    %v2990 = vadd.f32 %v2844, %v2915
    %v2991 = vadd.f32 %v2845, %v2917
    %v2992 = vadd.f32 %v2846, %v2986
    %v2993 = vadd.f32 %v2847, %v2988
    %v2994 = vxor.u32 %v2990, 2147483648
    %v2995 = vmul.f32 %v2994, 1.442695
    %v2996 = vpow.pop %v2995
    %v2997 = vadd.f32 %v2996, 1.0
    %v2998 = vrcp.pop %v2997
    %v2999 = vmul.f32 1.0, %v2998
    %v3000 = vxor.u32 %v2991, 2147483648
    %v3001 = vmul.f32 %v3000, 1.442695
    %v3002 = vpow.pop %v3001
    %v3003 = vadd.f32 %v3002, 1.0
    %v3004 = vrcp.pop %v3003
    %v3005 = vmul.f32 1.0, %v3004
    %v3006 = vtanh.pop %v2992
    %v3007 = vxor.u32 %v2993, 2147483648
    %v3008 = vmul.f32 %v3007, 1.442695
    %v3009 = vpow.pop %v3008
    %v3010 = vadd.f32 %v3009, 1.0
    %v3011 = vrcp.pop %v3010
    %v3012 = vmul.f32 1.0, %v3011
    %v3013 = vmul.f32 %v3005, %v2840
    %v3014 = vmul.f32 %v2999, %v3006
    %v3015 = vadd.f32 %v3013, %v3014
    %v3016 = vtanh.pop %v3015
    %v3017 = vmul.f32 %v3012, %v3016
    %3018 = vst [vmem:[#allocation3 + $0x18] sm:$0xff] %v3017
    %v3019 = vld [vmem:[#allocation2 + $0x80] sm:$0xff]
    %v3020 = vld [vmem:[#allocation2 + $0x88] sm:$0xff]
    %v3021 = vld [vmem:[#allocation2 + $0x90] sm:$0xff]
    %v3022 = vld [vmem:[#allocation2 + $0x98] sm:$0xff]
    %3023 = vmatprep.subr.mxu0 %v1968
    %3024 = vmatpush1.msra.mxu0 %v1967
    %3025 = vmatprep.subr.mxu0 %v1972
    %3026 = vmatpush1.msra.mxu0 %v1971
    %3027 = vmatprep.subr.mxu0 %v1976
    %3028 = vmatpush1.msra.mxu0 %v1975
    %3029 = vmatprep.subr.mxu0 %v1980
    %3030 = vmatpush1.msra.mxu0 %v1979
    %3031 = vmatprep.subr.mxu0 %v1984
    %3032 = vmatpush1.msra.mxu0 %v1983
    %3033 = vmatprep.subr.mxu0 %v1988
    %3034 = vmatpush1.msra.mxu0 %v1987
    %3035 = vmatprep.subr.mxu0 %v1992
    %3036 = vmatpush1.msra.mxu0 %v1991
    %3037 = vmatprep.subr.mxu0 %v1996
    %3038 = vmatpush1.msra.mxu0 %v1995
    %3039 = vmatprep.subr.mxu0 %v2000
    %3040 = vmatpush1.msra.mxu0 %v1999
    %3041 = vmatprep.subr.mxu0 %v2004
    %3042 = vmatpush1.msra.mxu0 %v2003
    %3043 = vmatprep.subr.mxu0 %v2008
    %3044 = vmatpush1.msra.mxu0 %v2007
    %3045 = vmatprep.subr.mxu0 %v2012
    %3046 = vmatpush1.msra.mxu0 %v2011
    %3047 = vmatprep.subr.mxu0 %v2016
    %3048 = vmatpush1.msra.mxu0 %v2015
    %3049 = vmatprep.subr.mxu0 %v2020
    %3050 = vmatpush1.msra.mxu0 %v2019
    %3051 = vmatprep.subr.mxu0 %v2024
    %3052 = vmatpush1.msra.mxu0 %v2023
    %3053 = vmatprep.subr.mxu0 %v2028
    %3054 = vmatpush1.msra.mxu0 %v2027
    %3055 = vmatprep.subr.mxu0 0.0
    %3056 = vmatpush1.msra.mxu0 0.0
    %3057 = vmatprep.subr.mxu0 0.0
    %3058 = vmatpush1.msra.mxu0 0.0
    %3059 = vmatprep.subr.mxu0 0.0
    %3060 = vmatpush1.msra.mxu0 0.0
    %3061 = vmatprep.subr.mxu0 0.0
    %3062 = vmatpush1.msra.mxu0 0.0
    %3063 = vmatprep.subr.mxu0 0.0
    %3064 = vmatpush1.msra.mxu0 0.0
    %3065 = vmatprep.subr.mxu0 0.0
    %3066 = vmatpush1.msra.mxu0 0.0
    %3067 = vmatprep.subr.mxu0 0.0
    %3068 = vmatpush1.msra.mxu0 0.0
    %3069 = vmatprep.subr.mxu0 0.0
    %3070 = vmatpush1.msra.mxu0 0.0
    %3071 = vmatprep.subr.mxu0 0.0
    %3072 = vmatpush1.msra.mxu0 0.0
    %3073 = vmatprep.subr.mxu0 0.0
    %3074 = vmatpush1.msra.mxu0 0.0
    %3075 = vmatprep.subr.mxu0 0.0
    %3076 = vmatpush1.msra.mxu0 0.0
    %3077 = vmatprep.subr.mxu0 0.0
    %3078 = vmatpush1.msra.mxu0 0.0
    %3079 = vmatprep.subr.mxu0 0.0
    %3080 = vmatpush1.msra.mxu0 0.0
    %3081 = vmatprep.subr.mxu0 0.0
    %3082 = vmatpush1.msra.mxu0 0.0
    %3083 = vmatprep.subr.mxu0 0.0
    %3084 = vmatpush1.msra.mxu0 0.0
    %3085 = vmatprep.subr.mxu0 0.0
    %3086 = vmatpush1.msra.mxu0 0.0
    %3087 = vmatprep.mubr.f32.mxu0 0.0
    %3088 = vmatmul.mubr.f32.gmra.mrb[0].mxu0 %v3017
    %v3089 = vpop.f32.mrb[0].mxu0
    %v3090 = vadd.f32 0.0, %v3089
    %v3091 = vpop.f32.mrb[0].mxu0
    %v3092 = vadd.f32 0.0, %v3091
    %3093 = vdwg.mxu0
    %3094 = vmatprep.subr.mxu0 %v1970
    %3095 = vmatpush1.msra.mxu0 %v1969
    %3096 = vmatprep.subr.mxu0 %v1974
    %3097 = vmatpush1.msra.mxu0 %v1973
    %3098 = vmatprep.subr.mxu0 %v1978
    %3099 = vmatpush1.msra.mxu0 %v1977
    %3100 = vmatprep.subr.mxu0 %v1982
    %3101 = vmatpush1.msra.mxu0 %v1981
    %3102 = vmatprep.subr.mxu0 %v1986
    %3103 = vmatpush1.msra.mxu0 %v1985
    %3104 = vmatprep.subr.mxu0 %v1990
    %3105 = vmatpush1.msra.mxu0 %v1989
    %3106 = vmatprep.subr.mxu0 %v1994
    %3107 = vmatpush1.msra.mxu0 %v1993
    %3108 = vmatprep.subr.mxu0 %v1998
    %3109 = vmatpush1.msra.mxu0 %v1997
    %3110 = vmatprep.subr.mxu0 %v2002
    %3111 = vmatpush1.msra.mxu0 %v2001
    %3112 = vmatprep.subr.mxu0 %v2006
    %3113 = vmatpush1.msra.mxu0 %v2005
    %3114 = vmatprep.subr.mxu0 %v2010
    %3115 = vmatpush1.msra.mxu0 %v2009
    %3116 = vmatprep.subr.mxu0 %v2014
    %3117 = vmatpush1.msra.mxu0 %v2013
    %3118 = vmatprep.subr.mxu0 %v2018
    %3119 = vmatpush1.msra.mxu0 %v2017
    %3120 = vmatprep.subr.mxu0 %v2022
    %3121 = vmatpush1.msra.mxu0 %v2021
    %3122 = vmatprep.subr.mxu0 %v2026
    %3123 = vmatpush1.msra.mxu0 %v2025
    %3124 = vmatprep.subr.mxu0 %v2030
    %3125 = vmatpush1.msra.mxu0 %v2029
    %3126 = vmatprep.subr.mxu0 0.0
    %3127 = vmatpush1.msra.mxu0 0.0
    %3128 = vmatprep.subr.mxu0 0.0
    %3129 = vmatpush1.msra.mxu0 0.0
    %3130 = vmatprep.subr.mxu0 0.0
    %3131 = vmatpush1.msra.mxu0 0.0
    %3132 = vmatprep.subr.mxu0 0.0
    %3133 = vmatpush1.msra.mxu0 0.0
    %3134 = vmatprep.subr.mxu0 0.0
    %3135 = vmatpush1.msra.mxu0 0.0
    %3136 = vmatprep.subr.mxu0 0.0
    %3137 = vmatpush1.msra.mxu0 0.0
    %3138 = vmatprep.subr.mxu0 0.0
    %3139 = vmatpush1.msra.mxu0 0.0
    %3140 = vmatprep.subr.mxu0 0.0
    %3141 = vmatpush1.msra.mxu0 0.0
    %3142 = vmatprep.subr.mxu0 0.0
    %3143 = vmatpush1.msra.mxu0 0.0
    %3144 = vmatprep.subr.mxu0 0.0
    %3145 = vmatpush1.msra.mxu0 0.0
    %3146 = vmatprep.subr.mxu0 0.0
    %3147 = vmatpush1.msra.mxu0 0.0
    %3148 = vmatprep.subr.mxu0 0.0
    %3149 = vmatpush1.msra.mxu0 0.0
    %3150 = vmatprep.subr.mxu0 0.0
    %3151 = vmatpush1.msra.mxu0 0.0
    %3152 = vmatprep.subr.mxu0 0.0
    %3153 = vmatpush1.msra.mxu0 0.0
    %3154 = vmatprep.subr.mxu0 0.0
    %3155 = vmatpush1.msra.mxu0 0.0
    %3156 = vmatprep.subr.mxu0 0.0
    %3157 = vmatpush1.msra.mxu0 0.0
    %3158 = vmatprep.mubr.f32.mxu0 0.0
    %3159 = vmatmul.mubr.f32.gmra.mrb[0].mxu0 %v3017
    %v3160 = vpop.f32.mrb[0].mxu0
    %v3161 = vadd.f32 0.0, %v3160
    %v3162 = vpop.f32.mrb[0].mxu0
    %v3163 = vadd.f32 0.0, %v3162
    %3164 = vdwg.mxu0
    %v3165 = vadd.f32 %v3019, %v3090
    %v3166 = vadd.f32 %v3020, %v3092
    %v3167 = vadd.f32 %v3021, %v3161
    %v3168 = vadd.f32 %v3022, %v3163
    %v3169 = vxor.u32 %v3165, 2147483648
    %v3170 = vmul.f32 %v3169, 1.442695
    %v3171 = vpow.pop %v3170
    %v3172 = vadd.f32 %v3171, 1.0
    %v3173 = vrcp.pop %v3172
    %v3174 = vmul.f32 1.0, %v3173
    %v3175 = vxor.u32 %v3166, 2147483648
    %v3176 = vmul.f32 %v3175, 1.442695
    %v3177 = vpow.pop %v3176
    %v3178 = vadd.f32 %v3177, 1.0
    %v3179 = vrcp.pop %v3178
    %v3180 = vmul.f32 1.0, %v3179
    %v3181 = vtanh.pop %v3167
    %v3182 = vxor.u32 %v3168, 2147483648
    %v3183 = vmul.f32 %v3182, 1.442695
    %v3184 = vpow.pop %v3183
    %v3185 = vadd.f32 %v3184, 1.0
    %v3186 = vrcp.pop %v3185
    %v3187 = vmul.f32 1.0, %v3186
    %v3188 = vmul.f32 %v3180, %v3015
    %v3189 = vmul.f32 %v3174, %v3181
    %v3190 = vadd.f32 %v3188, %v3189
    %v3191 = vtanh.pop %v3190
    %v3192 = vmul.f32 %v3187, %v3191
    %3193 = vst [vmem:[#allocation3 + $0x20] sm:$0xff] %v3192
    %v3194 = vld [vmem:[#allocation2 + $0xa0] sm:$0xff]
    %v3195 = vld [vmem:[#allocation2 + $0xa8] sm:$0xff]
    %v3196 = vld [vmem:[#allocation2 + $0xb0] sm:$0xff]
    %v3197 = vld [vmem:[#allocation2 + $0xb8] sm:$0xff]
    %3198 = vmatprep.subr.mxu0 %v1968
    %3199 = vmatpush1.msra.mxu0 %v1967
    %3200 = vmatprep.subr.mxu0 %v1972
    %3201 = vmatpush1.msra.mxu0 %v1971
    %3202 = vmatprep.subr.mxu0 %v1976
    %3203 = vmatpush1.msra.mxu0 %v1975
    %3204 = vmatprep.subr.mxu0 %v1980
    %3205 = vmatpush1.msra.mxu0 %v1979
    %3206 = vmatprep.subr.mxu0 %v1984
    %3207 = vmatpush1.msra.mxu0 %v1983
    %3208 = vmatprep.subr.mxu0 %v1988
    %3209 = vmatpush1.msra.mxu0 %v1987
    %3210 = vmatprep.subr.mxu0 %v1992
    %3211 = vmatpush1.msra.mxu0 %v1991
    %3212 = vmatprep.subr.mxu0 %v1996
    %3213 = vmatpush1.msra.mxu0 %v1995
    %3214 = vmatprep.subr.mxu0 %v2000
    %3215 = vmatpush1.msra.mxu0 %v1999
    %3216 = vmatprep.subr.mxu0 %v2004
    %3217 = vmatpush1.msra.mxu0 %v2003
    %3218 = vmatprep.subr.mxu0 %v2008
    %3219 = vmatpush1.msra.mxu0 %v2007
    %3220 = vmatprep.subr.mxu0 %v2012
    %3221 = vmatpush1.msra.mxu0 %v2011
    %3222 = vmatprep.subr.mxu0 %v2016
    %3223 = vmatpush1.msra.mxu0 %v2015
    %3224 = vmatprep.subr.mxu0 %v2020
    %3225 = vmatpush1.msra.mxu0 %v2019
    %3226 = vmatprep.subr.mxu0 %v2024
    %3227 = vmatpush1.msra.mxu0 %v2023
    %3228 = vmatprep.subr.mxu0 %v2028
    %3229 = vmatpush1.msra.mxu0 %v2027
    %3230 = vmatprep.subr.mxu0 0.0
    %3231 = vmatpush1.msra.mxu0 0.0
    %3232 = vmatprep.subr.mxu0 0.0
    %3233 = vmatpush1.msra.mxu0 0.0
    %3234 = vmatprep.subr.mxu0 0.0
    %3235 = vmatpush1.msra.mxu0 0.0
    %3236 = vmatprep.subr.mxu0 0.0
    %3237 = vmatpush1.msra.mxu0 0.0
    %3238 = vmatprep.subr.mxu0 0.0
    %3239 = vmatpush1.msra.mxu0 0.0
    %3240 = vmatprep.subr.mxu0 0.0
    %3241 = vmatpush1.msra.mxu0 0.0
    %3242 = vmatprep.subr.mxu0 0.0
    %3243 = vmatpush1.msra.mxu0 0.0
    %3244 = vmatprep.subr.mxu0 0.0
    %3245 = vmatpush1.msra.mxu0 0.0
    %3246 = vmatprep.subr.mxu0 0.0
    %3247 = vmatpush1.msra.mxu0 0.0
    %3248 = vmatprep.subr.mxu0 0.0
    %3249 = vmatpush1.msra.mxu0 0.0
    %3250 = vmatprep.subr.mxu0 0.0
    %3251 = vmatpush1.msra.mxu0 0.0
    %3252 = vmatprep.subr.mxu0 0.0
    %3253 = vmatpush1.msra.mxu0 0.0
    %3254 = vmatprep.subr.mxu0 0.0
    %3255 = vmatpush1.msra.mxu0 0.0
    %3256 = vmatprep.subr.mxu0 0.0
    %3257 = vmatpush1.msra.mxu0 0.0
    %3258 = vmatprep.subr.mxu0 0.0
    %3259 = vmatpush1.msra.mxu0 0.0
    %3260 = vmatprep.subr.mxu0 0.0
    %3261 = vmatpush1.msra.mxu0 0.0
    %3262 = vmatprep.mubr.f32.mxu0 0.0
    %3263 = vmatmul.mubr.f32.gmra.mrb[0].mxu0 %v3192
    %v3264 = vpop.f32.mrb[0].mxu0
    %v3265 = vadd.f32 0.0, %v3264
    %v3266 = vpop.f32.mrb[0].mxu0
    %v3267 = vadd.f32 0.0, %v3266
    %3268 = vdwg.mxu0
    %3269 = vmatprep.subr.mxu0 %v1970
    %3270 = vmatpush1.msra.mxu0 %v1969
    %3271 = vmatprep.subr.mxu0 %v1974
    %3272 = vmatpush1.msra.mxu0 %v1973
    %3273 = vmatprep.subr.mxu0 %v1978
    %3274 = vmatpush1.msra.mxu0 %v1977
    %3275 = vmatprep.subr.mxu0 %v1982
    %3276 = vmatpush1.msra.mxu0 %v1981
    %3277 = vmatprep.subr.mxu0 %v1986
    %3278 = vmatpush1.msra.mxu0 %v1985
    %3279 = vmatprep.subr.mxu0 %v1990
    %3280 = vmatpush1.msra.mxu0 %v1989
    %3281 = vmatprep.subr.mxu0 %v1994
    %3282 = vmatpush1.msra.mxu0 %v1993
    %3283 = vmatprep.subr.mxu0 %v1998
    %3284 = vmatpush1.msra.mxu0 %v1997
    %3285 = vmatprep.subr.mxu0 %v2002
    %3286 = vmatpush1.msra.mxu0 %v2001
    %3287 = vmatprep.subr.mxu0 %v2006
    %3288 = vmatpush1.msra.mxu0 %v2005
    %3289 = vmatprep.subr.mxu0 %v2010
    %3290 = vmatpush1.msra.mxu0 %v2009
    %3291 = vmatprep.subr.mxu0 %v2014
    %3292 = vmatpush1.msra.mxu0 %v2013
    %3293 = vmatprep.subr.mxu0 %v2018
    %3294 = vmatpush1.msra.mxu0 %v2017
    %3295 = vmatprep.subr.mxu0 %v2022
    %3296 = vmatpush1.msra.mxu0 %v2021
    %3297 = vmatprep.subr.mxu0 %v2026
    %3298 = vmatpush1.msra.mxu0 %v2025
    %3299 = vmatprep.subr.mxu0 %v2030
    %3300 = vmatpush1.msra.mxu0 %v2029
    %3301 = vmatprep.subr.mxu0 0.0
    %3302 = vmatpush1.msra.mxu0 0.0
    %3303 = vmatprep.subr.mxu0 0.0
    %3304 = vmatpush1.msra.mxu0 0.0
    %3305 = vmatprep.subr.mxu0 0.0
    %3306 = vmatpush1.msra.mxu0 0.0
    %3307 = vmatprep.subr.mxu0 0.0
    %3308 = vmatpush1.msra.mxu0 0.0
    %3309 = vmatprep.subr.mxu0 0.0
    %3310 = vmatpush1.msra.mxu0 0.0
    %3311 = vmatprep.subr.mxu0 0.0
    %3312 = vmatpush1.msra.mxu0 0.0
    %3313 = vmatprep.subr.mxu0 0.0
    %3314 = vmatpush1.msra.mxu0 0.0
    %3315 = vmatprep.subr.mxu0 0.0
    %3316 = vmatpush1.msra.mxu0 0.0
    %3317 = vmatprep.subr.mxu0 0.0
    %3318 = vmatpush1.msra.mxu0 0.0
    %3319 = vmatprep.subr.mxu0 0.0
    %3320 = vmatpush1.msra.mxu0 0.0
    %3321 = vmatprep.subr.mxu0 0.0
    %3322 = vmatpush1.msra.mxu0 0.0
    %3323 = vmatprep.subr.mxu0 0.0
    %3324 = vmatpush1.msra.mxu0 0.0
    %3325 = vmatprep.subr.mxu0 0.0
    %3326 = vmatpush1.msra.mxu0 0.0
    %3327 = vmatprep.subr.mxu0 0.0
    %3328 = vmatpush1.msra.mxu0 0.0
    %3329 = vmatprep.subr.mxu0 0.0
    %3330 = vmatpush1.msra.mxu0 0.0
    %3331 = vmatprep.subr.mxu0 0.0
    %3332 = vmatpush1.msra.mxu0 0.0
    %3333 = vmatprep.mubr.f32.mxu0 0.0
    %3334 = vmatmul.mubr.f32.gmra.mrb[0].mxu0 %v3192
    %v3335 = vpop.f32.mrb[0].mxu0
    %v3336 = vadd.f32 0.0, %v3335
    %v3337 = vpop.f32.mrb[0].mxu0
    %v3338 = vadd.f32 0.0, %v3337
    %3339 = vdwg.mxu0
    %v3340 = vadd.f32 %v3194, %v3265
    %v3341 = vadd.f32 %v3195, %v3267
    %v3342 = vadd.f32 %v3196, %v3336
    %v3343 = vadd.f32 %v3197, %v3338
    %v3344 = vxor.u32 %v3340, 2147483648
    %v3345 = vmul.f32 %v3344, 1.442695
    %v3346 = vpow.pop %v3345
    %v3347 = vadd.f32 %v3346, 1.0
    %v3348 = vrcp.pop %v3347
    %v3349 = vmul.f32 1.0, %v3348
    %v3350 = vxor.u32 %v3341, 2147483648
    %v3351 = vmul.f32 %v3350, 1.442695
    %v3352 = vpow.pop %v3351
    %v3353 = vadd.f32 %v3352, 1.0
    %v3354 = vrcp.pop %v3353
    %v3355 = vmul.f32 1.0, %v3354
    %v3356 = vtanh.pop %v3342
    %v3357 = vxor.u32 %v3343, 2147483648
    %v3358 = vmul.f32 %v3357, 1.442695
    %v3359 = vpow.pop %v3358
    %v3360 = vadd.f32 %v3359, 1.0
    %v3361 = vrcp.pop %v3360
    %v3362 = vmul.f32 1.0, %v3361
    %v3363 = vmul.f32 %v3355, %v3190
    %v3364 = vmul.f32 %v3349, %v3356
    %v3365 = vadd.f32 %v3363, %v3364
    %v3366 = vtanh.pop %v3365
    %v3367 = vmul.f32 %v3362, %v3366
    %3368 = vst [vmem:[#allocation3 + $0x28] sm:$0xff] %v3367
    %v3369 = vld [vmem:[#allocation2 + $0xc0] sm:$0xff]
    %v3370 = vld [vmem:[#allocation2 + $0xc8] sm:$0xff]
    %v3371 = vld [vmem:[#allocation2 + $0xd0] sm:$0xff]
    %v3372 = vld [vmem:[#allocation2 + $0xd8] sm:$0xff]
    %3373 = vmatprep.subr.mxu0 %v1968
    %3374 = vmatpush1.msra.mxu0 %v1967
    %3375 = vmatprep.subr.mxu0 %v1972
    %3376 = vmatpush1.msra.mxu0 %v1971
    %3377 = vmatprep.subr.mxu0 %v1976
    %3378 = vmatpush1.msra.mxu0 %v1975
    %3379 = vmatprep.subr.mxu0 %v1980
    %3380 = vmatpush1.msra.mxu0 %v1979
    %3381 = vmatprep.subr.mxu0 %v1984
    %3382 = vmatpush1.msra.mxu0 %v1983
    %3383 = vmatprep.subr.mxu0 %v1988
    %3384 = vmatpush1.msra.mxu0 %v1987
    %3385 = vmatprep.subr.mxu0 %v1992
    %3386 = vmatpush1.msra.mxu0 %v1991
    %3387 = vmatprep.subr.mxu0 %v1996
    %3388 = vmatpush1.msra.mxu0 %v1995
    %3389 = vmatprep.subr.mxu0 %v2000
    %3390 = vmatpush1.msra.mxu0 %v1999
    %3391 = vmatprep.subr.mxu0 %v2004
    %3392 = vmatpush1.msra.mxu0 %v2003
    %3393 = vmatprep.subr.mxu0 %v2008
    %3394 = vmatpush1.msra.mxu0 %v2007
    %3395 = vmatprep.subr.mxu0 %v2012
    %3396 = vmatpush1.msra.mxu0 %v2011
    %3397 = vmatprep.subr.mxu0 %v2016
    %3398 = vmatpush1.msra.mxu0 %v2015
    %3399 = vmatprep.subr.mxu0 %v2020
    %3400 = vmatpush1.msra.mxu0 %v2019
    %3401 = vmatprep.subr.mxu0 %v2024
    %3402 = vmatpush1.msra.mxu0 %v2023
    %3403 = vmatprep.subr.mxu0 %v2028
    %3404 = vmatpush1.msra.mxu0 %v2027
    %3405 = vmatprep.subr.mxu0 0.0
    %3406 = vmatpush1.msra.mxu0 0.0
    %3407 = vmatprep.subr.mxu0 0.0
    %3408 = vmatpush1.msra.mxu0 0.0
    %3409 = vmatprep.subr.mxu0 0.0
    %3410 = vmatpush1.msra.mxu0 0.0
    %3411 = vmatprep.subr.mxu0 0.0
    %3412 = vmatpush1.msra.mxu0 0.0
    %3413 = vmatprep.subr.mxu0 0.0
    %3414 = vmatpush1.msra.mxu0 0.0
    %3415 = vmatprep.subr.mxu0 0.0
    %3416 = vmatpush1.msra.mxu0 0.0
    %3417 = vmatprep.subr.mxu0 0.0
    %3418 = vmatpush1.msra.mxu0 0.0
    %3419 = vmatprep.subr.mxu0 0.0
    %3420 = vmatpush1.msra.mxu0 0.0
    %3421 = vmatprep.subr.mxu0 0.0
    %3422 = vmatpush1.msra.mxu0 0.0
    %3423 = vmatprep.subr.mxu0 0.0
    %3424 = vmatpush1.msra.mxu0 0.0
    %3425 = vmatprep.subr.mxu0 0.0
    %3426 = vmatpush1.msra.mxu0 0.0
    %3427 = vmatprep.subr.mxu0 0.0
    %3428 = vmatpush1.msra.mxu0 0.0
    %3429 = vmatprep.subr.mxu0 0.0
    %3430 = vmatpush1.msra.mxu0 0.0
    %3431 = vmatprep.subr.mxu0 0.0
    %3432 = vmatpush1.msra.mxu0 0.0
    %3433 = vmatprep.subr.mxu0 0.0
    %3434 = vmatpush1.msra.mxu0 0.0
    %3435 = vmatprep.subr.mxu0 0.0
    %3436 = vmatpush1.msra.mxu0 0.0
    %3437 = vmatprep.mubr.f32.mxu0 0.0
    %3438 = vmatmul.mubr.f32.gmra.mrb[0].mxu0 %v3367
    %v3439 = vpop.f32.mrb[0].mxu0
    %v3440 = vadd.f32 0.0, %v3439
    %v3441 = vpop.f32.mrb[0].mxu0
    %v3442 = vadd.f32 0.0, %v3441
    %3443 = vdwg.mxu0
    %3444 = vmatprep.subr.mxu0 %v1970
    %3445 = vmatpush1.msra.mxu0 %v1969
    %3446 = vmatprep.subr.mxu0 %v1974
    %3447 = vmatpush1.msra.mxu0 %v1973
    %3448 = vmatprep.subr.mxu0 %v1978
    %3449 = vmatpush1.msra.mxu0 %v1977
    %3450 = vmatprep.subr.mxu0 %v1982
    %3451 = vmatpush1.msra.mxu0 %v1981
    %3452 = vmatprep.subr.mxu0 %v1986
    %3453 = vmatpush1.msra.mxu0 %v1985
    %3454 = vmatprep.subr.mxu0 %v1990
    %3455 = vmatpush1.msra.mxu0 %v1989
    %3456 = vmatprep.subr.mxu0 %v1994
    %3457 = vmatpush1.msra.mxu0 %v1993
    %3458 = vmatprep.subr.mxu0 %v1998
    %3459 = vmatpush1.msra.mxu0 %v1997
    %3460 = vmatprep.subr.mxu0 %v2002
    %3461 = vmatpush1.msra.mxu0 %v2001
    %3462 = vmatprep.subr.mxu0 %v2006
    %3463 = vmatpush1.msra.mxu0 %v2005
    %3464 = vmatprep.subr.mxu0 %v2010
    %3465 = vmatpush1.msra.mxu0 %v2009
    %3466 = vmatprep.subr.mxu0 %v2014
    %3467 = vmatpush1.msra.mxu0 %v2013
    %3468 = vmatprep.subr.mxu0 %v2018
    %3469 = vmatpush1.msra.mxu0 %v2017
    %3470 = vmatprep.subr.mxu0 %v2022
    %3471 = vmatpush1.msra.mxu0 %v2021
    %3472 = vmatprep.subr.mxu0 %v2026
    %3473 = vmatpush1.msra.mxu0 %v2025
    %3474 = vmatprep.subr.mxu0 %v2030
    %3475 = vmatpush1.msra.mxu0 %v2029
    %3476 = vmatprep.subr.mxu0 0.0
    %3477 = vmatpush1.msra.mxu0 0.0
    %3478 = vmatprep.subr.mxu0 0.0
    %3479 = vmatpush1.msra.mxu0 0.0
    %3480 = vmatprep.subr.mxu0 0.0
    %3481 = vmatpush1.msra.mxu0 0.0
    %3482 = vmatprep.subr.mxu0 0.0
    %3483 = vmatpush1.msra.mxu0 0.0
    %3484 = vmatprep.subr.mxu0 0.0
    %3485 = vmatpush1.msra.mxu0 0.0
    %3486 = vmatprep.subr.mxu0 0.0
    %3487 = vmatpush1.msra.mxu0 0.0
    %3488 = vmatprep.subr.mxu0 0.0
    %3489 = vmatpush1.msra.mxu0 0.0
    %3490 = vmatprep.subr.mxu0 0.0
    %3491 = vmatpush1.msra.mxu0 0.0
    %3492 = vmatprep.subr.mxu0 0.0
    %3493 = vmatpush1.msra.mxu0 0.0
    %3494 = vmatprep.subr.mxu0 0.0
    %3495 = vmatpush1.msra.mxu0 0.0
    %3496 = vmatprep.subr.mxu0 0.0
    %3497 = vmatpush1.msra.mxu0 0.0
    %3498 = vmatprep.subr.mxu0 0.0
    %3499 = vmatpush1.msra.mxu0 0.0
    %3500 = vmatprep.subr.mxu0 0.0
    %3501 = vmatpush1.msra.mxu0 0.0
    %3502 = vmatprep.subr.mxu0 0.0
    %3503 = vmatpush1.msra.mxu0 0.0
    %3504 = vmatprep.subr.mxu0 0.0
    %3505 = vmatpush1.msra.mxu0 0.0
    %3506 = vmatprep.subr.mxu0 0.0
    %3507 = vmatpush1.msra.mxu0 0.0
    %3508 = vmatprep.mubr.f32.mxu0 0.0
    %3509 = vmatmul.mubr.f32.gmra.mrb[0].mxu0 %v3367
    %v3510 = vpop.f32.mrb[0].mxu0
    %v3511 = vadd.f32 0.0, %v3510
    %v3512 = vpop.f32.mrb[0].mxu0
    %v3513 = vadd.f32 0.0, %v3512
    %3514 = vdwg.mxu0
    %v3515 = vadd.f32 %v3369, %v3440
    %v3516 = vadd.f32 %v3370, %v3442
    %v3517 = vadd.f32 %v3371, %v3511
    %v3518 = vadd.f32 %v3372, %v3513
    %v3519 = vxor.u32 %v3515, 2147483648
    %v3520 = vmul.f32 %v3519, 1.442695
    %v3521 = vpow.pop %v3520
    %v3522 = vadd.f32 %v3521, 1.0
    %v3523 = vrcp.pop %v3522
    %v3524 = vmul.f32 1.0, %v3523
    %v3525 = vxor.u32 %v3516, 2147483648
    %v3526 = vmul.f32 %v3525, 1.442695
    %v3527 = vpow.pop %v3526
    %v3528 = vadd.f32 %v3527, 1.0
    %v3529 = vrcp.pop %v3528
    %v3530 = vmul.f32 1.0, %v3529
    %v3531 = vtanh.pop %v3517
    %v3532 = vxor.u32 %v3518, 2147483648
    %v3533 = vmul.f32 %v3532, 1.442695
    %v3534 = vpow.pop %v3533
    %v3535 = vadd.f32 %v3534, 1.0
    %v3536 = vrcp.pop %v3535
    %v3537 = vmul.f32 1.0, %v3536
    %v3538 = vmul.f32 %v3530, %v3365
    %v3539 = vmul.f32 %v3524, %v3531
    %v3540 = vadd.f32 %v3538, %v3539
    %v3541 = vtanh.pop %v3540
    %v3542 = vmul.f32 %v3537, %v3541
    %3543 = vst [vmem:[#allocation3 + $0x30] sm:$0xff] %v3542
    %v3544 = vld [vmem:[#allocation2 + $0xe0] sm:$0xff]
    %v3545 = vld [vmem:[#allocation2 + $0xe8] sm:$0xff]
    %v3546 = vld [vmem:[#allocation2 + $0xf0] sm:$0xff]
    %v3547 = vld [vmem:[#allocation2 + $0xf8] sm:$0xff]
    %3548 = vmatprep.subr.mxu0 %v1968
    %3549 = vmatpush1.msra.mxu0 %v1967
    %3550 = vmatprep.subr.mxu0 %v1972
    %3551 = vmatpush1.msra.mxu0 %v1971
    %3552 = vmatprep.subr.mxu0 %v1976
    %3553 = vmatpush1.msra.mxu0 %v1975
    %3554 = vmatprep.subr.mxu0 %v1980
    %3555 = vmatpush1.msra.mxu0 %v1979
    %3556 = vmatprep.subr.mxu0 %v1984
    %3557 = vmatpush1.msra.mxu0 %v1983
    %3558 = vmatprep.subr.mxu0 %v1988
    %3559 = vmatpush1.msra.mxu0 %v1987
    %3560 = vmatprep.subr.mxu0 %v1992
    %3561 = vmatpush1.msra.mxu0 %v1991
    %3562 = vmatprep.subr.mxu0 %v1996
    %3563 = vmatpush1.msra.mxu0 %v1995
    %3564 = vmatprep.subr.mxu0 %v2000
    %3565 = vmatpush1.msra.mxu0 %v1999
    %3566 = vmatprep.subr.mxu0 %v2004
    %3567 = vmatpush1.msra.mxu0 %v2003
    %3568 = vmatprep.subr.mxu0 %v2008
    %3569 = vmatpush1.msra.mxu0 %v2007
    %3570 = vmatprep.subr.mxu0 %v2012
    %3571 = vmatpush1.msra.mxu0 %v2011
    %3572 = vmatprep.subr.mxu0 %v2016
    %3573 = vmatpush1.msra.mxu0 %v2015
    %3574 = vmatprep.subr.mxu0 %v2020
    %3575 = vmatpush1.msra.mxu0 %v2019
    %3576 = vmatprep.subr.mxu0 %v2024
    %3577 = vmatpush1.msra.mxu0 %v2023
    %3578 = vmatprep.subr.mxu0 %v2028
    %3579 = vmatpush1.msra.mxu0 %v2027
    %3580 = vmatprep.subr.mxu0 0.0
    %3581 = vmatpush1.msra.mxu0 0.0
    %3582 = vmatprep.subr.mxu0 0.0
    %3583 = vmatpush1.msra.mxu0 0.0
    %3584 = vmatprep.subr.mxu0 0.0
    %3585 = vmatpush1.msra.mxu0 0.0
    %3586 = vmatprep.subr.mxu0 0.0
    %3587 = vmatpush1.msra.mxu0 0.0
    %3588 = vmatprep.subr.mxu0 0.0
    %3589 = vmatpush1.msra.mxu0 0.0
    %3590 = vmatprep.subr.mxu0 0.0
    %3591 = vmatpush1.msra.mxu0 0.0
    %3592 = vmatprep.subr.mxu0 0.0
    %3593 = vmatpush1.msra.mxu0 0.0
    %3594 = vmatprep.subr.mxu0 0.0
    %3595 = vmatpush1.msra.mxu0 0.0
    %3596 = vmatprep.subr.mxu0 0.0
    %3597 = vmatpush1.msra.mxu0 0.0
    %3598 = vmatprep.subr.mxu0 0.0
    %3599 = vmatpush1.msra.mxu0 0.0
    %3600 = vmatprep.subr.mxu0 0.0
    %3601 = vmatpush1.msra.mxu0 0.0
    %3602 = vmatprep.subr.mxu0 0.0
    %3603 = vmatpush1.msra.mxu0 0.0
    %3604 = vmatprep.subr.mxu0 0.0
    %3605 = vmatpush1.msra.mxu0 0.0
    %3606 = vmatprep.subr.mxu0 0.0
    %3607 = vmatpush1.msra.mxu0 0.0
    %3608 = vmatprep.subr.mxu0 0.0
    %3609 = vmatpush1.msra.mxu0 0.0
    %3610 = vmatprep.subr.mxu0 0.0
    %3611 = vmatpush1.msra.mxu0 0.0
    %3612 = vmatprep.mubr.f32.mxu0 0.0
    %3613 = vmatmul.mubr.f32.gmra.mrb[0].mxu0 %v3542
    %v3614 = vpop.f32.mrb[0].mxu0
    %v3615 = vadd.f32 0.0, %v3614
    %v3616 = vpop.f32.mrb[0].mxu0
    %v3617 = vadd.f32 0.0, %v3616
    %3618 = vdwg.mxu0
    %3619 = vmatprep.subr.mxu0 %v1970
    %3620 = vmatpush1.msra.mxu0 %v1969
    %3621 = vmatprep.subr.mxu0 %v1974
    %3622 = vmatpush1.msra.mxu0 %v1973
    %3623 = vmatprep.subr.mxu0 %v1978
    %3624 = vmatpush1.msra.mxu0 %v1977
    %3625 = vmatprep.subr.mxu0 %v1982
    %3626 = vmatpush1.msra.mxu0 %v1981
    %3627 = vmatprep.subr.mxu0 %v1986
    %3628 = vmatpush1.msra.mxu0 %v1985
    %3629 = vmatprep.subr.mxu0 %v1990
    %3630 = vmatpush1.msra.mxu0 %v1989
    %3631 = vmatprep.subr.mxu0 %v1994
    %3632 = vmatpush1.msra.mxu0 %v1993
    %3633 = vmatprep.subr.mxu0 %v1998
    %3634 = vmatpush1.msra.mxu0 %v1997
    %3635 = vmatprep.subr.mxu0 %v2002
    %3636 = vmatpush1.msra.mxu0 %v2001
    %3637 = vmatprep.subr.mxu0 %v2006
    %3638 = vmatpush1.msra.mxu0 %v2005
    %3639 = vmatprep.subr.mxu0 %v2010
    %3640 = vmatpush1.msra.mxu0 %v2009
    %3641 = vmatprep.subr.mxu0 %v2014
    %3642 = vmatpush1.msra.mxu0 %v2013
    %3643 = vmatprep.subr.mxu0 %v2018
    %3644 = vmatpush1.msra.mxu0 %v2017
    %3645 = vmatprep.subr.mxu0 %v2022
    %3646 = vmatpush1.msra.mxu0 %v2021
    %3647 = vmatprep.subr.mxu0 %v2026
    %3648 = vmatpush1.msra.mxu0 %v2025
    %3649 = vmatprep.subr.mxu0 %v2030
    %3650 = vmatpush1.msra.mxu0 %v2029
    %3651 = vmatprep.subr.mxu0 0.0
    %3652 = vmatpush1.msra.mxu0 0.0
    %3653 = vmatprep.subr.mxu0 0.0
    %3654 = vmatpush1.msra.mxu0 0.0
    %3655 = vmatprep.subr.mxu0 0.0
    %3656 = vmatpush1.msra.mxu0 0.0
    %3657 = vmatprep.subr.mxu0 0.0
    %3658 = vmatpush1.msra.mxu0 0.0
    %3659 = vmatprep.subr.mxu0 0.0
    %3660 = vmatpush1.msra.mxu0 0.0
    %3661 = vmatprep.subr.mxu0 0.0
    %3662 = vmatpush1.msra.mxu0 0.0
    %3663 = vmatprep.subr.mxu0 0.0
    %3664 = vmatpush1.msra.mxu0 0.0
    %3665 = vmatprep.subr.mxu0 0.0
    %3666 = vmatpush1.msra.mxu0 0.0
    %3667 = vmatprep.subr.mxu0 0.0
    %3668 = vmatpush1.msra.mxu0 0.0
    %3669 = vmatprep.subr.mxu0 0.0
    %3670 = vmatpush1.msra.mxu0 0.0
    %3671 = vmatprep.subr.mxu0 0.0
    %3672 = vmatpush1.msra.mxu0 0.0
    %3673 = vmatprep.subr.mxu0 0.0
    %3674 = vmatpush1.msra.mxu0 0.0
    %3675 = vmatprep.subr.mxu0 0.0
    %3676 = vmatpush1.msra.mxu0 0.0
    %3677 = vmatprep.subr.mxu0 0.0
    %3678 = vmatpush1.msra.mxu0 0.0
    %3679 = vmatprep.subr.mxu0 0.0
    %3680 = vmatpush1.msra.mxu0 0.0
    %3681 = vmatprep.subr.mxu0 0.0
    %3682 = vmatpush1.msra.mxu0 0.0
    %3683 = vmatprep.mubr.f32.mxu0 0.0
    %3684 = vmatmul.mubr.f32.gmra.mrb[0].mxu0 %v3542
    %v3685 = vpop.f32.mrb[0].mxu0
    %v3686 = vadd.f32 0.0, %v3685
    %v3687 = vpop.f32.mrb[0].mxu0
    %v3688 = vadd.f32 0.0, %v3687
    %3689 = vdwg.mxu0
    %v3690 = vadd.f32 %v3544, %v3615
    %v3691 = vadd.f32 %v3545, %v3617
    %v3692 = vadd.f32 %v3546, %v3686
    %v3693 = vadd.f32 %v3547, %v3688
    %v3694 = vxor.u32 %v3690, 2147483648
    %v3695 = vmul.f32 %v3694, 1.442695
    %v3696 = vpow.pop %v3695
    %v3697 = vadd.f32 %v3696, 1.0
    %v3698 = vrcp.pop %v3697
    %v3699 = vmul.f32 1.0, %v3698
    %v3700 = vxor.u32 %v3691, 2147483648
    %v3701 = vmul.f32 %v3700, 1.442695
    %v3702 = vpow.pop %v3701
    %v3703 = vadd.f32 %v3702, 1.0
    %v3704 = vrcp.pop %v3703
    %v3705 = vmul.f32 1.0, %v3704
    %v3706 = vtanh.pop %v3692
    %v3707 = vxor.u32 %v3693, 2147483648
    %v3708 = vmul.f32 %v3707, 1.442695
    %v3709 = vpow.pop %v3708
    %v3710 = vadd.f32 %v3709, 1.0
    %v3711 = vrcp.pop %v3710
    %v3712 = vmul.f32 1.0, %v3711
    %v3713 = vmul.f32 %v3705, %v3540
    %v3714 = vmul.f32 %v3699, %v3706
    %v3715 = vadd.f32 %v3713, %v3714
    %v3716 = vtanh.pop %v3715
    %v3717 = vmul.f32 %v3712, %v3716
    %3718 = vst [vmem:[#allocation3 + $0x38] sm:$0xff] %v3717
    %v3719 = vld [vmem:[%s7] sm:$0xff]
    %v3720 = vld [vmem:[%s7 + $0x8] sm:$0xff]
    %v3721 = vld [vmem:[%s7 + $0x10] sm:$0xff]
    %v3722 = vld [vmem:[%s7 + $0x18] sm:$0xff]
    %v3723 = vld [vmem:[%s7 + $0x20] sm:$0xff]
    %v3724 = vld [vmem:[%s7 + $0x28] sm:$0xff]
    %v3725 = vld [vmem:[%s7 + $0x30] sm:$0xff]
    %v3726 = vld [vmem:[%s7 + $0x38] sm:$0xff]
    %v3727 = vld [vmem:[%s7 + $0x40] sm:$0xff]
    %v3728 = vld [vmem:[%s7 + $0x48] sm:$0xff]
    %v3729 = vld [vmem:[%s7 + $0x50] sm:$0xff]
    %v3730 = vld [vmem:[%s7 + $0x58] sm:$0xff]
    %v3731 = vld [vmem:[%s7 + $0x60] sm:$0xff]
    %v3732 = vld [vmem:[%s7 + $0x68] sm:$0xff]
    %v3733 = vld [vmem:[%s7 + $0x70] sm:$0xff]
    %v3734 = vld [vmem:[%s7 + $0x78] sm:$0xff]
    %v3735 = vld [vmem:[#allocation3] sm:$0xff]
    %v3736 = vld [vmem:[#allocation3 + $0x8] sm:$0xff]
    %v3737 = vld [vmem:[#allocation3 + $0x10] sm:$0xff]
    %v3738 = vld [vmem:[#allocation3 + $0x18] sm:$0xff]
    %v3739 = vld [vmem:[#allocation3 + $0x20] sm:$0xff]
    %v3740 = vld [vmem:[#allocation3 + $0x28] sm:$0xff]
    %v3741 = vld [vmem:[#allocation3 + $0x30] sm:$0xff]
    %v3742 = vld [vmem:[#allocation3 + $0x38] sm:$0xff]
    %v3743 = vld [vmem:[%s8] sm:$0x1]
    %v3745 = vlaneseq
    %v3746 = vshrl.u32 %v3745, 7
    %v3747 = vsub.s32 0, %v3746
    %v3748 = vrot.slane %v3743, %v3747
    %3750 = vmatprep.subr.mxu0 0.0
    %3751 = vmatpush1.msra.mxu0 %v3719
    %3752 = vmatprep.subr.mxu0 0.0
    %3753 = vmatpush1.msra.mxu0 %v3720
    %3754 = vmatprep.subr.mxu0 0.0
    %3755 = vmatpush1.msra.mxu0 %v3721
    %3756 = vmatprep.subr.mxu0 0.0
    %3757 = vmatpush1.msra.mxu0 %v3722
    %3758 = vmatprep.subr.mxu0 0.0
    %3759 = vmatpush1.msra.mxu0 %v3723
    %3760 = vmatprep.subr.mxu0 0.0
    %3761 = vmatpush1.msra.mxu0 %v3724
    %3762 = vmatprep.subr.mxu0 0.0
    %3763 = vmatpush1.msra.mxu0 %v3725
    %3764 = vmatprep.subr.mxu0 0.0
    %3765 = vmatpush1.msra.mxu0 %v3726
    %3766 = vmatprep.subr.mxu0 0.0
    %3767 = vmatpush1.msra.mxu0 %v3727
    %3768 = vmatprep.subr.mxu0 0.0
    %3769 = vmatpush1.msra.mxu0 %v3728
    %3770 = vmatprep.subr.mxu0 0.0
    %3771 = vmatpush1.msra.mxu0 %v3729
    %3772 = vmatprep.subr.mxu0 0.0
    %3773 = vmatpush1.msra.mxu0 %v3730
    %3774 = vmatprep.subr.mxu0 0.0
    %3775 = vmatpush1.msra.mxu0 %v3731
    %3776 = vmatprep.subr.mxu0 0.0
    %3777 = vmatpush1.msra.mxu0 %v3732
    %3778 = vmatprep.subr.mxu0 0.0
    %3779 = vmatpush1.msra.mxu0 %v3733
    %3780 = vmatprep.subr.mxu0 0.0
    %3781 = vmatpush1.msra.mxu0 %v3734
    %3782 = vmatprep.subr.mxu0 0.0
    %3783 = vmatpush1.msra.mxu0 0.0
    %3784 = vmatprep.subr.mxu0 0.0
    %3785 = vmatpush1.msra.mxu0 0.0
    %3786 = vmatprep.subr.mxu0 0.0
    %3787 = vmatpush1.msra.mxu0 0.0
    %3788 = vmatprep.subr.mxu0 0.0
    %3789 = vmatpush1.msra.mxu0 0.0
    %3790 = vmatprep.subr.mxu0 0.0
    %3791 = vmatpush1.msra.mxu0 0.0
    %3792 = vmatprep.subr.mxu0 0.0
    %3793 = vmatpush1.msra.mxu0 0.0
    %3794 = vmatprep.subr.mxu0 0.0
    %3795 = vmatpush1.msra.mxu0 0.0
    %3796 = vmatprep.subr.mxu0 0.0
    %3797 = vmatpush1.msra.mxu0 0.0
    %3798 = vmatprep.subr.mxu0 0.0
    %3799 = vmatpush1.msra.mxu0 0.0
    %3800 = vmatprep.subr.mxu0 0.0
    %3801 = vmatpush1.msra.mxu0 0.0
    %3802 = vmatprep.subr.mxu0 0.0
    %3803 = vmatpush1.msra.mxu0 0.0
    %3804 = vmatprep.subr.mxu0 0.0
    %3805 = vmatpush1.msra.mxu0 0.0
    %3806 = vmatprep.subr.mxu0 0.0
    %3807 = vmatpush1.msra.mxu0 0.0
    %3808 = vmatprep.subr.mxu0 0.0
    %3809 = vmatpush1.msra.mxu0 0.0
    %3810 = vmatprep.subr.mxu0 0.0
    %3811 = vmatpush1.msra.mxu0 0.0
    %3812 = vmatprep.subr.mxu0 0.0
    %3813 = vmatpush1.msra.mxu0 0.0
    %3814 = vmatprep.mubr.f32.mxu0 0.0
    %3815 = vmatmul.mubr.f32.gmra.mrb[0].mxu0 %v3735
    %v3816 = vpop.f32.mrb[0].mxu0
    %v3817 = vadd.f32 %v3748, %v3816
    %v3818 = vpop.f32.mrb[0].mxu0
    %3819 = vmatprep.mubr.f32.mxu0 0.0
    %3820 = vmatmul.mubr.f32.gmra.mrb[0].mxu0 %v3736
    %v3821 = vpop.f32.mrb[0].mxu0
    %v3822 = vadd.f32 %v3748, %v3821
    %v3823 = vpop.f32.mrb[0].mxu0
    %3824 = vmatprep.mubr.f32.mxu0 0.0
    %3825 = vmatmul.mubr.f32.gmra.mrb[0].mxu0 %v3737
    %v3826 = vpop.f32.mrb[0].mxu0
    %v3827 = vadd.f32 %v3748, %v3826
    %v3828 = vpop.f32.mrb[0].mxu0
    %3829 = vmatprep.mubr.f32.mxu0 0.0
    %3830 = vmatmul.mubr.f32.gmra.mrb[0].mxu0 %v3738
    %v3831 = vpop.f32.mrb[0].mxu0
    %v3832 = vadd.f32 %v3748, %v3831
    %v3833 = vpop.f32.mrb[0].mxu0
    %3834 = vmatprep.mubr.f32.mxu0 0.0
    %3835 = vmatmul.mubr.f32.gmra.mrb[0].mxu0 %v3739
    %v3836 = vpop.f32.mrb[0].mxu0
    %v3837 = vadd.f32 %v3748, %v3836
    %v3838 = vpop.f32.mrb[0].mxu0
    %3839 = vmatprep.mubr.f32.mxu0 0.0
    %3840 = vmatmul.mubr.f32.gmra.mrb[0].mxu0 %v3740
    %v3841 = vpop.f32.mrb[0].mxu0
    %v3842 = vadd.f32 %v3748, %v3841
    %v3843 = vpop.f32.mrb[0].mxu0
    %3844 = vmatprep.mubr.f32.mxu0 0.0
    %3845 = vmatmul.mubr.f32.gmra.mrb[0].mxu0 %v3741
    %v3846 = vpop.f32.mrb[0].mxu0
    %v3847 = vadd.f32 %v3748, %v3846
    %v3848 = vpop.f32.mrb[0].mxu0
    %3849 = vmatprep.mubr.f32.mxu0 0.0
    %3850 = vmatmul.mubr.f32.gmra.mrb[0].mxu0 %v3742
    %v3851 = vpop.f32.mrb[0].mxu0
    %v3852 = vadd.f32 %v3748, %v3851
    %v3853 = vpop.f32.mrb[0].mxu0
    %3854 = vdwg.mxu0
    %3855 = vst [vmem:[%s9] sm:$0xff] %v3817
    %3856 = vst [vmem:[%s9 + $0x8] sm:$0xff] %v3822
    %3857 = vst [vmem:[%s9 + $0x10] sm:$0xff] %v3827
    %3858 = vst [vmem:[%s9 + $0x18] sm:$0xff] %v3832
    %3859 = vst [vmem:[%s9 + $0x20] sm:$0xff] %v3837
    %3860 = vst [vmem:[%s9 + $0x28] sm:$0xff] %v3842
    %3861 = vst [vmem:[%s9 + $0x30] sm:$0xff] %v3847
    %3862 = vst [vmem:[%s9 + $0x38] sm:$0xff] %v3852
    // Predicated region
    $region54: #{lstm_model_forward.1} parent=1 // pred_check
      _
    $region55: #{lstm_model_forward.1} parent=1 // pred_check_branch
      %3864 = sbr.rel (0) target = $region57
    $region56: #{lstm_model_forward.1} parent=1 // pred_region
      _
    $region57: #{lstm_model_forward.1} parent=1 // pred_fallthru
      _
    // Predicated region
    $region58: #{lstm_model_forward.1} parent=1 // pred_check
      _
    $region59: #{lstm_model_forward.1} parent=1 // pred_check_branch
      %3866 = sbr.rel (0) target = $region61
    $region60: #{lstm_model_forward.1} parent=1 // pred_region
      _
    $region61: #{lstm_model_forward.1} parent=1 // pred_fallthru
      _
    %3867 = vsyncpa [#allocation5], 1
    %3868 = vsyncpa [#allocation7], 1
    %3869 = vsyncpa [#allocation10], 1

</llo_original>
